<compile_context>
chip_gen: v7x
topology: tpu7x:2x2x1
jax: 0.10.0
libtpu: 0.0.40
codegen_flags: <defaults>
</compile_context>

<pallas_src>
import functools

import jax
import jax.numpy as jnp
from jax.experimental import pallas as pl
from jax.experimental.pallas import tpu as pltpu


def _lstm_step(xp_row, h, c, whh, H):
    """One LSTM time step. xp_row = x_t @ W_ih + b (precomputed), shape (1, 4H)."""
    gates = xp_row + jnp.dot(h, whh, preferred_element_type=jnp.float32)
    i_g = jax.nn.sigmoid(gates[:, 0 * H:1 * H])
    f_g = jax.nn.sigmoid(gates[:, 1 * H:2 * H])
    g_g = jnp.tanh(gates[:, 2 * H:3 * H])
    o_g = jax.nn.sigmoid(gates[:, 3 * H:4 * H])
    c = f_g * c + i_g * g_g
    h = o_g * jnp.tanh(c)
    return h, c


def seq2seq_fused_kernel(idx_ref,                       # (B, S) int32 in SMEM (scalar prefetch)
                         table_ref,                     # (V, 1, E)
                         enc_wih_ref, enc_whh_ref, enc_b_ref,
                         dec_wih_ref, dec_whh_ref, dec_b_ref,
                         win_ref, bin_ref, wout_ref, bout_ref,
                         fcw_ref, fcb_ref,
                         out_ref,                       # (1, 1, O)
                         emb_ref,                       # scratch (S, E)
                         dec_ref,                       # scratch (S, H)
                         *, num_heads):
    b = pl.program_id(0)
    S, E = emb_ref.shape
    H = enc_whh_ref.shape[0]
    hd = H // num_heads
    scale = 1.0 / float(hd) ** 0.5

    # ---- embedding: gather the S token rows of this batch element ----------
    for s in range(S):
        tok = idx_ref[b, s]
        emb_ref[pl.ds(s, 1), :] = table_ref[tok]        # (1, E) row
    emb = emb_ref[...]                                  # (S, E)

    # ---- encoder LSTM (only final (h, c) is needed) -------------------------
    # Input projection hoisted out of the recurrence: one (S,E)x(E,4H) matmul.
    enc_xp = (jnp.dot(emb, enc_wih_ref[...], preferred_element_type=jnp.float32)
              + enc_b_ref[...])                         # (S, 4H)
    enc_whh = enc_whh_ref[...]
    h = jnp.zeros((1, H), jnp.float32)
    c = jnp.zeros((1, H), jnp.float32)
    for t in range(S):
        h, c = _lstm_step(enc_xp[t:t + 1, :], h, c, enc_whh, H)

    # NOTE: the first self-attention over encoder outputs in the reference
    # forward is dead code (its result is immediately overwritten), so it is
    # elided and encoder outputs are never materialized.

    # ---- decoder LSTM, initialized with encoder final (h, c) ---------------
    dec_xp = (jnp.dot(emb, dec_wih_ref[...], preferred_element_type=jnp.float32)
              + dec_b_ref[...])                         # (S, 4H)
    dec_whh = dec_whh_ref[...]
    for t in range(S):
        h, c = _lstm_step(dec_xp[t:t + 1, :], h, c, dec_whh, H)
        dec_ref[pl.ds(t, 1), :] = h                     # write h_t directly
    dec_out = dec_ref[...]                              # (S, H)

    # ---- multi-head self attention (q = k = v = dec_out) -------------------
    qkv = (jnp.dot(dec_out, win_ref[...], preferred_element_type=jnp.float32)
           + bin_ref[...])                              # (S, 3H)
    wout = wout_ref[...]                                # (H, H)
    acc = None
    for n in range(num_heads):
        q = qkv[:, n * hd:(n + 1) * hd]                 # (S, hd)
        k = qkv[:, H + n * hd:H + (n + 1) * hd]
        v = qkv[:, 2 * H + n * hd:2 * H + (n + 1) * hd]
        s_qk = jnp.einsum('qd,kd->qk', q, k,
                          preferred_element_type=jnp.float32) * scale
        m = jnp.max(s_qk, axis=-1, keepdims=True)
        e = jnp.exp(s_qk - m)
        p = e * pl.reciprocal(jnp.sum(e, axis=-1, keepdims=True), approx=True)
        ctx = jnp.dot(p, v, preferred_element_type=jnp.float32)      # (S, hd)
        # Out-projection accumulated per head: avoids concatenating heads.
        contrib = jnp.dot(ctx, wout[n * hd:(n + 1) * hd, :],
                          preferred_element_type=jnp.float32)        # (S, H)
        acc = contrib if acc is None else acc + contrib
    attn_out = acc + bout_ref[...]                      # (S, H)

    # ---- context = sum over sequence, then fc -------------------------------
    ctx_vec = jnp.sum(attn_out, axis=0, keepdims=True)                # (1, H)
    out = (jnp.dot(ctx_vec, fcw_ref[...], preferred_element_type=jnp.float32)
           + fcb_ref[...])                                            # (1, O)
    out_ref[...] = out.reshape(out_ref.shape)


def seq2seq_attention_forward(params, x, num_heads):
    B, S = x.shape
    V, E = params['embedding'].shape
    H = params['enc_whh'].shape[0]
    O = params['fc_w'].shape[1]

    weights = (
        params['embedding'].reshape(V, 1, E),           # row-per-tile for gather
        params['enc_wih'], params['enc_whh'], params['enc_b'],
        params['dec_wih'], params['dec_whh'], params['dec_b'],
        params['attn_win'], params['attn_bin'],
        params['attn_wout'], params['attn_bout'],
        params['fc_w'], params['fc_b'],
    )

    def _full(arr):
        # whole-array VMEM block (block == array dims); index_map gets
        # (grid idx, scalar-prefetch ref) positionally.
        return pl.BlockSpec(arr.shape, lambda b, idx, _r=arr.ndim: (0,) * _r)

    grid_spec = pltpu.PrefetchScalarGridSpec(
        num_scalar_prefetch=1,
        grid=(B,),
        in_specs=[_full(w) for w in weights],
        out_specs=pl.BlockSpec((1, 1, O), lambda b, idx: (b, 0, 0)),
        scratch_shapes=[pltpu.VMEM((S, E), jnp.float32),
                        pltpu.VMEM((S, H), jnp.float32)],
    )

    out = pl.pallas_call(
        functools.partial(seq2seq_fused_kernel, num_heads=num_heads),
        out_shape=jax.ShapeDtypeStruct((B, 1, O), jnp.float32),
        grid_spec=grid_spec,
        compiler_params=pltpu.CompilerParams(
            dimension_semantics=("parallel",)),   # shards batch across v7x's 2 TCs
    )(x.astype(jnp.int32), *weights)
    return out.reshape(B, O)


# --------------------------------------------------------------------------
# Deterministic synthetic parameters (weights stored as [in, out]).
# --------------------------------------------------------------------------
def init_params(key, vocab, embed, hidden, output):
    ks = jax.random.split(key, 13)
    H = hidden
    s = 1.0 / (H ** 0.5)
    u = lambda k, shape, lim: jax.random.uniform(k, shape, jnp.float32, -lim, lim)
    return {
        'embedding': u(ks[0], (vocab, embed), 0.1),
        'enc_wih': u(ks[1], (embed, 4 * H), s),
        'enc_whh': u(ks[2], (H, 4 * H), s),
        'enc_b':   u(ks[3], (1, 4 * H), s),      # bias_ih + bias_hh folded
        'dec_wih': u(ks[4], (embed, 4 * H), s),
        'dec_whh': u(ks[5], (H, 4 * H), s),
        'dec_b':   u(ks[6], (1, 4 * H), s),
        'attn_win':  u(ks[7], (H, 3 * H), s),    # in_proj_weight^T
        'attn_bin':  u(ks[8], (1, 3 * H), s),
        'attn_wout': u(ks[9], (H, H), s),        # out_proj.weight^T
        'attn_bout': u(ks[10], (1, H), s),
        'fc_w': u(ks[11], (H, output), s),
        'fc_b': u(ks[12], (1, output), s),
    }


if __name__ == "__main__":
    vocab_size, embed_size, hidden_size, output_size, num_heads = 32, 16, 32, 8, 4
    B, S = 2, 8

    key = jax.random.PRNGKey(0)
    pkey, xkey = jax.random.split(key)
    params = init_params(pkey, vocab_size, embed_size, hidden_size, output_size)
    x = jax.random.randint(xkey, (B, S), 0, vocab_size, dtype=jnp.int32)

    out = seq2seq_attention_forward(params, x, num_heads)
    out = jax.block_until_ready(out)

    assert out.shape == (B, output_size), out.shape
    assert bool(jnp.all(jnp.isfinite(out)))
    print("KERNEL_OK")
</pallas_src>

<mosaic_0001>
module attributes {stable_mosaic.version = 11 : i64} {
  func.func @seq2seq_fused_kernel(%arg0: i32, %arg1: memref<2x8xi32, #tpu.memory_space<smem>>, %arg2: memref<32x1x16xf32, #tpu.memory_space<vmem>>, %arg3: memref<16x128xf32, #tpu.memory_space<vmem>>, %arg4: memref<32x128xf32, #tpu.memory_space<vmem>>, %arg5: memref<1x128xf32, #tpu.memory_space<vmem>>, %arg6: memref<16x128xf32, #tpu.memory_space<vmem>>, %arg7: memref<32x128xf32, #tpu.memory_space<vmem>>, %arg8: memref<1x128xf32, #tpu.memory_space<vmem>>, %arg9: memref<32x96xf32, #tpu.memory_space<vmem>>, %arg10: memref<1x96xf32, #tpu.memory_space<vmem>>, %arg11: memref<32x32xf32, #tpu.memory_space<vmem>>, %arg12: memref<1x32xf32, #tpu.memory_space<vmem>>, %arg13: memref<32x8xf32, #tpu.memory_space<vmem>>, %arg14: memref<1x8xf32, #tpu.memory_space<vmem>>, %arg15: memref<1x1x8xf32, #tpu.memory_space<vmem>>, %arg16: memref<8x16xf32, #tpu.memory_space<vmem>>, %arg17: memref<8x32xf32, #tpu.memory_space<vmem>>) attributes {dimension_semantics = [#tpu.dimension_semantics<parallel>], iteration_bounds = array<i64: 2>, scalar_prefetch = 1 : i64, scratch_operands = 2 : i64, tpu.core_type = #tpu.core_type<tc>, window_params = [{pipeline_mode = #tpu.pipeline_mode<synchronous>, transform_indices = @transform_0, window_bounds = array<i64: 32, 1, 16>}, {pipeline_mode = #tpu.pipeline_mode<synchronous>, transform_indices = @transform_1, window_bounds = array<i64: 16, 128>}, {pipeline_mode = #tpu.pipeline_mode<synchronous>, transform_indices = @transform_2, window_bounds = array<i64: 32, 128>}, {pipeline_mode = #tpu.pipeline_mode<synchronous>, transform_indices = @transform_3, window_bounds = array<i64: 1, 128>}, {pipeline_mode = #tpu.pipeline_mode<synchronous>, transform_indices = @transform_4, window_bounds = array<i64: 16, 128>}, {pipeline_mode = #tpu.pipeline_mode<synchronous>, transform_indices = @transform_5, window_bounds = array<i64: 32, 128>}, {pipeline_mode = #tpu.pipeline_mode<synchronous>, transform_indices = @transform_6, window_bounds = array<i64: 1, 128>}, {pipeline_mode = #tpu.pipeline_mode<synchronous>, transform_indices = @transform_7, window_bounds = array<i64: 32, 96>}, {pipeline_mode = #tpu.pipeline_mode<synchronous>, transform_indices = @transform_8, window_bounds = array<i64: 1, 96>}, {pipeline_mode = #tpu.pipeline_mode<synchronous>, transform_indices = @transform_9, window_bounds = array<i64: 32, 32>}, {pipeline_mode = #tpu.pipeline_mode<synchronous>, transform_indices = @transform_10, window_bounds = array<i64: 1, 32>}, {pipeline_mode = #tpu.pipeline_mode<synchronous>, transform_indices = @transform_11, window_bounds = array<i64: 32, 8>}, {pipeline_mode = #tpu.pipeline_mode<synchronous>, transform_indices = @transform_12, window_bounds = array<i64: 1, 8>}, {transform_indices = @transform_13, window_bounds = array<i64: 1, 1, 8>}]} {
    %0 = arith.index_cast %arg0 : i32 to index
    %c0 = arith.constant 0 : index
    %1 = memref.load %arg1[%0, %c0] : memref<2x8xi32, #tpu.memory_space<smem>>
    %2 = arith.index_cast %1 : i32 to index
    %c0_0 = arith.constant 0 : index
    %c0_1 = arith.constant 0 : index
    %3 = vector.load %arg2[%2, %c0_0, %c0_1] : memref<32x1x16xf32, #tpu.memory_space<vmem>>, vector<1x1x16xf32>
    %4 = vector.shape_cast %3 : vector<1x1x16xf32> to vector<1x16xf32>
    %c0_2 = arith.constant 0 : index
    %c0_3 = arith.constant 0 : index
    %5 = vector.load %arg16[%c0_2, %c0_3] : memref<8x16xf32, #tpu.memory_space<vmem>>, vector<1x16xf32>
    tpu.vector_store %arg16[%c0_2, %c0_3], %4 {strides = array<i32>} : memref<8x16xf32, #tpu.memory_space<vmem>>, vector<1x16xf32>,
    %6 = arith.index_cast %arg0 : i32 to index
    %c1 = arith.constant 1 : index
    %7 = memref.load %arg1[%6, %c1] : memref<2x8xi32, #tpu.memory_space<smem>>
    %8 = arith.index_cast %7 : i32 to index
    %c0_4 = arith.constant 0 : index
    %c0_5 = arith.constant 0 : index
    %9 = vector.load %arg2[%8, %c0_4, %c0_5] : memref<32x1x16xf32, #tpu.memory_space<vmem>>, vector<1x1x16xf32>
    %10 = vector.shape_cast %9 : vector<1x1x16xf32> to vector<1x16xf32>
    %c1_6 = arith.constant 1 : index
    %c0_7 = arith.constant 0 : index
    %11 = vector.load %arg16[%c1_6, %c0_7] : memref<8x16xf32, #tpu.memory_space<vmem>>, vector<1x16xf32>
    tpu.vector_store %arg16[%c1_6, %c0_7], %10 {strides = array<i32>} : memref<8x16xf32, #tpu.memory_space<vmem>>, vector<1x16xf32>,
    %12 = arith.index_cast %arg0 : i32 to index
    %c2 = arith.constant 2 : index
    %13 = memref.load %arg1[%12, %c2] : memref<2x8xi32, #tpu.memory_space<smem>>
    %14 = arith.index_cast %13 : i32 to index
    %c0_8 = arith.constant 0 : index
    %c0_9 = arith.constant 0 : index
    %15 = vector.load %arg2[%14, %c0_8, %c0_9] : memref<32x1x16xf32, #tpu.memory_space<vmem>>, vector<1x1x16xf32>
    %16 = vector.shape_cast %15 : vector<1x1x16xf32> to vector<1x16xf32>
    %c2_10 = arith.constant 2 : index
    %c0_11 = arith.constant 0 : index
    %17 = vector.load %arg16[%c2_10, %c0_11] : memref<8x16xf32, #tpu.memory_space<vmem>>, vector<1x16xf32>
    tpu.vector_store %arg16[%c2_10, %c0_11], %16 {strides = array<i32>} : memref<8x16xf32, #tpu.memory_space<vmem>>, vector<1x16xf32>,
    %18 = arith.index_cast %arg0 : i32 to index
    %c3 = arith.constant 3 : index
    %19 = memref.load %arg1[%18, %c3] : memref<2x8xi32, #tpu.memory_space<smem>>
    %20 = arith.index_cast %19 : i32 to index
    %c0_12 = arith.constant 0 : index
    %c0_13 = arith.constant 0 : index
    %21 = vector.load %arg2[%20, %c0_12, %c0_13] : memref<32x1x16xf32, #tpu.memory_space<vmem>>, vector<1x1x16xf32>
    %22 = vector.shape_cast %21 : vector<1x1x16xf32> to vector<1x16xf32>
    %c3_14 = arith.constant 3 : index
    %c0_15 = arith.constant 0 : index
    %23 = vector.load %arg16[%c3_14, %c0_15] : memref<8x16xf32, #tpu.memory_space<vmem>>, vector<1x16xf32>
    tpu.vector_store %arg16[%c3_14, %c0_15], %22 {strides = array<i32>} : memref<8x16xf32, #tpu.memory_space<vmem>>, vector<1x16xf32>,
    %24 = arith.index_cast %arg0 : i32 to index
    %c4 = arith.constant 4 : index
    %25 = memref.load %arg1[%24, %c4] : memref<2x8xi32, #tpu.memory_space<smem>>
    %26 = arith.index_cast %25 : i32 to index
    %c0_16 = arith.constant 0 : index
    %c0_17 = arith.constant 0 : index
    %27 = vector.load %arg2[%26, %c0_16, %c0_17] : memref<32x1x16xf32, #tpu.memory_space<vmem>>, vector<1x1x16xf32>
    %28 = vector.shape_cast %27 : vector<1x1x16xf32> to vector<1x16xf32>
    %c4_18 = arith.constant 4 : index
    %c0_19 = arith.constant 0 : index
    %29 = vector.load %arg16[%c4_18, %c0_19] : memref<8x16xf32, #tpu.memory_space<vmem>>, vector<1x16xf32>
    tpu.vector_store %arg16[%c4_18, %c0_19], %28 {strides = array<i32>} : memref<8x16xf32, #tpu.memory_space<vmem>>, vector<1x16xf32>,
    %30 = arith.index_cast %arg0 : i32 to index
    %c5 = arith.constant 5 : index
    %31 = memref.load %arg1[%30, %c5] : memref<2x8xi32, #tpu.memory_space<smem>>
    %32 = arith.index_cast %31 : i32 to index
    %c0_20 = arith.constant 0 : index
    %c0_21 = arith.constant 0 : index
    %33 = vector.load %arg2[%32, %c0_20, %c0_21] : memref<32x1x16xf32, #tpu.memory_space<vmem>>, vector<1x1x16xf32>
    %34 = vector.shape_cast %33 : vector<1x1x16xf32> to vector<1x16xf32>
    %c5_22 = arith.constant 5 : index
    %c0_23 = arith.constant 0 : index
    %35 = vector.load %arg16[%c5_22, %c0_23] : memref<8x16xf32, #tpu.memory_space<vmem>>, vector<1x16xf32>
    tpu.vector_store %arg16[%c5_22, %c0_23], %34 {strides = array<i32>} : memref<8x16xf32, #tpu.memory_space<vmem>>, vector<1x16xf32>,
    %36 = arith.index_cast %arg0 : i32 to index
    %c6 = arith.constant 6 : index
    %37 = memref.load %arg1[%36, %c6] : memref<2x8xi32, #tpu.memory_space<smem>>
    %38 = arith.index_cast %37 : i32 to index
    %c0_24 = arith.constant 0 : index
    %c0_25 = arith.constant 0 : index
    %39 = vector.load %arg2[%38, %c0_24, %c0_25] : memref<32x1x16xf32, #tpu.memory_space<vmem>>, vector<1x1x16xf32>
    %40 = vector.shape_cast %39 : vector<1x1x16xf32> to vector<1x16xf32>
    %c6_26 = arith.constant 6 : index
    %c0_27 = arith.constant 0 : index
    %41 = vector.load %arg16[%c6_26, %c0_27] : memref<8x16xf32, #tpu.memory_space<vmem>>, vector<1x16xf32>
    tpu.vector_store %arg16[%c6_26, %c0_27], %40 {strides = array<i32>} : memref<8x16xf32, #tpu.memory_space<vmem>>, vector<1x16xf32>,
    %42 = arith.index_cast %arg0 : i32 to index
    %c7 = arith.constant 7 : index
    %43 = memref.load %arg1[%42, %c7] : memref<2x8xi32, #tpu.memory_space<smem>>
    %44 = arith.index_cast %43 : i32 to index
    %c0_28 = arith.constant 0 : index
    %c0_29 = arith.constant 0 : index
    %45 = vector.load %arg2[%44, %c0_28, %c0_29] : memref<32x1x16xf32, #tpu.memory_space<vmem>>, vector<1x1x16xf32>
    %46 = vector.shape_cast %45 : vector<1x1x16xf32> to vector<1x16xf32>
    %c7_30 = arith.constant 7 : index
    %c0_31 = arith.constant 0 : index
    %47 = vector.load %arg16[%c7_30, %c0_31] : memref<8x16xf32, #tpu.memory_space<vmem>>, vector<1x16xf32>
    tpu.vector_store %arg16[%c7_30, %c0_31], %46 {strides = array<i32>} : memref<8x16xf32, #tpu.memory_space<vmem>>, vector<1x16xf32>,
    %c0_32 = arith.constant 0 : index
    %c0_33 = arith.constant 0 : index
    %48 = vector.load %arg16[%c0_32, %c0_33] : memref<8x16xf32, #tpu.memory_space<vmem>>, vector<8x16xf32>
    %c0_34 = arith.constant 0 : index
    %c0_35 = arith.constant 0 : index
    %49 = vector.load %arg3[%c0_34, %c0_35] : memref<16x128xf32, #tpu.memory_space<vmem>>, vector<16x128xf32>
    %cst = arith.constant dense<0.000000e+00> : vector<8x128xf32>
    %50 = tpu.matmul %48, %49, %cst {dimension_numbers = #tpu.dot_dimension_numbers<[1], [0], [0], [1], [0, 0, 1, 1], [], []>} : vector<8x16xf32>, vector<16x128xf32>, vector<8x128xf32> -> vector<8x128xf32>
    %c0_36 = arith.constant 0 : index
    %c0_37 = arith.constant 0 : index
    %51 = vector.load %arg5[%c0_36, %c0_37] : memref<1x128xf32, #tpu.memory_space<vmem>>, vector<1x128xf32>
    %52 = vector.broadcast %51 : vector<1x128xf32> to vector<8x128xf32>
    %53 = arith.addf %50, %52 : vector<8x128xf32>
    %c0_38 = arith.constant 0 : index
    %c0_39 = arith.constant 0 : index
    %54 = vector.load %arg4[%c0_38, %c0_39] : memref<32x128xf32, #tpu.memory_space<vmem>>, vector<32x128xf32>
    %cst_40 = arith.constant 0.000000e+00 : f32
    %55 = vector.broadcast %cst_40 : f32 to vector<1x32xf32>
    %cst_41 = arith.constant 0.000000e+00 : f32
    %56 = vector.broadcast %cst_41 : f32 to vector<1x32xf32>
    %57 = vector.extract_strided_slice %53 {offsets = [0, 0], sizes = [1, 128], strides = [1, 1]} : vector<8x128xf32> to vector<1x128xf32>
    %cst_42 = arith.constant dense<0.000000e+00> : vector<1x128xf32>
    %58 = tpu.matmul %55, %54, %cst_42 {dimension_numbers = #tpu.dot_dimension_numbers<[1], [0], [0], [1], [0, 0, 1, 1], [], []>} : vector<1x32xf32>, vector<32x128xf32>, vector<1x128xf32> -> vector<1x128xf32>
    %59 = arith.addf %57, %58 : vector<1x128xf32>
    %60 = vector.extract_strided_slice %59 {offsets = [0, 0], sizes = [1, 32], strides = [1, 1]} : vector<1x128xf32> to vector<1x32xf32>
    %61 = arith.negf %60 : vector<1x32xf32>
    %62 = math.exp %61 : vector<1x32xf32>
    %cst_43 = arith.constant 1.000000e+00 : f32
    %63 = vector.broadcast %cst_43 : f32 to vector<1x32xf32>
    %64 = arith.addf %63, %62 : vector<1x32xf32>
    %65 = arith.divf %63, %64 : vector<1x32xf32>
    %66 = vector.extract_strided_slice %59 {offsets = [0, 32], sizes = [1, 32], strides = [1, 1]} : vector<1x128xf32> to vector<1x32xf32>
    %67 = arith.negf %66 : vector<1x32xf32>
    %68 = math.exp %67 : vector<1x32xf32>
    %cst_44 = arith.constant 1.000000e+00 : f32
    %69 = vector.broadcast %cst_44 : f32 to vector<1x32xf32>
    %70 = arith.addf %69, %68 : vector<1x32xf32>
    %71 = arith.divf %69, %70 : vector<1x32xf32>
    %72 = vector.extract_strided_slice %59 {offsets = [0, 64], sizes = [1, 32], strides = [1, 1]} : vector<1x128xf32> to vector<1x32xf32>
    %73 = math.tanh %72 : vector<1x32xf32>
    %74 = vector.extract_strided_slice %59 {offsets = [0, 96], sizes = [1, 32], strides = [1, 1]} : vector<1x128xf32> to vector<1x32xf32>
    %75 = arith.negf %74 : vector<1x32xf32>
    %76 = math.exp %75 : vector<1x32xf32>
    %cst_45 = arith.constant 1.000000e+00 : f32
    %77 = vector.broadcast %cst_45 : f32 to vector<1x32xf32>
    %78 = arith.addf %77, %76 : vector<1x32xf32>
    %79 = arith.divf %77, %78 : vector<1x32xf32>
    %80 = arith.mulf %71, %56 : vector<1x32xf32>
    %81 = arith.mulf %65, %73 : vector<1x32xf32>
    %82 = arith.addf %80, %81 : vector<1x32xf32>
    %83 = math.tanh %82 : vector<1x32xf32>
    %84 = arith.mulf %79, %83 : vector<1x32xf32>
    %85 = vector.extract_strided_slice %53 {offsets = [1, 0], sizes = [1, 128], strides = [1, 1]} : vector<8x128xf32> to vector<1x128xf32>
    %cst_46 = arith.constant dense<0.000000e+00> : vector<1x128xf32>
    %86 = tpu.matmul %84, %54, %cst_46 {dimension_numbers = #tpu.dot_dimension_numbers<[1], [0], [0], [1], [0, 0, 1, 1], [], []>} : vector<1x32xf32>, vector<32x128xf32>, vector<1x128xf32> -> vector<1x128xf32>
    %87 = arith.addf %85, %86 : vector<1x128xf32>
    %88 = vector.extract_strided_slice %87 {offsets = [0, 0], sizes = [1, 32], strides = [1, 1]} : vector<1x128xf32> to vector<1x32xf32>
    %89 = arith.negf %88 : vector<1x32xf32>
    %90 = math.exp %89 : vector<1x32xf32>
    %cst_47 = arith.constant 1.000000e+00 : f32
    %91 = vector.broadcast %cst_47 : f32 to vector<1x32xf32>
    %92 = arith.addf %91, %90 : vector<1x32xf32>
    %93 = arith.divf %91, %92 : vector<1x32xf32>
    %94 = vector.extract_strided_slice %87 {offsets = [0, 32], sizes = [1, 32], strides = [1, 1]} : vector<1x128xf32> to vector<1x32xf32>
    %95 = arith.negf %94 : vector<1x32xf32>
    %96 = math.exp %95 : vector<1x32xf32>
    %cst_48 = arith.constant 1.000000e+00 : f32
    %97 = vector.broadcast %cst_48 : f32 to vector<1x32xf32>
    %98 = arith.addf %97, %96 : vector<1x32xf32>
    %99 = arith.divf %97, %98 : vector<1x32xf32>
    %100 = vector.extract_strided_slice %87 {offsets = [0, 64], sizes = [1, 32], strides = [1, 1]} : vector<1x128xf32> to vector<1x32xf32>
    %101 = math.tanh %100 : vector<1x32xf32>
    %102 = vector.extract_strided_slice %87 {offsets = [0, 96], sizes = [1, 32], strides = [1, 1]} : vector<1x128xf32> to vector<1x32xf32>
    %103 = arith.negf %102 : vector<1x32xf32>
    %104 = math.exp %103 : vector<1x32xf32>
    %cst_49 = arith.constant 1.000000e+00 : f32
    %105 = vector.broadcast %cst_49 : f32 to vector<1x32xf32>
    %106 = arith.addf %105, %104 : vector<1x32xf32>
    %107 = arith.divf %105, %106 : vector<1x32xf32>
    %108 = arith.mulf %99, %82 : vector<1x32xf32>
    %109 = arith.mulf %93, %101 : vector<1x32xf32>
    %110 = arith.addf %108, %109 : vector<1x32xf32>
    %111 = math.tanh %110 : vector<1x32xf32>
    %112 = arith.mulf %107, %111 : vector<1x32xf32>
    %113 = vector.extract_strided_slice %53 {offsets = [2, 0], sizes = [1, 128], strides = [1, 1]} : vector<8x128xf32> to vector<1x128xf32>
    %cst_50 = arith.constant dense<0.000000e+00> : vector<1x128xf32>
    %114 = tpu.matmul %112, %54, %cst_50 {dimension_numbers = #tpu.dot_dimension_numbers<[1], [0], [0], [1], [0, 0, 1, 1], [], []>} : vector<1x32xf32>, vector<32x128xf32>, vector<1x128xf32> -> vector<1x128xf32>
    %115 = arith.addf %113, %114 : vector<1x128xf32>
    %116 = vector.extract_strided_slice %115 {offsets = [0, 0], sizes = [1, 32], strides = [1, 1]} : vector<1x128xf32> to vector<1x32xf32>
    %117 = arith.negf %116 : vector<1x32xf32>
    %118 = math.exp %117 : vector<1x32xf32>
    %cst_51 = arith.constant 1.000000e+00 : f32
    %119 = vector.broadcast %cst_51 : f32 to vector<1x32xf32>
    %120 = arith.addf %119, %118 : vector<1x32xf32>
    %121 = arith.divf %119, %120 : vector<1x32xf32>
    %122 = vector.extract_strided_slice %115 {offsets = [0, 32], sizes = [1, 32], strides = [1, 1]} : vector<1x128xf32> to vector<1x32xf32>
    %123 = arith.negf %122 : vector<1x32xf32>
    %124 = math.exp %123 : vector<1x32xf32>
    %cst_52 = arith.constant 1.000000e+00 : f32
    %125 = vector.broadcast %cst_52 : f32 to vector<1x32xf32>
    %126 = arith.addf %125, %124 : vector<1x32xf32>
    %127 = arith.divf %125, %126 : vector<1x32xf32>
    %128 = vector.extract_strided_slice %115 {offsets = [0, 64], sizes = [1, 32], strides = [1, 1]} : vector<1x128xf32> to vector<1x32xf32>
    %129 = math.tanh %128 : vector<1x32xf32>
    %130 = vector.extract_strided_slice %115 {offsets = [0, 96], sizes = [1, 32], strides = [1, 1]} : vector<1x128xf32> to vector<1x32xf32>
    %131 = arith.negf %130 : vector<1x32xf32>
    %132 = math.exp %131 : vector<1x32xf32>
    %cst_53 = arith.constant 1.000000e+00 : f32
    %133 = vector.broadcast %cst_53 : f32 to vector<1x32xf32>
    %134 = arith.addf %133, %132 : vector<1x32xf32>
    %135 = arith.divf %133, %134 : vector<1x32xf32>
    %136 = arith.mulf %127, %110 : vector<1x32xf32>
    %137 = arith.mulf %121, %129 : vector<1x32xf32>
    %138 = arith.addf %136, %137 : vector<1x32xf32>
    %139 = math.tanh %138 : vector<1x32xf32>
    %140 = arith.mulf %135, %139 : vector<1x32xf32>
    %141 = vector.extract_strided_slice %53 {offsets = [3, 0], sizes = [1, 128], strides = [1, 1]} : vector<8x128xf32> to vector<1x128xf32>
    %cst_54 = arith.constant dense<0.000000e+00> : vector<1x128xf32>
    %142 = tpu.matmul %140, %54, %cst_54 {dimension_numbers = #tpu.dot_dimension_numbers<[1], [0], [0], [1], [0, 0, 1, 1], [], []>} : vector<1x32xf32>, vector<32x128xf32>, vector<1x128xf32> -> vector<1x128xf32>
    %143 = arith.addf %141, %142 : vector<1x128xf32>
    %144 = vector.extract_strided_slice %143 {offsets = [0, 0], sizes = [1, 32], strides = [1, 1]} : vector<1x128xf32> to vector<1x32xf32>
    %145 = arith.negf %144 : vector<1x32xf32>
    %146 = math.exp %145 : vector<1x32xf32>
    %cst_55 = arith.constant 1.000000e+00 : f32
    %147 = vector.broadcast %cst_55 : f32 to vector<1x32xf32>
    %148 = arith.addf %147, %146 : vector<1x32xf32>
    %149 = arith.divf %147, %148 : vector<1x32xf32>
    %150 = vector.extract_strided_slice %143 {offsets = [0, 32], sizes = [1, 32], strides = [1, 1]} : vector<1x128xf32> to vector<1x32xf32>
    %151 = arith.negf %150 : vector<1x32xf32>
    %152 = math.exp %151 : vector<1x32xf32>
    %cst_56 = arith.constant 1.000000e+00 : f32
    %153 = vector.broadcast %cst_56 : f32 to vector<1x32xf32>
    %154 = arith.addf %153, %152 : vector<1x32xf32>
    %155 = arith.divf %153, %154 : vector<1x32xf32>
    %156 = vector.extract_strided_slice %143 {offsets = [0, 64], sizes = [1, 32], strides = [1, 1]} : vector<1x128xf32> to vector<1x32xf32>
    %157 = math.tanh %156 : vector<1x32xf32>
    %158 = vector.extract_strided_slice %143 {offsets = [0, 96], sizes = [1, 32], strides = [1, 1]} : vector<1x128xf32> to vector<1x32xf32>
    %159 = arith.negf %158 : vector<1x32xf32>
    %160 = math.exp %159 : vector<1x32xf32>
    %cst_57 = arith.constant 1.000000e+00 : f32
    %161 = vector.broadcast %cst_57 : f32 to vector<1x32xf32>
    %162 = arith.addf %161, %160 : vector<1x32xf32>
    %163 = arith.divf %161, %162 : vector<1x32xf32>
    %164 = arith.mulf %155, %138 : vector<1x32xf32>
    %165 = arith.mulf %149, %157 : vector<1x32xf32>
    %166 = arith.addf %164, %165 : vector<1x32xf32>
    %167 = math.tanh %166 : vector<1x32xf32>
    %168 = arith.mulf %163, %167 : vector<1x32xf32>
    %169 = vector.extract_strided_slice %53 {offsets = [4, 0], sizes = [1, 128], strides = [1, 1]} : vector<8x128xf32> to vector<1x128xf32>
    %cst_58 = arith.constant dense<0.000000e+00> : vector<1x128xf32>
    %170 = tpu.matmul %168, %54, %cst_58 {dimension_numbers = #tpu.dot_dimension_numbers<[1], [0], [0], [1], [0, 0, 1, 1], [], []>} : vector<1x32xf32>, vector<32x128xf32>, vector<1x128xf32> -> vector<1x128xf32>
    %171 = arith.addf %169, %170 : vector<1x128xf32>
    %172 = vector.extract_strided_slice %171 {offsets = [0, 0], sizes = [1, 32], strides = [1, 1]} : vector<1x128xf32> to vector<1x32xf32>
    %173 = arith.negf %172 : vector<1x32xf32>
    %174 = math.exp %173 : vector<1x32xf32>
    %cst_59 = arith.constant 1.000000e+00 : f32
    %175 = vector.broadcast %cst_59 : f32 to vector<1x32xf32>
    %176 = arith.addf %175, %174 : vector<1x32xf32>
    %177 = arith.divf %175, %176 : vector<1x32xf32>
    %178 = vector.extract_strided_slice %171 {offsets = [0, 32], sizes = [1, 32], strides = [1, 1]} : vector<1x128xf32> to vector<1x32xf32>
    %179 = arith.negf %178 : vector<1x32xf32>
    %180 = math.exp %179 : vector<1x32xf32>
    %cst_60 = arith.constant 1.000000e+00 : f32
    %181 = vector.broadcast %cst_60 : f32 to vector<1x32xf32>
    %182 = arith.addf %181, %180 : vector<1x32xf32>
    %183 = arith.divf %181, %182 : vector<1x32xf32>
    %184 = vector.extract_strided_slice %171 {offsets = [0, 64], sizes = [1, 32], strides = [1, 1]} : vector<1x128xf32> to vector<1x32xf32>
    %185 = math.tanh %184 : vector<1x32xf32>
    %186 = vector.extract_strided_slice %171 {offsets = [0, 96], sizes = [1, 32], strides = [1, 1]} : vector<1x128xf32> to vector<1x32xf32>
    %187 = arith.negf %186 : vector<1x32xf32>
    %188 = math.exp %187 : vector<1x32xf32>
    %cst_61 = arith.constant 1.000000e+00 : f32
    %189 = vector.broadcast %cst_61 : f32 to vector<1x32xf32>
    %190 = arith.addf %189, %188 : vector<1x32xf32>
    %191 = arith.divf %189, %190 : vector<1x32xf32>
    %192 = arith.mulf %183, %166 : vector<1x32xf32>
    %193 = arith.mulf %177, %185 : vector<1x32xf32>
    %194 = arith.addf %192, %193 : vector<1x32xf32>
    %195 = math.tanh %194 : vector<1x32xf32>
    %196 = arith.mulf %191, %195 : vector<1x32xf32>
    %197 = vector.extract_strided_slice %53 {offsets = [5, 0], sizes = [1, 128], strides = [1, 1]} : vector<8x128xf32> to vector<1x128xf32>
    %cst_62 = arith.constant dense<0.000000e+00> : vector<1x128xf32>
    %198 = tpu.matmul %196, %54, %cst_62 {dimension_numbers = #tpu.dot_dimension_numbers<[1], [0], [0], [1], [0, 0, 1, 1], [], []>} : vector<1x32xf32>, vector<32x128xf32>, vector<1x128xf32> -> vector<1x128xf32>
    %199 = arith.addf %197, %198 : vector<1x128xf32>
    %200 = vector.extract_strided_slice %199 {offsets = [0, 0], sizes = [1, 32], strides = [1, 1]} : vector<1x128xf32> to vector<1x32xf32>
    %201 = arith.negf %200 : vector<1x32xf32>
    %202 = math.exp %201 : vector<1x32xf32>
    %cst_63 = arith.constant 1.000000e+00 : f32
    %203 = vector.broadcast %cst_63 : f32 to vector<1x32xf32>
    %204 = arith.addf %203, %202 : vector<1x32xf32>
    %205 = arith.divf %203, %204 : vector<1x32xf32>
    %206 = vector.extract_strided_slice %199 {offsets = [0, 32], sizes = [1, 32], strides = [1, 1]} : vector<1x128xf32> to vector<1x32xf32>
    %207 = arith.negf %206 : vector<1x32xf32>
    %208 = math.exp %207 : vector<1x32xf32>
    %cst_64 = arith.constant 1.000000e+00 : f32
    %209 = vector.broadcast %cst_64 : f32 to vector<1x32xf32>
    %210 = arith.addf %209, %208 : vector<1x32xf32>
    %211 = arith.divf %209, %210 : vector<1x32xf32>
    %212 = vector.extract_strided_slice %199 {offsets = [0, 64], sizes = [1, 32], strides = [1, 1]} : vector<1x128xf32> to vector<1x32xf32>
    %213 = math.tanh %212 : vector<1x32xf32>
    %214 = vector.extract_strided_slice %199 {offsets = [0, 96], sizes = [1, 32], strides = [1, 1]} : vector<1x128xf32> to vector<1x32xf32>
    %215 = arith.negf %214 : vector<1x32xf32>
    %216 = math.exp %215 : vector<1x32xf32>
    %cst_65 = arith.constant 1.000000e+00 : f32
    %217 = vector.broadcast %cst_65 : f32 to vector<1x32xf32>
    %218 = arith.addf %217, %216 : vector<1x32xf32>
    %219 = arith.divf %217, %218 : vector<1x32xf32>
    %220 = arith.mulf %211, %194 : vector<1x32xf32>
    %221 = arith.mulf %205, %213 : vector<1x32xf32>
    %222 = arith.addf %220, %221 : vector<1x32xf32>
    %223 = math.tanh %222 : vector<1x32xf32>
    %224 = arith.mulf %219, %223 : vector<1x32xf32>
    %225 = vector.extract_strided_slice %53 {offsets = [6, 0], sizes = [1, 128], strides = [1, 1]} : vector<8x128xf32> to vector<1x128xf32>
    %cst_66 = arith.constant dense<0.000000e+00> : vector<1x128xf32>
    %226 = tpu.matmul %224, %54, %cst_66 {dimension_numbers = #tpu.dot_dimension_numbers<[1], [0], [0], [1], [0, 0, 1, 1], [], []>} : vector<1x32xf32>, vector<32x128xf32>, vector<1x128xf32> -> vector<1x128xf32>
    %227 = arith.addf %225, %226 : vector<1x128xf32>
    %228 = vector.extract_strided_slice %227 {offsets = [0, 0], sizes = [1, 32], strides = [1, 1]} : vector<1x128xf32> to vector<1x32xf32>
    %229 = arith.negf %228 : vector<1x32xf32>
    %230 = math.exp %229 : vector<1x32xf32>
    %cst_67 = arith.constant 1.000000e+00 : f32
    %231 = vector.broadcast %cst_67 : f32 to vector<1x32xf32>
    %232 = arith.addf %231, %230 : vector<1x32xf32>
    %233 = arith.divf %231, %232 : vector<1x32xf32>
    %234 = vector.extract_strided_slice %227 {offsets = [0, 32], sizes = [1, 32], strides = [1, 1]} : vector<1x128xf32> to vector<1x32xf32>
    %235 = arith.negf %234 : vector<1x32xf32>
    %236 = math.exp %235 : vector<1x32xf32>
    %cst_68 = arith.constant 1.000000e+00 : f32
    %237 = vector.broadcast %cst_68 : f32 to vector<1x32xf32>
    %238 = arith.addf %237, %236 : vector<1x32xf32>
    %239 = arith.divf %237, %238 : vector<1x32xf32>
    %240 = vector.extract_strided_slice %227 {offsets = [0, 64], sizes = [1, 32], strides = [1, 1]} : vector<1x128xf32> to vector<1x32xf32>
    %241 = math.tanh %240 : vector<1x32xf32>
    %242 = vector.extract_strided_slice %227 {offsets = [0, 96], sizes = [1, 32], strides = [1, 1]} : vector<1x128xf32> to vector<1x32xf32>
    %243 = arith.negf %242 : vector<1x32xf32>
    %244 = math.exp %243 : vector<1x32xf32>
    %cst_69 = arith.constant 1.000000e+00 : f32
    %245 = vector.broadcast %cst_69 : f32 to vector<1x32xf32>
    %246 = arith.addf %245, %244 : vector<1x32xf32>
    %247 = arith.divf %245, %246 : vector<1x32xf32>
    %248 = arith.mulf %239, %222 : vector<1x32xf32>
    %249 = arith.mulf %233, %241 : vector<1x32xf32>
    %250 = arith.addf %248, %249 : vector<1x32xf32>
    %251 = math.tanh %250 : vector<1x32xf32>
    %252 = arith.mulf %247, %251 : vector<1x32xf32>
    %253 = vector.extract_strided_slice %53 {offsets = [7, 0], sizes = [1, 128], strides = [1, 1]} : vector<8x128xf32> to vector<1x128xf32>
    %cst_70 = arith.constant dense<0.000000e+00> : vector<1x128xf32>
    %254 = tpu.matmul %252, %54, %cst_70 {dimension_numbers = #tpu.dot_dimension_numbers<[1], [0], [0], [1], [0, 0, 1, 1], [], []>} : vector<1x32xf32>, vector<32x128xf32>, vector<1x128xf32> -> vector<1x128xf32>
    %255 = arith.addf %253, %254 : vector<1x128xf32>
    %256 = vector.extract_strided_slice %255 {offsets = [0, 0], sizes = [1, 32], strides = [1, 1]} : vector<1x128xf32> to vector<1x32xf32>
    %257 = arith.negf %256 : vector<1x32xf32>
    %258 = math.exp %257 : vector<1x32xf32>
    %cst_71 = arith.constant 1.000000e+00 : f32
    %259 = vector.broadcast %cst_71 : f32 to vector<1x32xf32>
    %260 = arith.addf %259, %258 : vector<1x32xf32>
    %261 = arith.divf %259, %260 : vector<1x32xf32>
    %262 = vector.extract_strided_slice %255 {offsets = [0, 32], sizes = [1, 32], strides = [1, 1]} : vector<1x128xf32> to vector<1x32xf32>
    %263 = arith.negf %262 : vector<1x32xf32>
    %264 = math.exp %263 : vector<1x32xf32>
    %cst_72 = arith.constant 1.000000e+00 : f32
    %265 = vector.broadcast %cst_72 : f32 to vector<1x32xf32>
    %266 = arith.addf %265, %264 : vector<1x32xf32>
    %267 = arith.divf %265, %266 : vector<1x32xf32>
    %268 = vector.extract_strided_slice %255 {offsets = [0, 64], sizes = [1, 32], strides = [1, 1]} : vector<1x128xf32> to vector<1x32xf32>
    %269 = math.tanh %268 : vector<1x32xf32>
    %270 = vector.extract_strided_slice %255 {offsets = [0, 96], sizes = [1, 32], strides = [1, 1]} : vector<1x128xf32> to vector<1x32xf32>
    %271 = arith.negf %270 : vector<1x32xf32>
    %272 = math.exp %271 : vector<1x32xf32>
    %cst_73 = arith.constant 1.000000e+00 : f32
    %273 = vector.broadcast %cst_73 : f32 to vector<1x32xf32>
    %274 = arith.addf %273, %272 : vector<1x32xf32>
    %275 = arith.divf %273, %274 : vector<1x32xf32>
    %276 = arith.mulf %267, %250 : vector<1x32xf32>
    %277 = arith.mulf %261, %269 : vector<1x32xf32>
    %278 = arith.addf %276, %277 : vector<1x32xf32>
    %279 = math.tanh %278 : vector<1x32xf32>
    %280 = arith.mulf %275, %279 : vector<1x32xf32>
    %c0_74 = arith.constant 0 : index
    %c0_75 = arith.constant 0 : index
    %281 = vector.load %arg6[%c0_74, %c0_75] : memref<16x128xf32, #tpu.memory_space<vmem>>, vector<16x128xf32>
    %cst_76 = arith.constant dense<0.000000e+00> : vector<8x128xf32>
    %282 = tpu.matmul %48, %281, %cst_76 {dimension_numbers = #tpu.dot_dimension_numbers<[1], [0], [0], [1], [0, 0, 1, 1], [], []>} : vector<8x16xf32>, vector<16x128xf32>, vector<8x128xf32> -> vector<8x128xf32>
    %c0_77 = arith.constant 0 : index
    %c0_78 = arith.constant 0 : index
    %283 = vector.load %arg8[%c0_77, %c0_78] : memref<1x128xf32, #tpu.memory_space<vmem>>, vector<1x128xf32>
    %284 = vector.broadcast %283 : vector<1x128xf32> to vector<8x128xf32>
    %285 = arith.addf %282, %284 : vector<8x128xf32>
    %c0_79 = arith.constant 0 : index
    %c0_80 = arith.constant 0 : index
    %286 = vector.load %arg7[%c0_79, %c0_80] : memref<32x128xf32, #tpu.memory_space<vmem>>, vector<32x128xf32>
    %287 = vector.extract_strided_slice %285 {offsets = [0, 0], sizes = [1, 128], strides = [1, 1]} : vector<8x128xf32> to vector<1x128xf32>
    %cst_81 = arith.constant dense<0.000000e+00> : vector<1x128xf32>
    %288 = tpu.matmul %280, %286, %cst_81 {dimension_numbers = #tpu.dot_dimension_numbers<[1], [0], [0], [1], [0, 0, 1, 1], [], []>} : vector<1x32xf32>, vector<32x128xf32>, vector<1x128xf32> -> vector<1x128xf32>
    %289 = arith.addf %287, %288 : vector<1x128xf32>
    %290 = vector.extract_strided_slice %289 {offsets = [0, 0], sizes = [1, 32], strides = [1, 1]} : vector<1x128xf32> to vector<1x32xf32>
    %291 = arith.negf %290 : vector<1x32xf32>
    %292 = math.exp %291 : vector<1x32xf32>
    %cst_82 = arith.constant 1.000000e+00 : f32
    %293 = vector.broadcast %cst_82 : f32 to vector<1x32xf32>
    %294 = arith.addf %293, %292 : vector<1x32xf32>
    %295 = arith.divf %293, %294 : vector<1x32xf32>
    %296 = vector.extract_strided_slice %289 {offsets = [0, 32], sizes = [1, 32], strides = [1, 1]} : vector<1x128xf32> to vector<1x32xf32>
    %297 = arith.negf %296 : vector<1x32xf32>
    %298 = math.exp %297 : vector<1x32xf32>
    %cst_83 = arith.constant 1.000000e+00 : f32
    %299 = vector.broadcast %cst_83 : f32 to vector<1x32xf32>
    %300 = arith.addf %299, %298 : vector<1x32xf32>
    %301 = arith.divf %299, %300 : vector<1x32xf32>
    %302 = vector.extract_strided_slice %289 {offsets = [0, 64], sizes = [1, 32], strides = [1, 1]} : vector<1x128xf32> to vector<1x32xf32>
    %303 = math.tanh %302 : vector<1x32xf32>
    %304 = vector.extract_strided_slice %289 {offsets = [0, 96], sizes = [1, 32], strides = [1, 1]} : vector<1x128xf32> to vector<1x32xf32>
    %305 = arith.negf %304 : vector<1x32xf32>
    %306 = math.exp %305 : vector<1x32xf32>
    %cst_84 = arith.constant 1.000000e+00 : f32
    %307 = vector.broadcast %cst_84 : f32 to vector<1x32xf32>
    %308 = arith.addf %307, %306 : vector<1x32xf32>
    %309 = arith.divf %307, %308 : vector<1x32xf32>
    %310 = arith.mulf %301, %278 : vector<1x32xf32>
    %311 = arith.mulf %295, %303 : vector<1x32xf32>
    %312 = arith.addf %310, %311 : vector<1x32xf32>
    %313 = math.tanh %312 : vector<1x32xf32>
    %314 = arith.mulf %309, %313 : vector<1x32xf32>
    %c0_85 = arith.constant 0 : index
    %c0_86 = arith.constant 0 : index
    %315 = vector.load %arg17[%c0_85, %c0_86] : memref<8x32xf32, #tpu.memory_space<vmem>>, vector<1x32xf32>
    tpu.vector_store %arg17[%c0_85, %c0_86], %314 {strides = array<i32>} : memref<8x32xf32, #tpu.memory_space<vmem>>, vector<1x32xf32>,
    %316 = vector.extract_strided_slice %285 {offsets = [1, 0], sizes = [1, 128], strides = [1, 1]} : vector<8x128xf32> to vector<1x128xf32>
    %cst_87 = arith.constant dense<0.000000e+00> : vector<1x128xf32>
    %317 = tpu.matmul %314, %286, %cst_87 {dimension_numbers = #tpu.dot_dimension_numbers<[1], [0], [0], [1], [0, 0, 1, 1], [], []>} : vector<1x32xf32>, vector<32x128xf32>, vector<1x128xf32> -> vector<1x128xf32>
    %318 = arith.addf %316, %317 : vector<1x128xf32>
    %319 = vector.extract_strided_slice %318 {offsets = [0, 0], sizes = [1, 32], strides = [1, 1]} : vector<1x128xf32> to vector<1x32xf32>
    %320 = arith.negf %319 : vector<1x32xf32>
    %321 = math.exp %320 : vector<1x32xf32>
    %cst_88 = arith.constant 1.000000e+00 : f32
    %322 = vector.broadcast %cst_88 : f32 to vector<1x32xf32>
    %323 = arith.addf %322, %321 : vector<1x32xf32>
    %324 = arith.divf %322, %323 : vector<1x32xf32>
    %325 = vector.extract_strided_slice %318 {offsets = [0, 32], sizes = [1, 32], strides = [1, 1]} : vector<1x128xf32> to vector<1x32xf32>
    %326 = arith.negf %325 : vector<1x32xf32>
    %327 = math.exp %326 : vector<1x32xf32>
    %cst_89 = arith.constant 1.000000e+00 : f32
    %328 = vector.broadcast %cst_89 : f32 to vector<1x32xf32>
    %329 = arith.addf %328, %327 : vector<1x32xf32>
    %330 = arith.divf %328, %329 : vector<1x32xf32>
    %331 = vector.extract_strided_slice %318 {offsets = [0, 64], sizes = [1, 32], strides = [1, 1]} : vector<1x128xf32> to vector<1x32xf32>
    %332 = math.tanh %331 : vector<1x32xf32>
    %333 = vector.extract_strided_slice %318 {offsets = [0, 96], sizes = [1, 32], strides = [1, 1]} : vector<1x128xf32> to vector<1x32xf32>
    %334 = arith.negf %333 : vector<1x32xf32>
    %335 = math.exp %334 : vector<1x32xf32>
    %cst_90 = arith.constant 1.000000e+00 : f32
    %336 = vector.broadcast %cst_90 : f32 to vector<1x32xf32>
    %337 = arith.addf %336, %335 : vector<1x32xf32>
    %338 = arith.divf %336, %337 : vector<1x32xf32>
    %339 = arith.mulf %330, %312 : vector<1x32xf32>
    %340 = arith.mulf %324, %332 : vector<1x32xf32>
    %341 = arith.addf %339, %340 : vector<1x32xf32>
    %342 = math.tanh %341 : vector<1x32xf32>
    %343 = arith.mulf %338, %342 : vector<1x32xf32>
    %c1_91 = arith.constant 1 : index
    %c0_92 = arith.constant 0 : index
    %344 = vector.load %arg17[%c1_91, %c0_92] : memref<8x32xf32, #tpu.memory_space<vmem>>, vector<1x32xf32>
    tpu.vector_store %arg17[%c1_91, %c0_92], %343 {strides = array<i32>} : memref<8x32xf32, #tpu.memory_space<vmem>>, vector<1x32xf32>,
    %345 = vector.extract_strided_slice %285 {offsets = [2, 0], sizes = [1, 128], strides = [1, 1]} : vector<8x128xf32> to vector<1x128xf32>
    %cst_93 = arith.constant dense<0.000000e+00> : vector<1x128xf32>
    %346 = tpu.matmul %343, %286, %cst_93 {dimension_numbers = #tpu.dot_dimension_numbers<[1], [0], [0], [1], [0, 0, 1, 1], [], []>} : vector<1x32xf32>, vector<32x128xf32>, vector<1x128xf32> -> vector<1x128xf32>
    %347 = arith.addf %345, %346 : vector<1x128xf32>
    %348 = vector.extract_strided_slice %347 {offsets = [0, 0], sizes = [1, 32], strides = [1, 1]} : vector<1x128xf32> to vector<1x32xf32>
    %349 = arith.negf %348 : vector<1x32xf32>
    %350 = math.exp %349 : vector<1x32xf32>
    %cst_94 = arith.constant 1.000000e+00 : f32
    %351 = vector.broadcast %cst_94 : f32 to vector<1x32xf32>
    %352 = arith.addf %351, %350 : vector<1x32xf32>
    %353 = arith.divf %351, %352 : vector<1x32xf32>
    %354 = vector.extract_strided_slice %347 {offsets = [0, 32], sizes = [1, 32], strides = [1, 1]} : vector<1x128xf32> to vector<1x32xf32>
    %355 = arith.negf %354 : vector<1x32xf32>
    %356 = math.exp %355 : vector<1x32xf32>
    %cst_95 = arith.constant 1.000000e+00 : f32
    %357 = vector.broadcast %cst_95 : f32 to vector<1x32xf32>
    %358 = arith.addf %357, %356 : vector<1x32xf32>
    %359 = arith.divf %357, %358 : vector<1x32xf32>
    %360 = vector.extract_strided_slice %347 {offsets = [0, 64], sizes = [1, 32], strides = [1, 1]} : vector<1x128xf32> to vector<1x32xf32>
    %361 = math.tanh %360 : vector<1x32xf32>
    %362 = vector.extract_strided_slice %347 {offsets = [0, 96], sizes = [1, 32], strides = [1, 1]} : vector<1x128xf32> to vector<1x32xf32>
    %363 = arith.negf %362 : vector<1x32xf32>
    %364 = math.exp %363 : vector<1x32xf32>
    %cst_96 = arith.constant 1.000000e+00 : f32
    %365 = vector.broadcast %cst_96 : f32 to vector<1x32xf32>
    %366 = arith.addf %365, %364 : vector<1x32xf32>
    %367 = arith.divf %365, %366 : vector<1x32xf32>
    %368 = arith.mulf %359, %341 : vector<1x32xf32>
    %369 = arith.mulf %353, %361 : vector<1x32xf32>
    %370 = arith.addf %368, %369 : vector<1x32xf32>
    %371 = math.tanh %370 : vector<1x32xf32>
    %372 = arith.mulf %367, %371 : vector<1x32xf32>
    %c2_97 = arith.constant 2 : index
    %c0_98 = arith.constant 0 : index
    %373 = vector.load %arg17[%c2_97, %c0_98] : memref<8x32xf32, #tpu.memory_space<vmem>>, vector<1x32xf32>
    tpu.vector_store %arg17[%c2_97, %c0_98], %372 {strides = array<i32>} : memref<8x32xf32, #tpu.memory_space<vmem>>, vector<1x32xf32>,
    %374 = vector.extract_strided_slice %285 {offsets = [3, 0], sizes = [1, 128], strides = [1, 1]} : vector<8x128xf32> to vector<1x128xf32>
    %cst_99 = arith.constant dense<0.000000e+00> : vector<1x128xf32>
    %375 = tpu.matmul %372, %286, %cst_99 {dimension_numbers = #tpu.dot_dimension_numbers<[1], [0], [0], [1], [0, 0, 1, 1], [], []>} : vector<1x32xf32>, vector<32x128xf32>, vector<1x128xf32> -> vector<1x128xf32>
    %376 = arith.addf %374, %375 : vector<1x128xf32>
    %377 = vector.extract_strided_slice %376 {offsets = [0, 0], sizes = [1, 32], strides = [1, 1]} : vector<1x128xf32> to vector<1x32xf32>
    %378 = arith.negf %377 : vector<1x32xf32>
    %379 = math.exp %378 : vector<1x32xf32>
    %cst_100 = arith.constant 1.000000e+00 : f32
    %380 = vector.broadcast %cst_100 : f32 to vector<1x32xf32>
    %381 = arith.addf %380, %379 : vector<1x32xf32>
    %382 = arith.divf %380, %381 : vector<1x32xf32>
    %383 = vector.extract_strided_slice %376 {offsets = [0, 32], sizes = [1, 32], strides = [1, 1]} : vector<1x128xf32> to vector<1x32xf32>
    %384 = arith.negf %383 : vector<1x32xf32>
    %385 = math.exp %384 : vector<1x32xf32>
    %cst_101 = arith.constant 1.000000e+00 : f32
    %386 = vector.broadcast %cst_101 : f32 to vector<1x32xf32>
    %387 = arith.addf %386, %385 : vector<1x32xf32>
    %388 = arith.divf %386, %387 : vector<1x32xf32>
    %389 = vector.extract_strided_slice %376 {offsets = [0, 64], sizes = [1, 32], strides = [1, 1]} : vector<1x128xf32> to vector<1x32xf32>
    %390 = math.tanh %389 : vector<1x32xf32>
    %391 = vector.extract_strided_slice %376 {offsets = [0, 96], sizes = [1, 32], strides = [1, 1]} : vector<1x128xf32> to vector<1x32xf32>
    %392 = arith.negf %391 : vector<1x32xf32>
    %393 = math.exp %392 : vector<1x32xf32>
    %cst_102 = arith.constant 1.000000e+00 : f32
    %394 = vector.broadcast %cst_102 : f32 to vector<1x32xf32>
    %395 = arith.addf %394, %393 : vector<1x32xf32>
    %396 = arith.divf %394, %395 : vector<1x32xf32>
    %397 = arith.mulf %388, %370 : vector<1x32xf32>
    %398 = arith.mulf %382, %390 : vector<1x32xf32>
    %399 = arith.addf %397, %398 : vector<1x32xf32>
    %400 = math.tanh %399 : vector<1x32xf32>
    %401 = arith.mulf %396, %400 : vector<1x32xf32>
    %c3_103 = arith.constant 3 : index
    %c0_104 = arith.constant 0 : index
    %402 = vector.load %arg17[%c3_103, %c0_104] : memref<8x32xf32, #tpu.memory_space<vmem>>, vector<1x32xf32>
    tpu.vector_store %arg17[%c3_103, %c0_104], %401 {strides = array<i32>} : memref<8x32xf32, #tpu.memory_space<vmem>>, vector<1x32xf32>,
    %403 = vector.extract_strided_slice %285 {offsets = [4, 0], sizes = [1, 128], strides = [1, 1]} : vector<8x128xf32> to vector<1x128xf32>
    %cst_105 = arith.constant dense<0.000000e+00> : vector<1x128xf32>
    %404 = tpu.matmul %401, %286, %cst_105 {dimension_numbers = #tpu.dot_dimension_numbers<[1], [0], [0], [1], [0, 0, 1, 1], [], []>} : vector<1x32xf32>, vector<32x128xf32>, vector<1x128xf32> -> vector<1x128xf32>
    %405 = arith.addf %403, %404 : vector<1x128xf32>
    %406 = vector.extract_strided_slice %405 {offsets = [0, 0], sizes = [1, 32], strides = [1, 1]} : vector<1x128xf32> to vector<1x32xf32>
    %407 = arith.negf %406 : vector<1x32xf32>
    %408 = math.exp %407 : vector<1x32xf32>
    %cst_106 = arith.constant 1.000000e+00 : f32
    %409 = vector.broadcast %cst_106 : f32 to vector<1x32xf32>
    %410 = arith.addf %409, %408 : vector<1x32xf32>
    %411 = arith.divf %409, %410 : vector<1x32xf32>
    %412 = vector.extract_strided_slice %405 {offsets = [0, 32], sizes = [1, 32], strides = [1, 1]} : vector<1x128xf32> to vector<1x32xf32>
    %413 = arith.negf %412 : vector<1x32xf32>
    %414 = math.exp %413 : vector<1x32xf32>
    %cst_107 = arith.constant 1.000000e+00 : f32
    %415 = vector.broadcast %cst_107 : f32 to vector<1x32xf32>
    %416 = arith.addf %415, %414 : vector<1x32xf32>
    %417 = arith.divf %415, %416 : vector<1x32xf32>
    %418 = vector.extract_strided_slice %405 {offsets = [0, 64], sizes = [1, 32], strides = [1, 1]} : vector<1x128xf32> to vector<1x32xf32>
    %419 = math.tanh %418 : vector<1x32xf32>
    %420 = vector.extract_strided_slice %405 {offsets = [0, 96], sizes = [1, 32], strides = [1, 1]} : vector<1x128xf32> to vector<1x32xf32>
    %421 = arith.negf %420 : vector<1x32xf32>
    %422 = math.exp %421 : vector<1x32xf32>
    %cst_108 = arith.constant 1.000000e+00 : f32
    %423 = vector.broadcast %cst_108 : f32 to vector<1x32xf32>
    %424 = arith.addf %423, %422 : vector<1x32xf32>
    %425 = arith.divf %423, %424 : vector<1x32xf32>
    %426 = arith.mulf %417, %399 : vector<1x32xf32>
    %427 = arith.mulf %411, %419 : vector<1x32xf32>
    %428 = arith.addf %426, %427 : vector<1x32xf32>
    %429 = math.tanh %428 : vector<1x32xf32>
    %430 = arith.mulf %425, %429 : vector<1x32xf32>
    %c4_109 = arith.constant 4 : index
    %c0_110 = arith.constant 0 : index
    %431 = vector.load %arg17[%c4_109, %c0_110] : memref<8x32xf32, #tpu.memory_space<vmem>>, vector<1x32xf32>
    tpu.vector_store %arg17[%c4_109, %c0_110], %430 {strides = array<i32>} : memref<8x32xf32, #tpu.memory_space<vmem>>, vector<1x32xf32>,
    %432 = vector.extract_strided_slice %285 {offsets = [5, 0], sizes = [1, 128], strides = [1, 1]} : vector<8x128xf32> to vector<1x128xf32>
    %cst_111 = arith.constant dense<0.000000e+00> : vector<1x128xf32>
    %433 = tpu.matmul %430, %286, %cst_111 {dimension_numbers = #tpu.dot_dimension_numbers<[1], [0], [0], [1], [0, 0, 1, 1], [], []>} : vector<1x32xf32>, vector<32x128xf32>, vector<1x128xf32> -> vector<1x128xf32>
    %434 = arith.addf %432, %433 : vector<1x128xf32>
    %435 = vector.extract_strided_slice %434 {offsets = [0, 0], sizes = [1, 32], strides = [1, 1]} : vector<1x128xf32> to vector<1x32xf32>
    %436 = arith.negf %435 : vector<1x32xf32>
    %437 = math.exp %436 : vector<1x32xf32>
    %cst_112 = arith.constant 1.000000e+00 : f32
    %438 = vector.broadcast %cst_112 : f32 to vector<1x32xf32>
    %439 = arith.addf %438, %437 : vector<1x32xf32>
    %440 = arith.divf %438, %439 : vector<1x32xf32>
    %441 = vector.extract_strided_slice %434 {offsets = [0, 32], sizes = [1, 32], strides = [1, 1]} : vector<1x128xf32> to vector<1x32xf32>
    %442 = arith.negf %441 : vector<1x32xf32>
    %443 = math.exp %442 : vector<1x32xf32>
    %cst_113 = arith.constant 1.000000e+00 : f32
    %444 = vector.broadcast %cst_113 : f32 to vector<1x32xf32>
    %445 = arith.addf %444, %443 : vector<1x32xf32>
    %446 = arith.divf %444, %445 : vector<1x32xf32>
    %447 = vector.extract_strided_slice %434 {offsets = [0, 64], sizes = [1, 32], strides = [1, 1]} : vector<1x128xf32> to vector<1x32xf32>
    %448 = math.tanh %447 : vector<1x32xf32>
    %449 = vector.extract_strided_slice %434 {offsets = [0, 96], sizes = [1, 32], strides = [1, 1]} : vector<1x128xf32> to vector<1x32xf32>
    %450 = arith.negf %449 : vector<1x32xf32>
    %451 = math.exp %450 : vector<1x32xf32>
    %cst_114 = arith.constant 1.000000e+00 : f32
    %452 = vector.broadcast %cst_114 : f32 to vector<1x32xf32>
    %453 = arith.addf %452, %451 : vector<1x32xf32>
    %454 = arith.divf %452, %453 : vector<1x32xf32>
    %455 = arith.mulf %446, %428 : vector<1x32xf32>
    %456 = arith.mulf %440, %448 : vector<1x32xf32>
    %457 = arith.addf %455, %456 : vector<1x32xf32>
    %458 = math.tanh %457 : vector<1x32xf32>
    %459 = arith.mulf %454, %458 : vector<1x32xf32>
    %c5_115 = arith.constant 5 : index
    %c0_116 = arith.constant 0 : index
    %460 = vector.load %arg17[%c5_115, %c0_116] : memref<8x32xf32, #tpu.memory_space<vmem>>, vector<1x32xf32>
    tpu.vector_store %arg17[%c5_115, %c0_116], %459 {strides = array<i32>} : memref<8x32xf32, #tpu.memory_space<vmem>>, vector<1x32xf32>,
    %461 = vector.extract_strided_slice %285 {offsets = [6, 0], sizes = [1, 128], strides = [1, 1]} : vector<8x128xf32> to vector<1x128xf32>
    %cst_117 = arith.constant dense<0.000000e+00> : vector<1x128xf32>
    %462 = tpu.matmul %459, %286, %cst_117 {dimension_numbers = #tpu.dot_dimension_numbers<[1], [0], [0], [1], [0, 0, 1, 1], [], []>} : vector<1x32xf32>, vector<32x128xf32>, vector<1x128xf32> -> vector<1x128xf32>
    %463 = arith.addf %461, %462 : vector<1x128xf32>
    %464 = vector.extract_strided_slice %463 {offsets = [0, 0], sizes = [1, 32], strides = [1, 1]} : vector<1x128xf32> to vector<1x32xf32>
    %465 = arith.negf %464 : vector<1x32xf32>
    %466 = math.exp %465 : vector<1x32xf32>
    %cst_118 = arith.constant 1.000000e+00 : f32
    %467 = vector.broadcast %cst_118 : f32 to vector<1x32xf32>
    %468 = arith.addf %467, %466 : vector<1x32xf32>
    %469 = arith.divf %467, %468 : vector<1x32xf32>
    %470 = vector.extract_strided_slice %463 {offsets = [0, 32], sizes = [1, 32], strides = [1, 1]} : vector<1x128xf32> to vector<1x32xf32>
    %471 = arith.negf %470 : vector<1x32xf32>
    %472 = math.exp %471 : vector<1x32xf32>
    %cst_119 = arith.constant 1.000000e+00 : f32
    %473 = vector.broadcast %cst_119 : f32 to vector<1x32xf32>
    %474 = arith.addf %473, %472 : vector<1x32xf32>
    %475 = arith.divf %473, %474 : vector<1x32xf32>
    %476 = vector.extract_strided_slice %463 {offsets = [0, 64], sizes = [1, 32], strides = [1, 1]} : vector<1x128xf32> to vector<1x32xf32>
    %477 = math.tanh %476 : vector<1x32xf32>
    %478 = vector.extract_strided_slice %463 {offsets = [0, 96], sizes = [1, 32], strides = [1, 1]} : vector<1x128xf32> to vector<1x32xf32>
    %479 = arith.negf %478 : vector<1x32xf32>
    %480 = math.exp %479 : vector<1x32xf32>
    %cst_120 = arith.constant 1.000000e+00 : f32
    %481 = vector.broadcast %cst_120 : f32 to vector<1x32xf32>
    %482 = arith.addf %481, %480 : vector<1x32xf32>
    %483 = arith.divf %481, %482 : vector<1x32xf32>
    %484 = arith.mulf %475, %457 : vector<1x32xf32>
    %485 = arith.mulf %469, %477 : vector<1x32xf32>
    %486 = arith.addf %484, %485 : vector<1x32xf32>
    %487 = math.tanh %486 : vector<1x32xf32>
    %488 = arith.mulf %483, %487 : vector<1x32xf32>
    %c6_121 = arith.constant 6 : index
    %c0_122 = arith.constant 0 : index
    %489 = vector.load %arg17[%c6_121, %c0_122] : memref<8x32xf32, #tpu.memory_space<vmem>>, vector<1x32xf32>
    tpu.vector_store %arg17[%c6_121, %c0_122], %488 {strides = array<i32>} : memref<8x32xf32, #tpu.memory_space<vmem>>, vector<1x32xf32>,
    %490 = vector.extract_strided_slice %285 {offsets = [7, 0], sizes = [1, 128], strides = [1, 1]} : vector<8x128xf32> to vector<1x128xf32>
    %cst_123 = arith.constant dense<0.000000e+00> : vector<1x128xf32>
    %491 = tpu.matmul %488, %286, %cst_123 {dimension_numbers = #tpu.dot_dimension_numbers<[1], [0], [0], [1], [0, 0, 1, 1], [], []>} : vector<1x32xf32>, vector<32x128xf32>, vector<1x128xf32> -> vector<1x128xf32>
    %492 = arith.addf %490, %491 : vector<1x128xf32>
    %493 = vector.extract_strided_slice %492 {offsets = [0, 0], sizes = [1, 32], strides = [1, 1]} : vector<1x128xf32> to vector<1x32xf32>
    %494 = arith.negf %493 : vector<1x32xf32>
    %495 = math.exp %494 : vector<1x32xf32>
    %cst_124 = arith.constant 1.000000e+00 : f32
    %496 = vector.broadcast %cst_124 : f32 to vector<1x32xf32>
    %497 = arith.addf %496, %495 : vector<1x32xf32>
    %498 = arith.divf %496, %497 : vector<1x32xf32>
    %499 = vector.extract_strided_slice %492 {offsets = [0, 32], sizes = [1, 32], strides = [1, 1]} : vector<1x128xf32> to vector<1x32xf32>
    %500 = arith.negf %499 : vector<1x32xf32>
    %501 = math.exp %500 : vector<1x32xf32>
    %cst_125 = arith.constant 1.000000e+00 : f32
    %502 = vector.broadcast %cst_125 : f32 to vector<1x32xf32>
    %503 = arith.addf %502, %501 : vector<1x32xf32>
    %504 = arith.divf %502, %503 : vector<1x32xf32>
    %505 = vector.extract_strided_slice %492 {offsets = [0, 64], sizes = [1, 32], strides = [1, 1]} : vector<1x128xf32> to vector<1x32xf32>
    %506 = math.tanh %505 : vector<1x32xf32>
    %507 = vector.extract_strided_slice %492 {offsets = [0, 96], sizes = [1, 32], strides = [1, 1]} : vector<1x128xf32> to vector<1x32xf32>
    %508 = arith.negf %507 : vector<1x32xf32>
    %509 = math.exp %508 : vector<1x32xf32>
    %cst_126 = arith.constant 1.000000e+00 : f32
    %510 = vector.broadcast %cst_126 : f32 to vector<1x32xf32>
    %511 = arith.addf %510, %509 : vector<1x32xf32>
    %512 = arith.divf %510, %511 : vector<1x32xf32>
    %513 = arith.mulf %504, %486 : vector<1x32xf32>
    %514 = arith.mulf %498, %506 : vector<1x32xf32>
    %515 = arith.addf %513, %514 : vector<1x32xf32>
    %516 = math.tanh %515 : vector<1x32xf32>
    %517 = arith.mulf %512, %516 : vector<1x32xf32>
    %c7_127 = arith.constant 7 : index
    %c0_128 = arith.constant 0 : index
    %518 = vector.load %arg17[%c7_127, %c0_128] : memref<8x32xf32, #tpu.memory_space<vmem>>, vector<1x32xf32>
    tpu.vector_store %arg17[%c7_127, %c0_128], %517 {strides = array<i32>} : memref<8x32xf32, #tpu.memory_space<vmem>>, vector<1x32xf32>,
    %c0_129 = arith.constant 0 : index
    %c0_130 = arith.constant 0 : index
    %519 = vector.load %arg17[%c0_129, %c0_130] : memref<8x32xf32, #tpu.memory_space<vmem>>, vector<8x32xf32>
    %c0_131 = arith.constant 0 : index
    %c0_132 = arith.constant 0 : index
    %520 = vector.load %arg9[%c0_131, %c0_132] : memref<32x96xf32, #tpu.memory_space<vmem>>, vector<32x96xf32>
    %cst_133 = arith.constant dense<0.000000e+00> : vector<8x96xf32>
    %521 = tpu.matmul %519, %520, %cst_133 {dimension_numbers = #tpu.dot_dimension_numbers<[1], [0], [0], [1], [0, 0, 1, 1], [], []>} : vector<8x32xf32>, vector<32x96xf32>, vector<8x96xf32> -> vector<8x96xf32>
    %c0_134 = arith.constant 0 : index
    %c0_135 = arith.constant 0 : index
    %522 = vector.load %arg10[%c0_134, %c0_135] : memref<1x96xf32, #tpu.memory_space<vmem>>, vector<1x96xf32>
    %523 = vector.broadcast %522 : vector<1x96xf32> to vector<8x96xf32>
    %524 = arith.addf %521, %523 : vector<8x96xf32>
    %c0_136 = arith.constant 0 : index
    %c0_137 = arith.constant 0 : index
    %525 = vector.load %arg11[%c0_136, %c0_137] : memref<32x32xf32, #tpu.memory_space<vmem>>, vector<32x32xf32>
    %526 = vector.extract_strided_slice %524 {offsets = [0, 0], sizes = [8, 8], strides = [1, 1]} : vector<8x96xf32> to vector<8x8xf32>
    %527 = vector.extract_strided_slice %524 {offsets = [0, 32], sizes = [8, 8], strides = [1, 1]} : vector<8x96xf32> to vector<8x8xf32>
    %528 = vector.extract_strided_slice %524 {offsets = [0, 64], sizes = [8, 8], strides = [1, 1]} : vector<8x96xf32> to vector<8x8xf32>
    "tpu.trace_start"() <{level = 10 : i32, message = "qd,kd->qk"}> : () -> ()
    %cst_138 = arith.constant dense<0.000000e+00> : vector<8x8xf32>
    %529 = tpu.matmul %526, %527, %cst_138 {dimension_numbers = #tpu.dot_dimension_numbers<[1], [1], [0], [0], [0, 0, 1, 0], [], []>} : vector<8x8xf32>, vector<8x8xf32>, vector<8x8xf32> -> vector<8x8xf32>
    "tpu.trace_stop"() : () -> ()
    %cst_139 = arith.constant 0.353553385 : f32
    %530 = vector.broadcast %cst_139 : f32 to vector<8x8xf32>
    %531 = arith.mulf %529, %530 : vector<8x8xf32>
    %cst_140 = arith.constant dense<0xFF800000> : vector<8xf32>
    %532 = vector.multi_reduction <maximumf>, %531, %cst_140 [1] : vector<8x8xf32> to vector<8xf32>
    %533 = vector.shape_cast %532 : vector<8xf32> to vector<8x1xf32>
    %534 = vector.broadcast %533 : vector<8x1xf32> to vector<8x8xf32>
    %535 = arith.subf %531, %534 : vector<8x8xf32>
    %536 = math.exp %535 : vector<8x8xf32>
    %cst_141 = arith.constant dense<0.000000e+00> : vector<8xf32>
    %537 = vector.multi_reduction <add>, %536, %cst_141 [1] : vector<8x8xf32> to vector<8xf32>
    %538 = vector.shape_cast %537 : vector<8xf32> to vector<8x1xf32>
    %539 = tpu.reciprocal %538 {approx = true} : vector<8x1xf32> -> vector<8x1xf32>
    %540 = vector.broadcast %539 : vector<8x1xf32> to vector<8x8xf32>
    %541 = arith.mulf %536, %540 : vector<8x8xf32>
    %cst_142 = arith.constant dense<0.000000e+00> : vector<8x8xf32>
    %542 = tpu.matmul %541, %528, %cst_142 {dimension_numbers = #tpu.dot_dimension_numbers<[1], [0], [0], [1], [0, 0, 1, 1], [], []>} : vector<8x8xf32>, vector<8x8xf32>, vector<8x8xf32> -> vector<8x8xf32>
    %543 = vector.extract_strided_slice %525 {offsets = [0, 0], sizes = [8, 32], strides = [1, 1]} : vector<32x32xf32> to vector<8x32xf32>
    %cst_143 = arith.constant dense<0.000000e+00> : vector<8x32xf32>
    %544 = tpu.matmul %542, %543, %cst_143 {dimension_numbers = #tpu.dot_dimension_numbers<[1], [0], [0], [1], [0, 0, 1, 1], [], []>} : vector<8x8xf32>, vector<8x32xf32>, vector<8x32xf32> -> vector<8x32xf32>
    %545 = vector.extract_strided_slice %524 {offsets = [0, 8], sizes = [8, 8], strides = [1, 1]} : vector<8x96xf32> to vector<8x8xf32>
    %546 = vector.extract_strided_slice %524 {offsets = [0, 40], sizes = [8, 8], strides = [1, 1]} : vector<8x96xf32> to vector<8x8xf32>
    %547 = vector.extract_strided_slice %524 {offsets = [0, 72], sizes = [8, 8], strides = [1, 1]} : vector<8x96xf32> to vector<8x8xf32>
    "tpu.trace_start"() <{level = 10 : i32, message = "qd,kd->qk"}> : () -> ()
    %cst_144 = arith.constant dense<0.000000e+00> : vector<8x8xf32>
    %548 = tpu.matmul %545, %546, %cst_144 {dimension_numbers = #tpu.dot_dimension_numbers<[1], [1], [0], [0], [0, 0, 1, 0], [], []>} : vector<8x8xf32>, vector<8x8xf32>, vector<8x8xf32> -> vector<8x8xf32>
    "tpu.trace_stop"() : () -> ()
    %cst_145 = arith.constant 0.353553385 : f32
    %549 = vector.broadcast %cst_145 : f32 to vector<8x8xf32>
    %550 = arith.mulf %548, %549 : vector<8x8xf32>
    %cst_146 = arith.constant dense<0xFF800000> : vector<8xf32>
    %551 = vector.multi_reduction <maximumf>, %550, %cst_146 [1] : vector<8x8xf32> to vector<8xf32>
    %552 = vector.shape_cast %551 : vector<8xf32> to vector<8x1xf32>
    %553 = vector.broadcast %552 : vector<8x1xf32> to vector<8x8xf32>
    %554 = arith.subf %550, %553 : vector<8x8xf32>
    %555 = math.exp %554 : vector<8x8xf32>
    %cst_147 = arith.constant dense<0.000000e+00> : vector<8xf32>
    %556 = vector.multi_reduction <add>, %555, %cst_147 [1] : vector<8x8xf32> to vector<8xf32>
    %557 = vector.shape_cast %556 : vector<8xf32> to vector<8x1xf32>
    %558 = tpu.reciprocal %557 {approx = true} : vector<8x1xf32> -> vector<8x1xf32>
    %559 = vector.broadcast %558 : vector<8x1xf32> to vector<8x8xf32>
    %560 = arith.mulf %555, %559 : vector<8x8xf32>
    %cst_148 = arith.constant dense<0.000000e+00> : vector<8x8xf32>
    %561 = tpu.matmul %560, %547, %cst_148 {dimension_numbers = #tpu.dot_dimension_numbers<[1], [0], [0], [1], [0, 0, 1, 1], [], []>} : vector<8x8xf32>, vector<8x8xf32>, vector<8x8xf32> -> vector<8x8xf32>
    %562 = vector.extract_strided_slice %525 {offsets = [8, 0], sizes = [8, 32], strides = [1, 1]} : vector<32x32xf32> to vector<8x32xf32>
    %cst_149 = arith.constant dense<0.000000e+00> : vector<8x32xf32>
    %563 = tpu.matmul %561, %562, %cst_149 {dimension_numbers = #tpu.dot_dimension_numbers<[1], [0], [0], [1], [0, 0, 1, 1], [], []>} : vector<8x8xf32>, vector<8x32xf32>, vector<8x32xf32> -> vector<8x32xf32>
    %564 = arith.addf %544, %563 : vector<8x32xf32>
    %565 = vector.extract_strided_slice %524 {offsets = [0, 16], sizes = [8, 8], strides = [1, 1]} : vector<8x96xf32> to vector<8x8xf32>
    %566 = vector.extract_strided_slice %524 {offsets = [0, 48], sizes = [8, 8], strides = [1, 1]} : vector<8x96xf32> to vector<8x8xf32>
    %567 = vector.extract_strided_slice %524 {offsets = [0, 80], sizes = [8, 8], strides = [1, 1]} : vector<8x96xf32> to vector<8x8xf32>
    "tpu.trace_start"() <{level = 10 : i32, message = "qd,kd->qk"}> : () -> ()
    %cst_150 = arith.constant dense<0.000000e+00> : vector<8x8xf32>
    %568 = tpu.matmul %565, %566, %cst_150 {dimension_numbers = #tpu.dot_dimension_numbers<[1], [1], [0], [0], [0, 0, 1, 0], [], []>} : vector<8x8xf32>, vector<8x8xf32>, vector<8x8xf32> -> vector<8x8xf32>
    "tpu.trace_stop"() : () -> ()
    %cst_151 = arith.constant 0.353553385 : f32
    %569 = vector.broadcast %cst_151 : f32 to vector<8x8xf32>
    %570 = arith.mulf %568, %569 : vector<8x8xf32>
    %cst_152 = arith.constant dense<0xFF800000> : vector<8xf32>
    %571 = vector.multi_reduction <maximumf>, %570, %cst_152 [1] : vector<8x8xf32> to vector<8xf32>
    %572 = vector.shape_cast %571 : vector<8xf32> to vector<8x1xf32>
    %573 = vector.broadcast %572 : vector<8x1xf32> to vector<8x8xf32>
    %574 = arith.subf %570, %573 : vector<8x8xf32>
    %575 = math.exp %574 : vector<8x8xf32>
    %cst_153 = arith.constant dense<0.000000e+00> : vector<8xf32>
    %576 = vector.multi_reduction <add>, %575, %cst_153 [1] : vector<8x8xf32> to vector<8xf32>
    %577 = vector.shape_cast %576 : vector<8xf32> to vector<8x1xf32>
    %578 = tpu.reciprocal %577 {approx = true} : vector<8x1xf32> -> vector<8x1xf32>
    %579 = vector.broadcast %578 : vector<8x1xf32> to vector<8x8xf32>
    %580 = arith.mulf %575, %579 : vector<8x8xf32>
    %cst_154 = arith.constant dense<0.000000e+00> : vector<8x8xf32>
    %581 = tpu.matmul %580, %567, %cst_154 {dimension_numbers = #tpu.dot_dimension_numbers<[1], [0], [0], [1], [0, 0, 1, 1], [], []>} : vector<8x8xf32>, vector<8x8xf32>, vector<8x8xf32> -> vector<8x8xf32>
    %582 = vector.extract_strided_slice %525 {offsets = [16, 0], sizes = [8, 32], strides = [1, 1]} : vector<32x32xf32> to vector<8x32xf32>
    %cst_155 = arith.constant dense<0.000000e+00> : vector<8x32xf32>
    %583 = tpu.matmul %581, %582, %cst_155 {dimension_numbers = #tpu.dot_dimension_numbers<[1], [0], [0], [1], [0, 0, 1, 1], [], []>} : vector<8x8xf32>, vector<8x32xf32>, vector<8x32xf32> -> vector<8x32xf32>
    %584 = arith.addf %564, %583 : vector<8x32xf32>
    %585 = vector.extract_strided_slice %524 {offsets = [0, 24], sizes = [8, 8], strides = [1, 1]} : vector<8x96xf32> to vector<8x8xf32>
    %586 = vector.extract_strided_slice %524 {offsets = [0, 56], sizes = [8, 8], strides = [1, 1]} : vector<8x96xf32> to vector<8x8xf32>
    %587 = vector.extract_strided_slice %524 {offsets = [0, 88], sizes = [8, 8], strides = [1, 1]} : vector<8x96xf32> to vector<8x8xf32>
    "tpu.trace_start"() <{level = 10 : i32, message = "qd,kd->qk"}> : () -> ()
    %cst_156 = arith.constant dense<0.000000e+00> : vector<8x8xf32>
    %588 = tpu.matmul %585, %586, %cst_156 {dimension_numbers = #tpu.dot_dimension_numbers<[1], [1], [0], [0], [0, 0, 1, 0], [], []>} : vector<8x8xf32>, vector<8x8xf32>, vector<8x8xf32> -> vector<8x8xf32>
    "tpu.trace_stop"() : () -> ()
    %cst_157 = arith.constant 0.353553385 : f32
    %589 = vector.broadcast %cst_157 : f32 to vector<8x8xf32>
    %590 = arith.mulf %588, %589 : vector<8x8xf32>
    %cst_158 = arith.constant dense<0xFF800000> : vector<8xf32>
    %591 = vector.multi_reduction <maximumf>, %590, %cst_158 [1] : vector<8x8xf32> to vector<8xf32>
    %592 = vector.shape_cast %591 : vector<8xf32> to vector<8x1xf32>
    %593 = vector.broadcast %592 : vector<8x1xf32> to vector<8x8xf32>
    %594 = arith.subf %590, %593 : vector<8x8xf32>
    %595 = math.exp %594 : vector<8x8xf32>
    %cst_159 = arith.constant dense<0.000000e+00> : vector<8xf32>
    %596 = vector.multi_reduction <add>, %595, %cst_159 [1] : vector<8x8xf32> to vector<8xf32>
    %597 = vector.shape_cast %596 : vector<8xf32> to vector<8x1xf32>
    %598 = tpu.reciprocal %597 {approx = true} : vector<8x1xf32> -> vector<8x1xf32>
    %599 = vector.broadcast %598 : vector<8x1xf32> to vector<8x8xf32>
    %600 = arith.mulf %595, %599 : vector<8x8xf32>
    %cst_160 = arith.constant dense<0.000000e+00> : vector<8x8xf32>
    %601 = tpu.matmul %600, %587, %cst_160 {dimension_numbers = #tpu.dot_dimension_numbers<[1], [0], [0], [1], [0, 0, 1, 1], [], []>} : vector<8x8xf32>, vector<8x8xf32>, vector<8x8xf32> -> vector<8x8xf32>
    %602 = vector.extract_strided_slice %525 {offsets = [24, 0], sizes = [8, 32], strides = [1, 1]} : vector<32x32xf32> to vector<8x32xf32>
    %cst_161 = arith.constant dense<0.000000e+00> : vector<8x32xf32>
    %603 = tpu.matmul %601, %602, %cst_161 {dimension_numbers = #tpu.dot_dimension_numbers<[1], [0], [0], [1], [0, 0, 1, 1], [], []>} : vector<8x8xf32>, vector<8x32xf32>, vector<8x32xf32> -> vector<8x32xf32>
    %604 = arith.addf %584, %603 : vector<8x32xf32>
    %c0_162 = arith.constant 0 : index
    %c0_163 = arith.constant 0 : index
    %605 = vector.load %arg12[%c0_162, %c0_163] : memref<1x32xf32, #tpu.memory_space<vmem>>, vector<1x32xf32>
    %606 = vector.broadcast %605 : vector<1x32xf32> to vector<8x32xf32>
    %607 = arith.addf %604, %606 : vector<8x32xf32>
    %cst_164 = arith.constant dense<0.000000e+00> : vector<32xf32>
    %608 = vector.multi_reduction <add>, %607, %cst_164 [0] : vector<8x32xf32> to vector<32xf32>
    %609 = vector.shape_cast %608 : vector<32xf32> to vector<1x32xf32>
    %c0_165 = arith.constant 0 : index
    %c0_166 = arith.constant 0 : index
    %610 = vector.load %arg13[%c0_165, %c0_166] : memref<32x8xf32, #tpu.memory_space<vmem>>, vector<32x8xf32>
    %cst_167 = arith.constant dense<0.000000e+00> : vector<1x8xf32>
    %611 = tpu.matmul %609, %610, %cst_167 {dimension_numbers = #tpu.dot_dimension_numbers<[1], [0], [0], [1], [0, 0, 1, 1], [], []>} : vector<1x32xf32>, vector<32x8xf32>, vector<1x8xf32> -> vector<1x8xf32>
    %c0_168 = arith.constant 0 : index
    %c0_169 = arith.constant 0 : index
    %612 = vector.load %arg14[%c0_168, %c0_169] : memref<1x8xf32, #tpu.memory_space<vmem>>, vector<1x8xf32>
    %613 = arith.addf %611, %612 : vector<1x8xf32>
    %614 = vector.shape_cast %613 : vector<1x8xf32> to vector<1x1x8xf32>
    %c0_170 = arith.constant 0 : index
    %c0_171 = arith.constant 0 : index
    %c0_172 = arith.constant 0 : index
    %615 = vector.load %arg15[%c0_170, %c0_171, %c0_172] : memref<1x1x8xf32, #tpu.memory_space<vmem>>, vector<1x1x8xf32>
    tpu.vector_store %arg15[%c0_170, %c0_171, %c0_172], %614 {strides = array<i32>} : memref<1x1x8xf32, #tpu.memory_space<vmem>>, vector<1x1x8xf32>,
    return
  }
  func.func @transform_0(%arg0: i32, %arg1: memref<2x8xi32, #tpu.memory_space<smem>>) -> (i32, i32, i32) {
    %c0_i32 = arith.constant 0 : i32
    %c0_i32_0 = arith.constant 0 : i32
    %c0_i32_1 = arith.constant 0 : i32
    %c0_i32_2 = arith.constant 0 : i32
    return %c0_i32, %c0_i32_0, %c0_i32_1 : i32, i32, i32
  }
  func.func @transform_1(%arg0: i32, %arg1: memref<2x8xi32, #tpu.memory_space<smem>>) -> (i32, i32) {
    %c0_i32 = arith.constant 0 : i32
    %c0_i32_0 = arith.constant 0 : i32
    %c0_i32_1 = arith.constant 0 : i32
    return %c0_i32, %c0_i32_0 : i32, i32
  }
  func.func @transform_2(%arg0: i32, %arg1: memref<2x8xi32, #tpu.memory_space<smem>>) -> (i32, i32) {
    %c0_i32 = arith.constant 0 : i32
    %c0_i32_0 = arith.constant 0 : i32
    %c0_i32_1 = arith.constant 0 : i32
    return %c0_i32, %c0_i32_0 : i32, i32
  }
  func.func @transform_3(%arg0: i32, %arg1: memref<2x8xi32, #tpu.memory_space<smem>>) -> (i32, i32) {
    %c0_i32 = arith.constant 0 : i32
    %c0_i32_0 = arith.constant 0 : i32
    %c0_i32_1 = arith.constant 0 : i32
    return %c0_i32, %c0_i32_0 : i32, i32
  }
  func.func @transform_4(%arg0: i32, %arg1: memref<2x8xi32, #tpu.memory_space<smem>>) -> (i32, i32) {
    %c0_i32 = arith.constant 0 : i32
    %c0_i32_0 = arith.constant 0 : i32
    %c0_i32_1 = arith.constant 0 : i32
    return %c0_i32, %c0_i32_0 : i32, i32
  }
  func.func @transform_5(%arg0: i32, %arg1: memref<2x8xi32, #tpu.memory_space<smem>>) -> (i32, i32) {
    %c0_i32 = arith.constant 0 : i32
    %c0_i32_0 = arith.constant 0 : i32
    %c0_i32_1 = arith.constant 0 : i32
    return %c0_i32, %c0_i32_0 : i32, i32
  }
  func.func @transform_6(%arg0: i32, %arg1: memref<2x8xi32, #tpu.memory_space<smem>>) -> (i32, i32) {
    %c0_i32 = arith.constant 0 : i32
    %c0_i32_0 = arith.constant 0 : i32
    %c0_i32_1 = arith.constant 0 : i32
    return %c0_i32, %c0_i32_0 : i32, i32
  }
  func.func @transform_7(%arg0: i32, %arg1: memref<2x8xi32, #tpu.memory_space<smem>>) -> (i32, i32) {
    %c0_i32 = arith.constant 0 : i32
    %c0_i32_0 = arith.constant 0 : i32
    %c0_i32_1 = arith.constant 0 : i32
    return %c0_i32, %c0_i32_0 : i32, i32
  }
  func.func @transform_8(%arg0: i32, %arg1: memref<2x8xi32, #tpu.memory_space<smem>>) -> (i32, i32) {
    %c0_i32 = arith.constant 0 : i32
    %c0_i32_0 = arith.constant 0 : i32
    %c0_i32_1 = arith.constant 0 : i32
    return %c0_i32, %c0_i32_0 : i32, i32
  }
  func.func @transform_9(%arg0: i32, %arg1: memref<2x8xi32, #tpu.memory_space<smem>>) -> (i32, i32) {
    %c0_i32 = arith.constant 0 : i32
    %c0_i32_0 = arith.constant 0 : i32
    %c0_i32_1 = arith.constant 0 : i32
    return %c0_i32, %c0_i32_0 : i32, i32
  }
  func.func @transform_10(%arg0: i32, %arg1: memref<2x8xi32, #tpu.memory_space<smem>>) -> (i32, i32) {
    %c0_i32 = arith.constant 0 : i32
    %c0_i32_0 = arith.constant 0 : i32
    %c0_i32_1 = arith.constant 0 : i32
    return %c0_i32, %c0_i32_0 : i32, i32
  }
  func.func @transform_11(%arg0: i32, %arg1: memref<2x8xi32, #tpu.memory_space<smem>>) -> (i32, i32) {
    %c0_i32 = arith.constant 0 : i32
    %c0_i32_0 = arith.constant 0 : i32
    %c0_i32_1 = arith.constant 0 : i32
    return %c0_i32, %c0_i32_0 : i32, i32
  }
  func.func @transform_12(%arg0: i32, %arg1: memref<2x8xi32, #tpu.memory_space<smem>>) -> (i32, i32) {
    %c0_i32 = arith.constant 0 : i32
    %c0_i32_0 = arith.constant 0 : i32
    %c0_i32_1 = arith.constant 0 : i32
    return %c0_i32, %c0_i32_0 : i32, i32
  }
  func.func @transform_13(%arg0: i32, %arg1: memref<2x8xi32, #tpu.memory_space<smem>>) -> (i32, i32, i32) {
    %c0_i32 = arith.constant 0 : i32
    %c0_i32_0 = arith.constant 0 : i32
    %c0_i32_1 = arith.constant 0 : i32
    return %arg0, %c0_i32, %c0_i32_0 : i32, i32, i32
  }
}

</mosaic_0001>

<llo_original>
// kernel: tpu_custom_call.1
$region0: #{tpu_custom_call.1}
  #allocation0 [shape = 'u32[]', space=smem, size = 0x4, offset = 0x4, fixed_abs, tag = 'smem constant byte address 0x4 - core index']
  #allocation1 [shape = 'u32[144,128]{1,0:T(1,128)}', space=vmem, size = 0x12000, scoped, tag = 'internal scratch']
  #allocation2 [shape = 'f32[8,16]{1,0:T(8,128)}', space=vmem, size = 0x1000, scoped, tag = 'scratch operand']
  #allocation3 [shape = 'f32[8,32]{1,0:T(8,128)}', space=vmem, size = 0x1000, scoped, tag = 'scratch operand']
  #allocation4 [shape = 's32[1]{0}', space=sflag, size = 0x4, scoped, tag = 'scoped memory for tpu_custom_call.1']
  #allocation5 [shape = 'u8[1024]{0}', space=smem, size = 0x400, scoped, tag = 'prefetched SMEM operand 0']
  %s0 = inlined_call_operand.vmem [shape: s32[2,8], index: 0, kind: input, shape index: {}]
  %s1 = inlined_call_operand.vmem [shape: f32[32,1,16], index: 1, kind: input, shape index: {}]
  %s2 = inlined_call_operand.hbm [shape: f32[16,128], index: 2, kind: input, shape index: {}]
  %s3 = inlined_call_operand.vmem [shape: f32[32,128], index: 3, kind: input, shape index: {}]
  %s4 = inlined_call_operand.hbm [shape: f32[1,128], index: 4, kind: input, shape index: {}]
  %s5 = inlined_call_operand.hbm [shape: f32[16,128], index: 5, kind: input, shape index: {}]
  %s6 = inlined_call_operand.vmem [shape: f32[32,128], index: 6, kind: input, shape index: {}]
  %s7 = inlined_call_operand.vmem [shape: f32[1,128], index: 7, kind: input, shape index: {}]
  %s8 = inlined_call_operand.vmem [shape: f32[32,96], index: 8, kind: input, shape index: {}]
  %s9 = inlined_call_operand.vmem [shape: f32[1,96], index: 9, kind: input, shape index: {}]
  %s10 = inlined_call_operand.hbm [shape: f32[32,32], index: 10, kind: input, shape index: {}]
  %s11 = inlined_call_operand.vmem [shape: f32[1,32], index: 11, kind: input, shape index: {}]
  %s12 = inlined_call_operand.vmem [shape: f32[32,8], index: 12, kind: input, shape index: {}]
  %s13 = inlined_call_operand.vmem [shape: f32[1,8], index: 13, kind: input, shape index: {}]
  %s14 = inlined_call_operand.hbm [shape: f32[2,1,8], index: 14, kind: output, shape index: {}]
  %s15 = sld [smem:[#allocation0]]
  $region101: #{tpu_custom_call.1} parent=0
    _
  %s17 = ssub.s32 1, %s15
  %s18 = scalar_select 0, %s17, %s15
  %s19 = sshll.u32 %s0, 4
  %s20 = int_to_ptr.vmem [resolvable:$true] %s19
  %22 = dma.vmem_to_smem %s20, 32, [#allocation5], [#allocation4]
  %23 = dma.done [#allocation4], 32
  %24 = sfence
  $region1: #{tpu_custom_call.1} parent=0
    #allocation6 [shape = 'u8[8192]{0}', space=vmem, size = 0x2000, scoped, tag = 'input window, operand 2, single buffered']
    #allocation7 [shape = 's32[2]{0}', space=sflag, size = 0x8, scoped, tag = 'scoped memory for tpu_custom_call.1']
    #allocation8 [shape = 's32[2]{0}', space=sflag, size = 0x8, scoped, tag = 'scoped memory for tpu_custom_call.1']
    #allocation9 [shape = 'u8[512]{0}', space=vmem, size = 0x400, scoped, tag = 'input window, operand 4, single buffered']
    #allocation10 [shape = 's32[1]{0}', space=sflag, size = 0x4, scoped, tag = 'scoped memory for tpu_custom_call.1']
    #allocation11 [shape = 'u8[8192]{0}', space=vmem, size = 0x2000, scoped, tag = 'input window, operand 5, single buffered']
    #allocation12 [shape = 'u8[16384]{0}', space=vmem, size = 0x4000, scoped, tag = 'input window, operand 10, single buffered']
    #allocation13 [shape = 's32[1]{0}', space=sflag, size = 0x4, scoped, tag = 'scoped memory for tpu_custom_call.1']
    #allocation14 [shape = 'u8[1024]{0}', space=vmem, size = 0x400, scoped, tag = 'output window, operand 0']
    %25 = vsyncpa [#allocation7], 0
    %26 = vsyncpa [#allocation10], 0
    %27 = vsyncpa [#allocation13], 0
    %28 = vsyncpa [#allocation8], 0
    %s29 = scalar_lea.sflag [#allocation8], 1
    %30 = vsyncpa %s29, 0
    loop: start=0, step=1, limit=4
    $region2: #{tpu_custom_call.1} parent=1 // loop_pre_header
      _
    $region3: #{tpu_custom_call.1} parent=1 // loop_header
      %s32 = sphi 0, %s36
      %p33 = scmp.ge.s32.totalorder %s32, 4
      %s40 = sphi 0, %s40
      %s42 = sphi 0, %s40
      %s43 = sphi 0, %s42
      %s57 = sphi 0, %s43
      %s61 = sphi 0, %s61
      %s63 = sphi 0, %s61
      %s64 = sphi 0, %s63
      %s78 = sphi 0, %s64
      %s82 = sphi 0, %s82
      %s84 = sphi 0, %s82
      %s85 = sphi 0, %s84
      %s99 = sphi 0, %s85
      %s103 = sphi 0, %s103
      %s105 = sphi 0, %s103
      %s106 = sphi 0, %s105
      %s120 = sphi 0, %s106
      %s124 = sphi 0, %s124
      %s126 = sphi 0, %s124
      %s127 = sphi 0, %s126
      %s141 = sphi 0, %s127
      %s145 = sphi 0, %s145
      %s147 = sphi 0, %s145
      %s148 = sphi 0, %s147
      %s162 = sphi 0, %s148
      %s166 = sphi 0, %s166
      %s168 = sphi 0, %s166
      %s169 = sphi 0, %s168
      %s183 = sphi 0, %s169
      %s187 = sphi 0, %s187
      %s189 = sphi 0, %s187
      %s190 = sphi 0, %s189
      %s204 = sphi 0, %s190
      %s208 = sphi 0, %s208
      %s210 = sphi 0, %s208
      %s211 = sphi 0, %s210
      %s225 = sphi 0, %s211
      %s229 = sphi 0, %s229
      %s231 = sphi 0, %s229
      %s232 = sphi 0, %s231
      %s246 = sphi 0, %s232
      %s250 = sphi 0, %s250
      %s252 = sphi 0, %s250
      %s253 = sphi 0, %s252
      %s267 = sphi 0, %s253
      %s271 = sphi 0, %s271
      %s273 = sphi 0, %s271
      %s274 = sphi 0, %s273
      %s288 = sphi 0, %s274
      %s292 = sphi 0, %s292
      %s294 = sphi 0, %s292
      %s295 = sphi 0, %s294
      %s309 = sphi 0, %s295
      %s315 = sphi 0, %s317
      %s318 = sphi 0, %s315
      %s319 = sphi 0, %s318
      %s335 = sphi 0, %s319
    $region4: #{tpu_custom_call.1} parent=1 // loop_header_branch
      %35 = sbr.rel (%p33) target = $region8
    $region5: #{tpu_custom_call.1} parent=1 // loop_body
      %s37 = ssub.s32 %s32, 1
      %s38 = ssub.s32 %s32, 2
      %s39 = sadd.s32 %s32, 1
      %s41 = sadd.s32 %s40, 1
      %p44 = scmp.eq.s32.totalorder %s32, 1
      %p45 = scmp.ne.s32.totalorder %s40, %s42
      %p46 = scmp.eq.s32.totalorder %s32, 0
      %p47 = por %p45, %p46
      %p48 = scmp.ne.s32.totalorder %s40, %s42
      %p49 = scmp.eq.s32.totalorder %s37, 1
      %p50 = por %p48, %p49
      %p51 = scmp.ne.s32.totalorder %s42, %s43
      %p52 = scmp.eq.s32.totalorder %s37, 0
      %p53 = por %p51, %p52
      %p54 = scmp.ne.s32.totalorder %s42, %s43
      %p55 = scmp.eq.s32.totalorder %s38, 1
      %p56 = por %p54, %p55
      %p58 = scmp.ne.s32.totalorder %s43, %s57
      %p59 = scmp.eq.s32.totalorder %s38, 0
      %p60 = por %p58, %p59
      %s62 = sadd.s32 %s61, 1
      %p65 = scmp.eq.s32.totalorder %s32, 1
      %p66 = scmp.ne.s32.totalorder %s61, %s63
      %p67 = scmp.eq.s32.totalorder %s32, 0
      %p68 = por %p66, %p67
      %p69 = scmp.ne.s32.totalorder %s61, %s63
      %p70 = scmp.eq.s32.totalorder %s37, 1
      %p71 = por %p69, %p70
      %p72 = scmp.ne.s32.totalorder %s63, %s64
      %p73 = scmp.eq.s32.totalorder %s37, 0
      %p74 = por %p72, %p73
      %p75 = scmp.ne.s32.totalorder %s63, %s64
      %p76 = scmp.eq.s32.totalorder %s38, 1
      %p77 = por %p75, %p76
      %p79 = scmp.ne.s32.totalorder %s64, %s78
      %p80 = scmp.eq.s32.totalorder %s38, 0
      %p81 = por %p79, %p80
      %s83 = sadd.s32 %s82, 1
      %p86 = scmp.eq.s32.totalorder %s32, 1
      %p87 = scmp.ne.s32.totalorder %s82, %s84
      %p88 = scmp.eq.s32.totalorder %s32, 0
      %p89 = por %p87, %p88
      %p90 = scmp.ne.s32.totalorder %s82, %s84
      %p91 = scmp.eq.s32.totalorder %s37, 1
      %p92 = por %p90, %p91
      %p93 = scmp.ne.s32.totalorder %s84, %s85
      %p94 = scmp.eq.s32.totalorder %s37, 0
      %p95 = por %p93, %p94
      %p96 = scmp.ne.s32.totalorder %s84, %s85
      %p97 = scmp.eq.s32.totalorder %s38, 1
      %p98 = por %p96, %p97
      %p100 = scmp.ne.s32.totalorder %s85, %s99
      %p101 = scmp.eq.s32.totalorder %s38, 0
      %p102 = por %p100, %p101
      %s104 = sadd.s32 %s103, 1
      %p107 = scmp.eq.s32.totalorder %s32, 1
      %p108 = scmp.ne.s32.totalorder %s103, %s105
      %p109 = scmp.eq.s32.totalorder %s32, 0
      %p110 = por %p108, %p109
      %p111 = scmp.ne.s32.totalorder %s103, %s105
      %p112 = scmp.eq.s32.totalorder %s37, 1
      %p113 = por %p111, %p112
      %p114 = scmp.ne.s32.totalorder %s105, %s106
      %p115 = scmp.eq.s32.totalorder %s37, 0
      %p116 = por %p114, %p115
      %p117 = scmp.ne.s32.totalorder %s105, %s106
      %p118 = scmp.eq.s32.totalorder %s38, 1
      %p119 = por %p117, %p118
      %p121 = scmp.ne.s32.totalorder %s106, %s120
      %p122 = scmp.eq.s32.totalorder %s38, 0
      %p123 = por %p121, %p122
      %s125 = sadd.s32 %s124, 1
      %p128 = scmp.eq.s32.totalorder %s32, 1
      %p129 = scmp.ne.s32.totalorder %s124, %s126
      %p130 = scmp.eq.s32.totalorder %s32, 0
      %p131 = por %p129, %p130
      %p132 = scmp.ne.s32.totalorder %s124, %s126
      %p133 = scmp.eq.s32.totalorder %s37, 1
      %p134 = por %p132, %p133
      %p135 = scmp.ne.s32.totalorder %s126, %s127
      %p136 = scmp.eq.s32.totalorder %s37, 0
      %p137 = por %p135, %p136
      %p138 = scmp.ne.s32.totalorder %s126, %s127
      %p139 = scmp.eq.s32.totalorder %s38, 1
      %p140 = por %p138, %p139
      %p142 = scmp.ne.s32.totalorder %s127, %s141
      %p143 = scmp.eq.s32.totalorder %s38, 0
      %p144 = por %p142, %p143
      %s146 = sadd.s32 %s145, 1
      %p149 = scmp.eq.s32.totalorder %s32, 1
      %p150 = scmp.ne.s32.totalorder %s145, %s147
      %p151 = scmp.eq.s32.totalorder %s32, 0
      %p152 = por %p150, %p151
      %p153 = scmp.ne.s32.totalorder %s145, %s147
      %p154 = scmp.eq.s32.totalorder %s37, 1
      %p155 = por %p153, %p154
      %p156 = scmp.ne.s32.totalorder %s147, %s148
      %p157 = scmp.eq.s32.totalorder %s37, 0
      %p158 = por %p156, %p157
      %p159 = scmp.ne.s32.totalorder %s147, %s148
      %p160 = scmp.eq.s32.totalorder %s38, 1
      %p161 = por %p159, %p160
      %p163 = scmp.ne.s32.totalorder %s148, %s162
      %p164 = scmp.eq.s32.totalorder %s38, 0
      %p165 = por %p163, %p164
      %s167 = sadd.s32 %s166, 1
      %p170 = scmp.eq.s32.totalorder %s32, 1
      %p171 = scmp.ne.s32.totalorder %s166, %s168
      %p172 = scmp.eq.s32.totalorder %s32, 0
      %p173 = por %p171, %p172
      %p174 = scmp.ne.s32.totalorder %s166, %s168
      %p175 = scmp.eq.s32.totalorder %s37, 1
      %p176 = por %p174, %p175
      %p177 = scmp.ne.s32.totalorder %s168, %s169
      %p178 = scmp.eq.s32.totalorder %s37, 0
      %p179 = por %p177, %p178
      %p180 = scmp.ne.s32.totalorder %s168, %s169
      %p181 = scmp.eq.s32.totalorder %s38, 1
      %p182 = por %p180, %p181
      %p184 = scmp.ne.s32.totalorder %s169, %s183
      %p185 = scmp.eq.s32.totalorder %s38, 0
      %p186 = por %p184, %p185
      %s188 = sadd.s32 %s187, 1
      %p191 = scmp.eq.s32.totalorder %s32, 1
      %p192 = scmp.ne.s32.totalorder %s187, %s189
      %p193 = scmp.eq.s32.totalorder %s32, 0
      %p194 = por %p192, %p193
      %p195 = scmp.ne.s32.totalorder %s187, %s189
      %p196 = scmp.eq.s32.totalorder %s37, 1
      %p197 = por %p195, %p196
      %p198 = scmp.ne.s32.totalorder %s189, %s190
      %p199 = scmp.eq.s32.totalorder %s37, 0
      %p200 = por %p198, %p199
      %p201 = scmp.ne.s32.totalorder %s189, %s190
      %p202 = scmp.eq.s32.totalorder %s38, 1
      %p203 = por %p201, %p202
      %p205 = scmp.ne.s32.totalorder %s190, %s204
      %p206 = scmp.eq.s32.totalorder %s38, 0
      %p207 = por %p205, %p206
      %s209 = sadd.s32 %s208, 1
      %p212 = scmp.eq.s32.totalorder %s32, 1
      %p213 = scmp.ne.s32.totalorder %s208, %s210
      %p214 = scmp.eq.s32.totalorder %s32, 0
      %p215 = por %p213, %p214
      %p216 = scmp.ne.s32.totalorder %s208, %s210
      %p217 = scmp.eq.s32.totalorder %s37, 1
      %p218 = por %p216, %p217
      %p219 = scmp.ne.s32.totalorder %s210, %s211
      %p220 = scmp.eq.s32.totalorder %s37, 0
      %p221 = por %p219, %p220
      %p222 = scmp.ne.s32.totalorder %s210, %s211
      %p223 = scmp.eq.s32.totalorder %s38, 1
      %p224 = por %p222, %p223
      %p226 = scmp.ne.s32.totalorder %s211, %s225
      %p227 = scmp.eq.s32.totalorder %s38, 0
      %p228 = por %p226, %p227
      %s230 = sadd.s32 %s229, 1
      %p233 = scmp.eq.s32.totalorder %s32, 1
      %p234 = scmp.ne.s32.totalorder %s229, %s231
      %p235 = scmp.eq.s32.totalorder %s32, 0
      %p236 = por %p234, %p235
      %p237 = scmp.ne.s32.totalorder %s229, %s231
      %p238 = scmp.eq.s32.totalorder %s37, 1
      %p239 = por %p237, %p238
      %p240 = scmp.ne.s32.totalorder %s231, %s232
      %p241 = scmp.eq.s32.totalorder %s37, 0
      %p242 = por %p240, %p241
      %p243 = scmp.ne.s32.totalorder %s231, %s232
      %p244 = scmp.eq.s32.totalorder %s38, 1
      %p245 = por %p243, %p244
      %p247 = scmp.ne.s32.totalorder %s232, %s246
      %p248 = scmp.eq.s32.totalorder %s38, 0
      %p249 = por %p247, %p248
      %s251 = sadd.s32 %s250, 1
      %p254 = scmp.eq.s32.totalorder %s32, 1
      %p255 = scmp.ne.s32.totalorder %s250, %s252
      %p256 = scmp.eq.s32.totalorder %s32, 0
      %p257 = por %p255, %p256
      %p258 = scmp.ne.s32.totalorder %s250, %s252
      %p259 = scmp.eq.s32.totalorder %s37, 1
      %p260 = por %p258, %p259
      %p261 = scmp.ne.s32.totalorder %s252, %s253
      %p262 = scmp.eq.s32.totalorder %s37, 0
      %p263 = por %p261, %p262
      %p264 = scmp.ne.s32.totalorder %s252, %s253
      %p265 = scmp.eq.s32.totalorder %s38, 1
      %p266 = por %p264, %p265
      %p268 = scmp.ne.s32.totalorder %s253, %s267
      %p269 = scmp.eq.s32.totalorder %s38, 0
      %p270 = por %p268, %p269
      %s272 = sadd.s32 %s271, 1
      %p275 = scmp.eq.s32.totalorder %s32, 1
      %p276 = scmp.ne.s32.totalorder %s271, %s273
      %p277 = scmp.eq.s32.totalorder %s32, 0
      %p278 = por %p276, %p277
      %p279 = scmp.ne.s32.totalorder %s271, %s273
      %p280 = scmp.eq.s32.totalorder %s37, 1
      %p281 = por %p279, %p280
      %p282 = scmp.ne.s32.totalorder %s273, %s274
      %p283 = scmp.eq.s32.totalorder %s37, 0
      %p284 = por %p282, %p283
      %p285 = scmp.ne.s32.totalorder %s273, %s274
      %p286 = scmp.eq.s32.totalorder %s38, 1
      %p287 = por %p285, %p286
      %p289 = scmp.ne.s32.totalorder %s274, %s288
      %p290 = scmp.eq.s32.totalorder %s38, 0
      %p291 = por %p289, %p290
      %s293 = sadd.s32 %s292, 1
      %p296 = scmp.eq.s32.totalorder %s32, 1
      %p297 = scmp.ne.s32.totalorder %s292, %s294
      %p298 = scmp.eq.s32.totalorder %s32, 0
      %p299 = por %p297, %p298
      %p300 = scmp.ne.s32.totalorder %s292, %s294
      %p301 = scmp.eq.s32.totalorder %s37, 1
      %p302 = por %p300, %p301
      %p303 = scmp.ne.s32.totalorder %s294, %s295
      %p304 = scmp.eq.s32.totalorder %s37, 0
      %p305 = por %p303, %p304
      %p306 = scmp.ne.s32.totalorder %s294, %s295
      %p307 = scmp.eq.s32.totalorder %s38, 1
      %p308 = por %p306, %p307
      %p310 = scmp.ne.s32.totalorder %s295, %s309
      %p311 = scmp.eq.s32.totalorder %s38, 0
      %p312 = por %p310, %p311
      %s313 = ssub.s32 %s32, %s39
      %p314 = scmp.eq.s32.totalorder %s313, 0
      %s316 = sadd.s32 %s315, 1
      %s317 = scalar_select %p314, %s315, %s316
      %p320 = pneg %p314
      %p321 = scmp.eq.s32.totalorder %s32, 1
      %p322 = por %p320, %p321
      %p323 = scmp.ne.s32.totalorder %s315, %s318
      %p324 = scmp.eq.s32.totalorder %s32, 0
      %p325 = por %p323, %p324
      %p326 = scmp.ne.s32.totalorder %s315, %s318
      %p327 = scmp.eq.s32.totalorder %s37, 1
      %p328 = por %p326, %p327
      %p329 = scmp.ne.s32.totalorder %s318, %s319
      %p330 = scmp.eq.s32.totalorder %s37, 0
      %p331 = por %p329, %p330
      %p332 = scmp.ne.s32.totalorder %s318, %s319
      %p333 = scmp.eq.s32.totalorder %s38, 1
      %p334 = por %p332, %p333
      %p336 = scmp.ne.s32.totalorder %s319, %s335
      %p337 = scmp.eq.s32.totalorder %s38, 0
      %p338 = por %p336, %p337
      %p339 = scmp.le.s32.totalorder 1, %s32
      %p340 = scmp.lt.s32.totalorder %s32, 3
      %p341 = pnand %p339, %p340
      %p342 = pneg %p341
      // Predicated region
      $region9: #{tpu_custom_call.1} parent=5 // pred_check
        _
      $region10: #{tpu_custom_call.1} parent=5 // pred_check_branch
        %344 = sbr.rel (%p341) target = $region12
      $region11: #{tpu_custom_call.1} parent=5 // pred_region
        %s345 = ssub.s32 %s32, 1
        // Predicated region
        $region13: #{tpu_custom_call.1} parent=11 // pred_check
          %p346 = pneg %p53
        $region14: #{tpu_custom_call.1} parent=11 // pred_check_branch
          %348 = sbr.rel (%p346) target = $region16
        $region15: #{tpu_custom_call.1} parent=11 // pred_region
          _
        $region16: #{tpu_custom_call.1} parent=11 // pred_fallthru
          _
        // Predicated region
        $region17: #{tpu_custom_call.1} parent=11 // pred_check
          %p349 = pneg %p74
        $region18: #{tpu_custom_call.1} parent=11 // pred_check_branch
          %351 = sbr.rel (%p349) target = $region20
        $region19: #{tpu_custom_call.1} parent=11 // pred_region
          %s353 = ssub.s32 256, 256
          %354 = vsyncadd [#allocation7], %s353
          %s355 = sshll.u32 [#allocation6], 4
          %s356 = int_to_ptr.vmem [resolvable:$true] %s355
          %361 = dma.hbm_to_vmem [thread:$0]  %s2, 256, %s356, [#allocation7], 128, 128, 8
        $region20: #{tpu_custom_call.1} parent=11 // pred_fallthru
          _
        // Predicated region
        $region21: #{tpu_custom_call.1} parent=11 // pred_check
          %p362 = pneg %p95
        $region22: #{tpu_custom_call.1} parent=11 // pred_check_branch
          %364 = sbr.rel (%p362) target = $region24
        $region23: #{tpu_custom_call.1} parent=11 // pred_region
          _
        $region24: #{tpu_custom_call.1} parent=11 // pred_fallthru
          _
        // Predicated region
        $region25: #{tpu_custom_call.1} parent=11 // pred_check
          %p365 = pneg %p116
        $region26: #{tpu_custom_call.1} parent=11 // pred_check_branch
          %367 = sbr.rel (%p365) target = $region28
        $region27: #{tpu_custom_call.1} parent=11 // pred_region
          %s369 = ssub.s32 16, 16
          %370 = vsyncadd [#allocation10], %s369
          %s372 = sshll.u32 [#allocation9], 4
          %s373 = int_to_ptr.vmem [resolvable:$true] %s372
          %375 = dma.hbm_to_vmem [thread:$0]  %s4, 16, %s373, [#allocation10]
        $region28: #{tpu_custom_call.1} parent=11 // pred_fallthru
          _
        // Predicated region
        $region29: #{tpu_custom_call.1} parent=11 // pred_check
          %p376 = pneg %p137
        $region30: #{tpu_custom_call.1} parent=11 // pred_check_branch
          %378 = sbr.rel (%p376) target = $region32
        $region31: #{tpu_custom_call.1} parent=11 // pred_region
          %s380 = ssub.s32 256, 256
          %381 = vsyncadd [#allocation10], %s380
          %s382 = sshll.u32 [#allocation11], 4
          %s383 = int_to_ptr.vmem [resolvable:$true] %s382
          %388 = dma.hbm_to_vmem [thread:$0]  %s5, 256, %s383, [#allocation10], 128, 128, 8
        $region32: #{tpu_custom_call.1} parent=11 // pred_fallthru
          _
        // Predicated region
        $region33: #{tpu_custom_call.1} parent=11 // pred_check
          %p389 = pneg %p158
        $region34: #{tpu_custom_call.1} parent=11 // pred_check_branch
          %391 = sbr.rel (%p389) target = $region36
        $region35: #{tpu_custom_call.1} parent=11 // pred_region
          _
        $region36: #{tpu_custom_call.1} parent=11 // pred_fallthru
          _
        // Predicated region
        $region37: #{tpu_custom_call.1} parent=11 // pred_check
          %p392 = pneg %p179
        $region38: #{tpu_custom_call.1} parent=11 // pred_check_branch
          %394 = sbr.rel (%p392) target = $region40
        $region39: #{tpu_custom_call.1} parent=11 // pred_region
          _
        $region40: #{tpu_custom_call.1} parent=11 // pred_fallthru
          _
        // Predicated region
        $region41: #{tpu_custom_call.1} parent=11 // pred_check
          %p395 = pneg %p200
        $region42: #{tpu_custom_call.1} parent=11 // pred_check_branch
          %397 = sbr.rel (%p395) target = $region44
        $region43: #{tpu_custom_call.1} parent=11 // pred_region
          _
        $region44: #{tpu_custom_call.1} parent=11 // pred_fallthru
          _
        // Predicated region
        $region45: #{tpu_custom_call.1} parent=11 // pred_check
          %p398 = pneg %p221
        $region46: #{tpu_custom_call.1} parent=11 // pred_check_branch
          %400 = sbr.rel (%p398) target = $region48
        $region47: #{tpu_custom_call.1} parent=11 // pred_region
          _
        $region48: #{tpu_custom_call.1} parent=11 // pred_fallthru
          _
        // Predicated region
        $region49: #{tpu_custom_call.1} parent=11 // pred_check
          %p401 = pneg %p242
        $region50: #{tpu_custom_call.1} parent=11 // pred_check_branch
          %403 = sbr.rel (%p401) target = $region52
        $region51: #{tpu_custom_call.1} parent=11 // pred_region
          %s405 = ssub.s32 512, 512
          %406 = vsyncadd [#allocation13], %s405
          %s407 = sshll.u32 [#allocation12], 4
          %s408 = int_to_ptr.vmem [resolvable:$true] %s407
          %413 = dma.hbm_to_vmem [thread:$0]  %s10, 512, %s408, [#allocation13], 128, 128, 8
        $region52: #{tpu_custom_call.1} parent=11 // pred_fallthru
          _
        // Predicated region
        $region53: #{tpu_custom_call.1} parent=11 // pred_check
          %p414 = pneg %p263
        $region54: #{tpu_custom_call.1} parent=11 // pred_check_branch
          %416 = sbr.rel (%p414) target = $region56
        $region55: #{tpu_custom_call.1} parent=11 // pred_region
          _
        $region56: #{tpu_custom_call.1} parent=11 // pred_fallthru
          _
        // Predicated region
        $region57: #{tpu_custom_call.1} parent=11 // pred_check
          %p417 = pneg %p284
        $region58: #{tpu_custom_call.1} parent=11 // pred_check_branch
          %419 = sbr.rel (%p417) target = $region60
        $region59: #{tpu_custom_call.1} parent=11 // pred_region
          _
        $region60: #{tpu_custom_call.1} parent=11 // pred_fallthru
          _
        // Predicated region
        $region61: #{tpu_custom_call.1} parent=11 // pred_check
          %p420 = pneg %p305
        $region62: #{tpu_custom_call.1} parent=11 // pred_check_branch
          %422 = sbr.rel (%p420) target = $region64
        $region63: #{tpu_custom_call.1} parent=11 // pred_region
          _
        $region64: #{tpu_custom_call.1} parent=11 // pred_fallthru
          _
      $region12: #{tpu_custom_call.1} parent=5 // pred_fallthru
        _
      %p423 = scmp.lt.s32.totalorder %s32, 2
      // Predicated region
      $region65: #{tpu_custom_call.1} parent=5 // pred_check
        %p424 = pneg %p423
      $region66: #{tpu_custom_call.1} parent=5 // pred_check_branch
        %426 = sbr.rel (%p424) target = $region68
      $region67: #{tpu_custom_call.1} parent=5 // pred_region
        _
      $region68: #{tpu_custom_call.1} parent=5 // pred_fallthru
        _
      %p427 = scmp.le.s32.totalorder 1, %s32
      %p428 = scmp.lt.s32.totalorder %s32, 3
      %p429 = pnand %p427, %p428
      %p430 = pneg %p429
      // Predicated region
      $region69: #{tpu_custom_call.1} parent=5 // pred_check
        _
      $region70: #{tpu_custom_call.1} parent=5 // pred_check_branch
        %432 = sbr.rel (%p429) target = $region72
      $region71: #{tpu_custom_call.1} parent=5 // pred_region
        %s433 = ssub.s32 %s32, 1
        // Predicated region
        $region73: #{tpu_custom_call.1} parent=71 // pred_check
          %p434 = pneg %p74
        $region74: #{tpu_custom_call.1} parent=71 // pred_check_branch
          %436 = sbr.rel (%p434) target = $region76
        $region75: #{tpu_custom_call.1} parent=71 // pred_region
          %437 = dma.done [#allocation7], 256
        $region76: #{tpu_custom_call.1} parent=71 // pred_fallthru
          _
        // Predicated region
        $region77: #{tpu_custom_call.1} parent=71 // pred_check
          %p438 = pneg %p116
        $region78: #{tpu_custom_call.1} parent=71 // pred_check_branch
          %440 = sbr.rel (%p438) target = $region80
        $region79: #{tpu_custom_call.1} parent=71 // pred_region
          %441 = dma.done [#allocation10], 16
        $region80: #{tpu_custom_call.1} parent=71 // pred_fallthru
          _
        // Predicated region
        $region81: #{tpu_custom_call.1} parent=71 // pred_check
          %p442 = pneg %p137
        $region82: #{tpu_custom_call.1} parent=71 // pred_check_branch
          %444 = sbr.rel (%p442) target = $region84
        $region83: #{tpu_custom_call.1} parent=71 // pred_region
          %445 = dma.done [#allocation10], 256
        $region84: #{tpu_custom_call.1} parent=71 // pred_fallthru
          _
        // Predicated region
        $region85: #{tpu_custom_call.1} parent=71 // pred_check
          %p446 = pneg %p242
        $region86: #{tpu_custom_call.1} parent=71 // pred_check_branch
          %448 = sbr.rel (%p446) target = $region88
        $region87: #{tpu_custom_call.1} parent=71 // pred_region
          %449 = dma.done [#allocation13], 512
        $region88: #{tpu_custom_call.1} parent=71 // pred_fallthru
          _
        %p450 = pneg %p53
        %p451 = pneg %p50
        %p452 = pneg %p74
        %p453 = pneg %p71
        %p454 = pneg %p95
        %p455 = pneg %p92
        %p456 = pneg %p116
        %p457 = pneg %p113
        %p458 = pneg %p137
        %p459 = pneg %p134
        %p460 = pneg %p158
        %p461 = pneg %p155
        %p462 = pneg %p179
        %p463 = pneg %p176
        %p464 = pneg %p200
        %p465 = pneg %p197
        %p466 = pneg %p221
        %p467 = pneg %p218
        %p468 = pneg %p242
        %p469 = pneg %p239
        %p470 = pneg %p263
        %p471 = pneg %p260
        %p472 = pneg %p284
        %p473 = pneg %p281
        %p474 = pneg %p305
        %p475 = pneg %p302
        %p476 = pneg %p331
        %p477 = pneg %p328
        %s478 = sand.u32 %s318, 1
        %s479 = scalar_lea.sflag [#allocation8], %s478
        %s480 = sand.u32 %s318, 1
        %s481 = scalar_lea.vmem [#allocation14], %s480
        %s482 = smul.u32 %s37, 128
        %s483 = sld [smem:[#allocation5 + %s482]]
        %s484 = scalar_lea.vmem %s1, %s483
        %v485 = vld [vmem:[%s484] sm:$0x1]
        %vm486 = vcmask 122880
        %487 = vst.msk [vmem:[#allocation2] sm:$0x1] %vm486, %v485
        %s488 = sadd.s32 %s482, 1
        %s489 = sld [smem:[#allocation5 + %s488]]
        %s490 = scalar_lea.vmem %s1, %s489
        %v491 = vld [vmem:[%s490] sm:$0x1]
        %492 = vst.msk [vmem:[#allocation2 + $0x1] sm:$0x1] %vm486, %v491
        %s493 = sadd.s32 %s482, 2
        %s494 = sld [smem:[#allocation5 + %s493]]
        %s495 = scalar_lea.vmem %s1, %s494
        %v496 = vld [vmem:[%s495] sm:$0x1]
        %497 = vst.msk [vmem:[#allocation2 + $0x2] sm:$0x1] %vm486, %v496
        %s498 = sadd.s32 %s482, 3
        %s499 = sld [smem:[#allocation5 + %s498]]
        %s500 = scalar_lea.vmem %s1, %s499
        %v501 = vld [vmem:[%s500] sm:$0x1]
        %502 = vst.msk [vmem:[#allocation2 + $0x3] sm:$0x1] %vm486, %v501
        %s503 = sadd.s32 %s482, 4
        %s504 = sld [smem:[#allocation5 + %s503]]
        %s505 = scalar_lea.vmem %s1, %s504
        %v506 = vld [vmem:[%s505] sm:$0x1]
        %507 = vst.msk [vmem:[#allocation2 + $0x4] sm:$0x1] %vm486, %v506
        %s508 = sadd.s32 %s482, 5
        %s509 = sld [smem:[#allocation5 + %s508]]
        %s510 = scalar_lea.vmem %s1, %s509
        %v511 = vld [vmem:[%s510] sm:$0x1]
        %512 = vst.msk [vmem:[#allocation2 + $0x5] sm:$0x1] %vm486, %v511
        %s513 = sadd.s32 %s482, 6
        %s514 = sld [smem:[#allocation5 + %s513]]
        %s515 = scalar_lea.vmem %s1, %s514
        %v516 = vld [vmem:[%s515] sm:$0x1]
        %517 = vst.msk [vmem:[#allocation2 + $0x6] sm:$0x1] %vm486, %v516
        %s518 = sadd.s32 %s482, 7
        %s519 = sld [smem:[#allocation5 + %s518]]
        %s520 = scalar_lea.vmem %s1, %s519
        %v521 = vld [vmem:[%s520] sm:$0x1]
        %522 = vst.msk [vmem:[#allocation2 + $0x7] sm:$0x1] %vm486, %v521
        %v523 = vld [vmem:[#allocation2] sm:$0xff]
        %v524 = vld [vmem:[#allocation6] sm:$0xff]
        %v525 = vld [vmem:[#allocation6 + $0x8] sm:$0xff]
        %v526 = vld [vmem:[#allocation9] sm:$0x1]
        %v528 = vlaneseq
        %v529 = vshrl.u32 %v528, 7
        %v530 = vsub.s32 0, %v529
        %v531 = vrot.slane %v526, %v530
        %vm533 = vcmask 130048
        %v535 = vsel %vm533, %v523, 0
        %537 = vmatprep.subr.mxu0 0.0
        %538 = vmatpush1.msra.mxu0 %v524
        %539 = vmatprep.subr.mxu0 0.0
        %540 = vmatpush1.msra.mxu0 %v525
        %541 = vmatprep.subr.mxu0 0.0
        %542 = vmatpush1.msra.mxu0 0.0
        %543 = vmatprep.subr.mxu0 0.0
        %544 = vmatpush1.msra.mxu0 0.0
        %545 = vmatprep.subr.mxu0 0.0
        %546 = vmatpush1.msra.mxu0 0.0
        %547 = vmatprep.subr.mxu0 0.0
        %548 = vmatpush1.msra.mxu0 0.0
        %549 = vmatprep.subr.mxu0 0.0
        %550 = vmatpush1.msra.mxu0 0.0
        %551 = vmatprep.subr.mxu0 0.0
        %552 = vmatpush1.msra.mxu0 0.0
        %553 = vmatprep.subr.mxu0 0.0
        %554 = vmatpush1.msra.mxu0 0.0
        %555 = vmatprep.subr.mxu0 0.0
        %556 = vmatpush1.msra.mxu0 0.0
        %557 = vmatprep.subr.mxu0 0.0
        %558 = vmatpush1.msra.mxu0 0.0
        %559 = vmatprep.subr.mxu0 0.0
        %560 = vmatpush1.msra.mxu0 0.0
        %561 = vmatprep.subr.mxu0 0.0
        %562 = vmatpush1.msra.mxu0 0.0
        %563 = vmatprep.subr.mxu0 0.0
        %564 = vmatpush1.msra.mxu0 0.0
        %565 = vmatprep.subr.mxu0 0.0
        %566 = vmatpush1.msra.mxu0 0.0
        %567 = vmatprep.subr.mxu0 0.0
        %568 = vmatpush1.msra.mxu0 0.0
        %569 = vmatprep.subr.mxu0 0.0
        %570 = vmatpush1.msra.mxu0 0.0
        %571 = vmatprep.subr.mxu0 0.0
        %572 = vmatpush1.msra.mxu0 0.0
        %573 = vmatprep.subr.mxu0 0.0
        %574 = vmatpush1.msra.mxu0 0.0
        %575 = vmatprep.subr.mxu0 0.0
        %576 = vmatpush1.msra.mxu0 0.0
        %577 = vmatprep.subr.mxu0 0.0
        %578 = vmatpush1.msra.mxu0 0.0
        %579 = vmatprep.subr.mxu0 0.0
        %580 = vmatpush1.msra.mxu0 0.0
        %581 = vmatprep.subr.mxu0 0.0
        %582 = vmatpush1.msra.mxu0 0.0
        %583 = vmatprep.subr.mxu0 0.0
        %584 = vmatpush1.msra.mxu0 0.0
        %585 = vmatprep.subr.mxu0 0.0
        %586 = vmatpush1.msra.mxu0 0.0
        %587 = vmatprep.subr.mxu0 0.0
        %588 = vmatpush1.msra.mxu0 0.0
        %589 = vmatprep.subr.mxu0 0.0
        %590 = vmatpush1.msra.mxu0 0.0
        %591 = vmatprep.subr.mxu0 0.0
        %592 = vmatpush1.msra.mxu0 0.0
        %593 = vmatprep.subr.mxu0 0.0
        %594 = vmatpush1.msra.mxu0 0.0
        %595 = vmatprep.subr.mxu0 0.0
        %596 = vmatpush1.msra.mxu0 0.0
        %597 = vmatprep.subr.mxu0 0.0
        %598 = vmatpush1.msra.mxu0 0.0
        %599 = vmatprep.subr.mxu0 0.0
        %600 = vmatpush1.msra.mxu0 0.0
        %601 = vmatprep.mubr.f32.mxu0 0.0
        %602 = vmatmul.mubr.f32.gmra.mrb[0].mxu0 %v535
        %v603 = vpop.f32.mrb[0].mxu0
        %v604 = vadd.f32 %v531, %v603
        %v605 = vpop.f32.mrb[0].mxu0
        %606 = vdwg.mxu0
        %v607 = vld [vmem:[%s3] sm:$0xff]
        %v608 = vld [vmem:[%s3 + $0x8] sm:$0xff]
        %v609 = vld [vmem:[%s3 + $0x10] sm:$0xff]
        %v610 = vld [vmem:[%s3 + $0x18] sm:$0xff]
        %vm611 = vcmask 261120
        %v613 = vsel %vm611, 0.0, 0
        %615 = vmatprep.subr.mxu0 0.0
        %616 = vmatpush1.msra.mxu0 %v607
        %617 = vmatprep.subr.mxu0 0.0
        %618 = vmatpush1.msra.mxu0 %v608
        %619 = vmatprep.subr.mxu0 0.0
        %620 = vmatpush1.msra.mxu0 %v609
        %621 = vmatprep.subr.mxu0 0.0
        %622 = vmatpush1.msra.mxu0 %v610
        %623 = vmatprep.subr.mxu0 0.0
        %624 = vmatpush1.msra.mxu0 0.0
        %625 = vmatprep.subr.mxu0 0.0
        %626 = vmatpush1.msra.mxu0 0.0
        %627 = vmatprep.subr.mxu0 0.0
        %628 = vmatpush1.msra.mxu0 0.0
        %629 = vmatprep.subr.mxu0 0.0
        %630 = vmatpush1.msra.mxu0 0.0
        %631 = vmatprep.subr.mxu0 0.0
        %632 = vmatpush1.msra.mxu0 0.0
        %633 = vmatprep.subr.mxu0 0.0
        %634 = vmatpush1.msra.mxu0 0.0
        %635 = vmatprep.subr.mxu0 0.0
        %636 = vmatpush1.msra.mxu0 0.0
        %637 = vmatprep.subr.mxu0 0.0
        %638 = vmatpush1.msra.mxu0 0.0
        %639 = vmatprep.subr.mxu0 0.0
        %640 = vmatpush1.msra.mxu0 0.0
        %641 = vmatprep.subr.mxu0 0.0
        %642 = vmatpush1.msra.mxu0 0.0
        %643 = vmatprep.subr.mxu0 0.0
        %644 = vmatpush1.msra.mxu0 0.0
        %645 = vmatprep.subr.mxu0 0.0
        %646 = vmatpush1.msra.mxu0 0.0
        %647 = vmatprep.subr.mxu0 0.0
        %648 = vmatpush1.msra.mxu0 0.0
        %649 = vmatprep.subr.mxu0 0.0
        %650 = vmatpush1.msra.mxu0 0.0
        %651 = vmatprep.subr.mxu0 0.0
        %652 = vmatpush1.msra.mxu0 0.0
        %653 = vmatprep.subr.mxu0 0.0
        %654 = vmatpush1.msra.mxu0 0.0
        %655 = vmatprep.subr.mxu0 0.0
        %656 = vmatpush1.msra.mxu0 0.0
        %657 = vmatprep.subr.mxu0 0.0
        %658 = vmatpush1.msra.mxu0 0.0
        %659 = vmatprep.subr.mxu0 0.0
        %660 = vmatpush1.msra.mxu0 0.0
        %661 = vmatprep.subr.mxu0 0.0
        %662 = vmatpush1.msra.mxu0 0.0
        %663 = vmatprep.subr.mxu0 0.0
        %664 = vmatpush1.msra.mxu0 0.0
        %665 = vmatprep.subr.mxu0 0.0
        %666 = vmatpush1.msra.mxu0 0.0
        %667 = vmatprep.subr.mxu0 0.0
        %668 = vmatpush1.msra.mxu0 0.0
        %669 = vmatprep.subr.mxu0 0.0
        %670 = vmatpush1.msra.mxu0 0.0
        %671 = vmatprep.subr.mxu0 0.0
        %672 = vmatpush1.msra.mxu0 0.0
        %673 = vmatprep.subr.mxu0 0.0
        %674 = vmatpush1.msra.mxu0 0.0
        %675 = vmatprep.subr.mxu0 0.0
        %676 = vmatpush1.msra.mxu0 0.0
        %677 = vmatprep.subr.mxu0 0.0
        %678 = vmatpush1.msra.mxu0 0.0
        %679 = vmatprep.mubr.f32.mxu0 0.0
        %680 = vmatmul.mubr.f32.gmra.mrb[0].mxu0 %v613
        %v681 = vpop.f32.mrb[0].mxu0
        %v682 = vadd.f32 0.0, %v681
        %v683 = vpop.f32.mrb[0].mxu0
        %684 = vdwg.mxu0
        %v685 = vadd.f32 %v604, %v682
        %v686 = vxor.u32 %v685, 2147483648
        %v687 = vmul.f32 %v686, 1.442695
        %v688 = vpow.pop %v687
        %v689 = vadd.f32 %v688, 1.0
        %v690 = vrcp.pop %v689
        %v691 = vmul.f32 1.0, %v690
        %v692 = vtanh.pop %v685
        %v693 = vmul.f32 %v691, 0.0
        %695 = vrot.lane.b32.xlu0 %v692, 64
        %v696 = vpop.permute.xlu0 %695
        %v698 = vmul.f32 %v691, %v696
        %700 = vrot.lane.b32.xlu0 %v698, 32
        %v701 = vpop.permute.xlu0 %700
        %v703 = vadd.f32 %v693, %v701
        %v704 = vtanh.pop %v703
        %706 = vrot.lane.b32.xlu0 %v704, 64
        %v707 = vpop.permute.xlu0 %706
        %v709 = vmul.f32 %v691, %v707
        %711 = vrot.lane.b32.xlu0 %v709, 32
        %v712 = vpop.permute.xlu0 %711
        %v713 = vsel %vm611, %v712, 0
        %715 = vmatprep.subr.mxu0 0.0
        %716 = vmatpush1.msra.mxu0 %v607
        %717 = vmatprep.subr.mxu0 0.0
        %718 = vmatpush1.msra.mxu0 %v608
        %719 = vmatprep.subr.mxu0 0.0
        %720 = vmatpush1.msra.mxu0 %v609
        %721 = vmatprep.subr.mxu0 0.0
        %722 = vmatpush1.msra.mxu0 %v610
        %723 = vmatprep.subr.mxu0 0.0
        %724 = vmatpush1.msra.mxu0 0.0
        %725 = vmatprep.subr.mxu0 0.0
        %726 = vmatpush1.msra.mxu0 0.0
        %727 = vmatprep.subr.mxu0 0.0
        %728 = vmatpush1.msra.mxu0 0.0
        %729 = vmatprep.subr.mxu0 0.0
        %730 = vmatpush1.msra.mxu0 0.0
        %731 = vmatprep.subr.mxu0 0.0
        %732 = vmatpush1.msra.mxu0 0.0
        %733 = vmatprep.subr.mxu0 0.0
        %734 = vmatpush1.msra.mxu0 0.0
        %735 = vmatprep.subr.mxu0 0.0
        %736 = vmatpush1.msra.mxu0 0.0
        %737 = vmatprep.subr.mxu0 0.0
        %738 = vmatpush1.msra.mxu0 0.0
        %739 = vmatprep.subr.mxu0 0.0
        %740 = vmatpush1.msra.mxu0 0.0
        %741 = vmatprep.subr.mxu0 0.0
        %742 = vmatpush1.msra.mxu0 0.0
        %743 = vmatprep.subr.mxu0 0.0
        %744 = vmatpush1.msra.mxu0 0.0
        %745 = vmatprep.subr.mxu0 0.0
        %746 = vmatpush1.msra.mxu0 0.0
        %747 = vmatprep.subr.mxu0 0.0
        %748 = vmatpush1.msra.mxu0 0.0
        %749 = vmatprep.subr.mxu0 0.0
        %750 = vmatpush1.msra.mxu0 0.0
        %751 = vmatprep.subr.mxu0 0.0
        %752 = vmatpush1.msra.mxu0 0.0
        %753 = vmatprep.subr.mxu0 0.0
        %754 = vmatpush1.msra.mxu0 0.0
        %755 = vmatprep.subr.mxu0 0.0
        %756 = vmatpush1.msra.mxu0 0.0
        %757 = vmatprep.subr.mxu0 0.0
        %758 = vmatpush1.msra.mxu0 0.0
        %759 = vmatprep.subr.mxu0 0.0
        %760 = vmatpush1.msra.mxu0 0.0
        %761 = vmatprep.subr.mxu0 0.0
        %762 = vmatpush1.msra.mxu0 0.0
        %763 = vmatprep.subr.mxu0 0.0
        %764 = vmatpush1.msra.mxu0 0.0
        %765 = vmatprep.subr.mxu0 0.0
        %766 = vmatpush1.msra.mxu0 0.0
        %767 = vmatprep.subr.mxu0 0.0
        %768 = vmatpush1.msra.mxu0 0.0
        %769 = vmatprep.subr.mxu0 0.0
        %770 = vmatpush1.msra.mxu0 0.0
        %771 = vmatprep.subr.mxu0 0.0
        %772 = vmatpush1.msra.mxu0 0.0
        %773 = vmatprep.subr.mxu0 0.0
        %774 = vmatpush1.msra.mxu0 0.0
        %775 = vmatprep.subr.mxu0 0.0
        %776 = vmatpush1.msra.mxu0 0.0
        %777 = vmatprep.subr.mxu0 0.0
        %778 = vmatpush1.msra.mxu0 0.0
        %779 = vmatprep.mubr.f32.mxu0 0.0
        %780 = vmatmul.mubr.f32.gmra.mrb[0].mxu0 %v713
        %v781 = vpop.f32.mrb[0].mxu0
        %v782 = vadd.f32 0.0, %v781
        %v783 = vpop.f32.mrb[0].mxu0
        %784 = vdwg.mxu0
        %v786 = vrot.slane %v782, 7
        %v788 = vadd.f32 %v604, %v786
        %v789 = vxor.u32 %v788, 2147483648
        %v790 = vmul.f32 %v789, 1.442695
        %v791 = vpow.pop %v790
        %v792 = vadd.f32 %v791, 1.0
        %v793 = vrcp.pop %v792
        %v794 = vmul.f32 1.0, %v793
        %v795 = vtanh.pop %v788
        %v797 = vrot.slane %v703, 7
        %v799 = vmul.f32 %v794, %v797
        %801 = vrot.lane.b32.xlu0 %v795, 64
        %v802 = vpop.permute.xlu0 %801
        %v804 = vmul.f32 %v794, %v802
        %806 = vrot.lane.b32.xlu0 %v804, 32
        %v807 = vpop.permute.xlu0 %806
        %v809 = vadd.f32 %v799, %v807
        %v810 = vtanh.pop %v809
        %812 = vrot.lane.b32.xlu0 %v810, 64
        %v813 = vpop.permute.xlu0 %812
        %v815 = vmul.f32 %v794, %v813
        %v817 = vrot.slane %v815, 1
        %818 = vrot.lane.b32.xlu0 %v817, 32
        %v819 = vpop.permute.xlu0 %818
        %v820 = vsel %vm611, %v819, 0
        %822 = vmatprep.subr.mxu0 0.0
        %823 = vmatpush1.msra.mxu0 %v607
        %824 = vmatprep.subr.mxu0 0.0
        %825 = vmatpush1.msra.mxu0 %v608
        %826 = vmatprep.subr.mxu0 0.0
        %827 = vmatpush1.msra.mxu0 %v609
        %828 = vmatprep.subr.mxu0 0.0
        %829 = vmatpush1.msra.mxu0 %v610
        %830 = vmatprep.subr.mxu0 0.0
        %831 = vmatpush1.msra.mxu0 0.0
        %832 = vmatprep.subr.mxu0 0.0
        %833 = vmatpush1.msra.mxu0 0.0
        %834 = vmatprep.subr.mxu0 0.0
        %835 = vmatpush1.msra.mxu0 0.0
        %836 = vmatprep.subr.mxu0 0.0
        %837 = vmatpush1.msra.mxu0 0.0
        %838 = vmatprep.subr.mxu0 0.0
        %839 = vmatpush1.msra.mxu0 0.0
        %840 = vmatprep.subr.mxu0 0.0
        %841 = vmatpush1.msra.mxu0 0.0
        %842 = vmatprep.subr.mxu0 0.0
        %843 = vmatpush1.msra.mxu0 0.0
        %844 = vmatprep.subr.mxu0 0.0
        %845 = vmatpush1.msra.mxu0 0.0
        %846 = vmatprep.subr.mxu0 0.0
        %847 = vmatpush1.msra.mxu0 0.0
        %848 = vmatprep.subr.mxu0 0.0
        %849 = vmatpush1.msra.mxu0 0.0
        %850 = vmatprep.subr.mxu0 0.0
        %851 = vmatpush1.msra.mxu0 0.0
        %852 = vmatprep.subr.mxu0 0.0
        %853 = vmatpush1.msra.mxu0 0.0
        %854 = vmatprep.subr.mxu0 0.0
        %855 = vmatpush1.msra.mxu0 0.0
        %856 = vmatprep.subr.mxu0 0.0
        %857 = vmatpush1.msra.mxu0 0.0
        %858 = vmatprep.subr.mxu0 0.0
        %859 = vmatpush1.msra.mxu0 0.0
        %860 = vmatprep.subr.mxu0 0.0
        %861 = vmatpush1.msra.mxu0 0.0
        %862 = vmatprep.subr.mxu0 0.0
        %863 = vmatpush1.msra.mxu0 0.0
        %864 = vmatprep.subr.mxu0 0.0
        %865 = vmatpush1.msra.mxu0 0.0
        %866 = vmatprep.subr.mxu0 0.0
        %867 = vmatpush1.msra.mxu0 0.0
        %868 = vmatprep.subr.mxu0 0.0
        %869 = vmatpush1.msra.mxu0 0.0
        %870 = vmatprep.subr.mxu0 0.0
        %871 = vmatpush1.msra.mxu0 0.0
        %872 = vmatprep.subr.mxu0 0.0
        %873 = vmatpush1.msra.mxu0 0.0
        %874 = vmatprep.subr.mxu0 0.0
        %875 = vmatpush1.msra.mxu0 0.0
        %876 = vmatprep.subr.mxu0 0.0
        %877 = vmatpush1.msra.mxu0 0.0
        %878 = vmatprep.subr.mxu0 0.0
        %879 = vmatpush1.msra.mxu0 0.0
        %880 = vmatprep.subr.mxu0 0.0
        %881 = vmatpush1.msra.mxu0 0.0
        %882 = vmatprep.subr.mxu0 0.0
        %883 = vmatpush1.msra.mxu0 0.0
        %884 = vmatprep.subr.mxu0 0.0
        %885 = vmatpush1.msra.mxu0 0.0
        %886 = vmatprep.mubr.f32.mxu0 0.0
        %887 = vmatmul.mubr.f32.gmra.mrb[0].mxu0 %v820
        %v888 = vpop.f32.mrb[0].mxu0
        %v889 = vadd.f32 0.0, %v888
        %v890 = vpop.f32.mrb[0].mxu0
        %891 = vdwg.mxu0
        %v893 = vrot.slane %v889, 6
        %v895 = vadd.f32 %v604, %v893
        %v896 = vxor.u32 %v895, 2147483648
        %v897 = vmul.f32 %v896, 1.442695
        %v898 = vpow.pop %v897
        %v899 = vadd.f32 %v898, 1.0
        %v900 = vrcp.pop %v899
        %v901 = vmul.f32 1.0, %v900
        %v902 = vtanh.pop %v895
        %v904 = vrot.slane %v809, 7
        %v906 = vmul.f32 %v901, %v904
        %908 = vrot.lane.b32.xlu0 %v902, 64
        %v909 = vpop.permute.xlu0 %908
        %v911 = vmul.f32 %v901, %v909
        %913 = vrot.lane.b32.xlu0 %v911, 32
        %v914 = vpop.permute.xlu0 %913
        %v916 = vadd.f32 %v906, %v914
        %v917 = vtanh.pop %v916
        %919 = vrot.lane.b32.xlu0 %v917, 64
        %v920 = vpop.permute.xlu0 %919
        %v922 = vmul.f32 %v901, %v920
        %v924 = vrot.slane %v922, 2
        %925 = vrot.lane.b32.xlu0 %v924, 32
        %v926 = vpop.permute.xlu0 %925
        %v927 = vsel %vm611, %v926, 0
        %929 = vmatprep.subr.mxu0 0.0
        %930 = vmatpush1.msra.mxu0 %v607
        %931 = vmatprep.subr.mxu0 0.0
        %932 = vmatpush1.msra.mxu0 %v608
        %933 = vmatprep.subr.mxu0 0.0
        %934 = vmatpush1.msra.mxu0 %v609
        %935 = vmatprep.subr.mxu0 0.0
        %936 = vmatpush1.msra.mxu0 %v610
        %937 = vmatprep.subr.mxu0 0.0
        %938 = vmatpush1.msra.mxu0 0.0
        %939 = vmatprep.subr.mxu0 0.0
        %940 = vmatpush1.msra.mxu0 0.0
        %941 = vmatprep.subr.mxu0 0.0
        %942 = vmatpush1.msra.mxu0 0.0
        %943 = vmatprep.subr.mxu0 0.0
        %944 = vmatpush1.msra.mxu0 0.0
        %945 = vmatprep.subr.mxu0 0.0
        %946 = vmatpush1.msra.mxu0 0.0
        %947 = vmatprep.subr.mxu0 0.0
        %948 = vmatpush1.msra.mxu0 0.0
        %949 = vmatprep.subr.mxu0 0.0
        %950 = vmatpush1.msra.mxu0 0.0
        %951 = vmatprep.subr.mxu0 0.0
        %952 = vmatpush1.msra.mxu0 0.0
        %953 = vmatprep.subr.mxu0 0.0
        %954 = vmatpush1.msra.mxu0 0.0
        %955 = vmatprep.subr.mxu0 0.0
        %956 = vmatpush1.msra.mxu0 0.0
        %957 = vmatprep.subr.mxu0 0.0
        %958 = vmatpush1.msra.mxu0 0.0
        %959 = vmatprep.subr.mxu0 0.0
        %960 = vmatpush1.msra.mxu0 0.0
        %961 = vmatprep.subr.mxu0 0.0
        %962 = vmatpush1.msra.mxu0 0.0
        %963 = vmatprep.subr.mxu0 0.0
        %964 = vmatpush1.msra.mxu0 0.0
        %965 = vmatprep.subr.mxu0 0.0
        %966 = vmatpush1.msra.mxu0 0.0
        %967 = vmatprep.subr.mxu0 0.0
        %968 = vmatpush1.msra.mxu0 0.0
        %969 = vmatprep.subr.mxu0 0.0
        %970 = vmatpush1.msra.mxu0 0.0
        %971 = vmatprep.subr.mxu0 0.0
        %972 = vmatpush1.msra.mxu0 0.0
        %973 = vmatprep.subr.mxu0 0.0
        %974 = vmatpush1.msra.mxu0 0.0
        %975 = vmatprep.subr.mxu0 0.0
        %976 = vmatpush1.msra.mxu0 0.0
        %977 = vmatprep.subr.mxu0 0.0
        %978 = vmatpush1.msra.mxu0 0.0
        %979 = vmatprep.subr.mxu0 0.0
        %980 = vmatpush1.msra.mxu0 0.0
        %981 = vmatprep.subr.mxu0 0.0
        %982 = vmatpush1.msra.mxu0 0.0
        %983 = vmatprep.subr.mxu0 0.0
        %984 = vmatpush1.msra.mxu0 0.0
        %985 = vmatprep.subr.mxu0 0.0
        %986 = vmatpush1.msra.mxu0 0.0
        %987 = vmatprep.subr.mxu0 0.0
        %988 = vmatpush1.msra.mxu0 0.0
        %989 = vmatprep.subr.mxu0 0.0
        %990 = vmatpush1.msra.mxu0 0.0
        %991 = vmatprep.subr.mxu0 0.0
        %992 = vmatpush1.msra.mxu0 0.0
        %993 = vmatprep.mubr.f32.mxu0 0.0
        %994 = vmatmul.mubr.f32.gmra.mrb[0].mxu0 %v927
        %v995 = vpop.f32.mrb[0].mxu0
        %v996 = vadd.f32 0.0, %v995
        %v997 = vpop.f32.mrb[0].mxu0
        %998 = vdwg.mxu0
        %v1000 = vrot.slane %v996, 5
        %v1002 = vadd.f32 %v604, %v1000
        %v1003 = vxor.u32 %v1002, 2147483648
        %v1004 = vmul.f32 %v1003, 1.442695
        %v1005 = vpow.pop %v1004
        %v1006 = vadd.f32 %v1005, 1.0
        %v1007 = vrcp.pop %v1006
        %v1008 = vmul.f32 1.0, %v1007
        %v1009 = vtanh.pop %v1002
        %v1011 = vrot.slane %v916, 7
        %v1013 = vmul.f32 %v1008, %v1011
        %1015 = vrot.lane.b32.xlu0 %v1009, 64
        %v1016 = vpop.permute.xlu0 %1015
        %v1018 = vmul.f32 %v1008, %v1016
        %1020 = vrot.lane.b32.xlu0 %v1018, 32
        %v1021 = vpop.permute.xlu0 %1020
        %v1023 = vadd.f32 %v1013, %v1021
        %v1024 = vtanh.pop %v1023
        %1026 = vrot.lane.b32.xlu0 %v1024, 64
        %v1027 = vpop.permute.xlu0 %1026
        %v1029 = vmul.f32 %v1008, %v1027
        %v1031 = vrot.slane %v1029, 3
        %1032 = vrot.lane.b32.xlu0 %v1031, 32
        %v1033 = vpop.permute.xlu0 %1032
        %v1034 = vsel %vm611, %v1033, 0
        %1036 = vmatprep.subr.mxu0 0.0
        %1037 = vmatpush1.msra.mxu0 %v607
        %1038 = vmatprep.subr.mxu0 0.0
        %1039 = vmatpush1.msra.mxu0 %v608
        %1040 = vmatprep.subr.mxu0 0.0
        %1041 = vmatpush1.msra.mxu0 %v609
        %1042 = vmatprep.subr.mxu0 0.0
        %1043 = vmatpush1.msra.mxu0 %v610
        %1044 = vmatprep.subr.mxu0 0.0
        %1045 = vmatpush1.msra.mxu0 0.0
        %1046 = vmatprep.subr.mxu0 0.0
        %1047 = vmatpush1.msra.mxu0 0.0
        %1048 = vmatprep.subr.mxu0 0.0
        %1049 = vmatpush1.msra.mxu0 0.0
        %1050 = vmatprep.subr.mxu0 0.0
        %1051 = vmatpush1.msra.mxu0 0.0
        %1052 = vmatprep.subr.mxu0 0.0
        %1053 = vmatpush1.msra.mxu0 0.0
        %1054 = vmatprep.subr.mxu0 0.0
        %1055 = vmatpush1.msra.mxu0 0.0
        %1056 = vmatprep.subr.mxu0 0.0
        %1057 = vmatpush1.msra.mxu0 0.0
        %1058 = vmatprep.subr.mxu0 0.0
        %1059 = vmatpush1.msra.mxu0 0.0
        %1060 = vmatprep.subr.mxu0 0.0
        %1061 = vmatpush1.msra.mxu0 0.0
        %1062 = vmatprep.subr.mxu0 0.0
        %1063 = vmatpush1.msra.mxu0 0.0
        %1064 = vmatprep.subr.mxu0 0.0
        %1065 = vmatpush1.msra.mxu0 0.0
        %1066 = vmatprep.subr.mxu0 0.0
        %1067 = vmatpush1.msra.mxu0 0.0
        %1068 = vmatprep.subr.mxu0 0.0
        %1069 = vmatpush1.msra.mxu0 0.0
        %1070 = vmatprep.subr.mxu0 0.0
        %1071 = vmatpush1.msra.mxu0 0.0
        %1072 = vmatprep.subr.mxu0 0.0
        %1073 = vmatpush1.msra.mxu0 0.0
        %1074 = vmatprep.subr.mxu0 0.0
        %1075 = vmatpush1.msra.mxu0 0.0
        %1076 = vmatprep.subr.mxu0 0.0
        %1077 = vmatpush1.msra.mxu0 0.0
        %1078 = vmatprep.subr.mxu0 0.0
        %1079 = vmatpush1.msra.mxu0 0.0
        %1080 = vmatprep.subr.mxu0 0.0
        %1081 = vmatpush1.msra.mxu0 0.0
        %1082 = vmatprep.subr.mxu0 0.0
        %1083 = vmatpush1.msra.mxu0 0.0
        %1084 = vmatprep.subr.mxu0 0.0
        %1085 = vmatpush1.msra.mxu0 0.0
        %1086 = vmatprep.subr.mxu0 0.0
        %1087 = vmatpush1.msra.mxu0 0.0
        %1088 = vmatprep.subr.mxu0 0.0
        %1089 = vmatpush1.msra.mxu0 0.0
        %1090 = vmatprep.subr.mxu0 0.0
        %1091 = vmatpush1.msra.mxu0 0.0
        %1092 = vmatprep.subr.mxu0 0.0
        %1093 = vmatpush1.msra.mxu0 0.0
        %1094 = vmatprep.subr.mxu0 0.0
        %1095 = vmatpush1.msra.mxu0 0.0
        %1096 = vmatprep.subr.mxu0 0.0
        %1097 = vmatpush1.msra.mxu0 0.0
        %1098 = vmatprep.subr.mxu0 0.0
        %1099 = vmatpush1.msra.mxu0 0.0
        %1100 = vmatprep.mubr.f32.mxu0 0.0
        %1101 = vmatmul.mubr.f32.gmra.mrb[0].mxu0 %v1034
        %v1102 = vpop.f32.mrb[0].mxu0
        %v1103 = vadd.f32 0.0, %v1102
        %v1104 = vpop.f32.mrb[0].mxu0
        %1105 = vdwg.mxu0
        %v1107 = vrot.slane %v1103, 4
        %v1109 = vadd.f32 %v604, %v1107
        %v1110 = vxor.u32 %v1109, 2147483648
        %v1111 = vmul.f32 %v1110, 1.442695
        %v1112 = vpow.pop %v1111
        %v1113 = vadd.f32 %v1112, 1.0
        %v1114 = vrcp.pop %v1113
        %v1115 = vmul.f32 1.0, %v1114
        %v1116 = vtanh.pop %v1109
        %v1118 = vrot.slane %v1023, 7
        %v1120 = vmul.f32 %v1115, %v1118
        %1122 = vrot.lane.b32.xlu0 %v1116, 64
        %v1123 = vpop.permute.xlu0 %1122
        %v1125 = vmul.f32 %v1115, %v1123
        %1127 = vrot.lane.b32.xlu0 %v1125, 32
        %v1128 = vpop.permute.xlu0 %1127
        %v1130 = vadd.f32 %v1120, %v1128
        %v1131 = vtanh.pop %v1130
        %1133 = vrot.lane.b32.xlu0 %v1131, 64
        %v1134 = vpop.permute.xlu0 %1133
        %v1136 = vmul.f32 %v1115, %v1134
        %v1138 = vrot.slane %v1136, 4
        %1139 = vrot.lane.b32.xlu0 %v1138, 32
        %v1140 = vpop.permute.xlu0 %1139
        %v1141 = vsel %vm611, %v1140, 0
        %1143 = vmatprep.subr.mxu0 0.0
        %1144 = vmatpush1.msra.mxu0 %v607
        %1145 = vmatprep.subr.mxu0 0.0
        %1146 = vmatpush1.msra.mxu0 %v608
        %1147 = vmatprep.subr.mxu0 0.0
        %1148 = vmatpush1.msra.mxu0 %v609
        %1149 = vmatprep.subr.mxu0 0.0
        %1150 = vmatpush1.msra.mxu0 %v610
        %1151 = vmatprep.subr.mxu0 0.0
        %1152 = vmatpush1.msra.mxu0 0.0
        %1153 = vmatprep.subr.mxu0 0.0
        %1154 = vmatpush1.msra.mxu0 0.0
        %1155 = vmatprep.subr.mxu0 0.0
        %1156 = vmatpush1.msra.mxu0 0.0
        %1157 = vmatprep.subr.mxu0 0.0
        %1158 = vmatpush1.msra.mxu0 0.0
        %1159 = vmatprep.subr.mxu0 0.0
        %1160 = vmatpush1.msra.mxu0 0.0
        %1161 = vmatprep.subr.mxu0 0.0
        %1162 = vmatpush1.msra.mxu0 0.0
        %1163 = vmatprep.subr.mxu0 0.0
        %1164 = vmatpush1.msra.mxu0 0.0
        %1165 = vmatprep.subr.mxu0 0.0
        %1166 = vmatpush1.msra.mxu0 0.0
        %1167 = vmatprep.subr.mxu0 0.0
        %1168 = vmatpush1.msra.mxu0 0.0
        %1169 = vmatprep.subr.mxu0 0.0
        %1170 = vmatpush1.msra.mxu0 0.0
        %1171 = vmatprep.subr.mxu0 0.0
        %1172 = vmatpush1.msra.mxu0 0.0
        %1173 = vmatprep.subr.mxu0 0.0
        %1174 = vmatpush1.msra.mxu0 0.0
        %1175 = vmatprep.subr.mxu0 0.0
        %1176 = vmatpush1.msra.mxu0 0.0
        %1177 = vmatprep.subr.mxu0 0.0
        %1178 = vmatpush1.msra.mxu0 0.0
        %1179 = vmatprep.subr.mxu0 0.0
        %1180 = vmatpush1.msra.mxu0 0.0
        %1181 = vmatprep.subr.mxu0 0.0
        %1182 = vmatpush1.msra.mxu0 0.0
        %1183 = vmatprep.subr.mxu0 0.0
        %1184 = vmatpush1.msra.mxu0 0.0
        %1185 = vmatprep.subr.mxu0 0.0
        %1186 = vmatpush1.msra.mxu0 0.0
        %1187 = vmatprep.subr.mxu0 0.0
        %1188 = vmatpush1.msra.mxu0 0.0
        %1189 = vmatprep.subr.mxu0 0.0
        %1190 = vmatpush1.msra.mxu0 0.0
        %1191 = vmatprep.subr.mxu0 0.0
        %1192 = vmatpush1.msra.mxu0 0.0
        %1193 = vmatprep.subr.mxu0 0.0
        %1194 = vmatpush1.msra.mxu0 0.0
        %1195 = vmatprep.subr.mxu0 0.0
        %1196 = vmatpush1.msra.mxu0 0.0
        %1197 = vmatprep.subr.mxu0 0.0
        %1198 = vmatpush1.msra.mxu0 0.0
        %1199 = vmatprep.subr.mxu0 0.0
        %1200 = vmatpush1.msra.mxu0 0.0
        %1201 = vmatprep.subr.mxu0 0.0
        %1202 = vmatpush1.msra.mxu0 0.0
        %1203 = vmatprep.subr.mxu0 0.0
        %1204 = vmatpush1.msra.mxu0 0.0
        %1205 = vmatprep.subr.mxu0 0.0
        %1206 = vmatpush1.msra.mxu0 0.0
        %1207 = vmatprep.mubr.f32.mxu0 0.0
        %1208 = vmatmul.mubr.f32.gmra.mrb[0].mxu0 %v1141
        %v1209 = vpop.f32.mrb[0].mxu0
        %v1210 = vadd.f32 0.0, %v1209
        %v1211 = vpop.f32.mrb[0].mxu0
        %1212 = vdwg.mxu0
        %v1214 = vrot.slane %v1210, 3
        %v1216 = vadd.f32 %v604, %v1214
        %v1217 = vxor.u32 %v1216, 2147483648
        %v1218 = vmul.f32 %v1217, 1.442695
        %v1219 = vpow.pop %v1218
        %v1220 = vadd.f32 %v1219, 1.0
        %v1221 = vrcp.pop %v1220
        %v1222 = vmul.f32 1.0, %v1221
        %v1223 = vtanh.pop %v1216
        %v1225 = vrot.slane %v1130, 7
        %v1227 = vmul.f32 %v1222, %v1225
        %1229 = vrot.lane.b32.xlu0 %v1223, 64
        %v1230 = vpop.permute.xlu0 %1229
        %v1232 = vmul.f32 %v1222, %v1230
        %1234 = vrot.lane.b32.xlu0 %v1232, 32
        %v1235 = vpop.permute.xlu0 %1234
        %v1237 = vadd.f32 %v1227, %v1235
        %v1238 = vtanh.pop %v1237
        %1240 = vrot.lane.b32.xlu0 %v1238, 64
        %v1241 = vpop.permute.xlu0 %1240
        %v1243 = vmul.f32 %v1222, %v1241
        %v1245 = vrot.slane %v1243, 5
        %1246 = vrot.lane.b32.xlu0 %v1245, 32
        %v1247 = vpop.permute.xlu0 %1246
        %v1248 = vsel %vm611, %v1247, 0
        %1250 = vmatprep.subr.mxu0 0.0
        %1251 = vmatpush1.msra.mxu0 %v607
        %1252 = vmatprep.subr.mxu0 0.0
        %1253 = vmatpush1.msra.mxu0 %v608
        %1254 = vmatprep.subr.mxu0 0.0
        %1255 = vmatpush1.msra.mxu0 %v609
        %1256 = vmatprep.subr.mxu0 0.0
        %1257 = vmatpush1.msra.mxu0 %v610
        %1258 = vmatprep.subr.mxu0 0.0
        %1259 = vmatpush1.msra.mxu0 0.0
        %1260 = vmatprep.subr.mxu0 0.0
        %1261 = vmatpush1.msra.mxu0 0.0
        %1262 = vmatprep.subr.mxu0 0.0
        %1263 = vmatpush1.msra.mxu0 0.0
        %1264 = vmatprep.subr.mxu0 0.0
        %1265 = vmatpush1.msra.mxu0 0.0
        %1266 = vmatprep.subr.mxu0 0.0
        %1267 = vmatpush1.msra.mxu0 0.0
        %1268 = vmatprep.subr.mxu0 0.0
        %1269 = vmatpush1.msra.mxu0 0.0
        %1270 = vmatprep.subr.mxu0 0.0
        %1271 = vmatpush1.msra.mxu0 0.0
        %1272 = vmatprep.subr.mxu0 0.0
        %1273 = vmatpush1.msra.mxu0 0.0
        %1274 = vmatprep.subr.mxu0 0.0
        %1275 = vmatpush1.msra.mxu0 0.0
        %1276 = vmatprep.subr.mxu0 0.0
        %1277 = vmatpush1.msra.mxu0 0.0
        %1278 = vmatprep.subr.mxu0 0.0
        %1279 = vmatpush1.msra.mxu0 0.0
        %1280 = vmatprep.subr.mxu0 0.0
        %1281 = vmatpush1.msra.mxu0 0.0
        %1282 = vmatprep.subr.mxu0 0.0
        %1283 = vmatpush1.msra.mxu0 0.0
        %1284 = vmatprep.subr.mxu0 0.0
        %1285 = vmatpush1.msra.mxu0 0.0
        %1286 = vmatprep.subr.mxu0 0.0
        %1287 = vmatpush1.msra.mxu0 0.0
        %1288 = vmatprep.subr.mxu0 0.0
        %1289 = vmatpush1.msra.mxu0 0.0
        %1290 = vmatprep.subr.mxu0 0.0
        %1291 = vmatpush1.msra.mxu0 0.0
        %1292 = vmatprep.subr.mxu0 0.0
        %1293 = vmatpush1.msra.mxu0 0.0
        %1294 = vmatprep.subr.mxu0 0.0
        %1295 = vmatpush1.msra.mxu0 0.0
        %1296 = vmatprep.subr.mxu0 0.0
        %1297 = vmatpush1.msra.mxu0 0.0
        %1298 = vmatprep.subr.mxu0 0.0
        %1299 = vmatpush1.msra.mxu0 0.0
        %1300 = vmatprep.subr.mxu0 0.0
        %1301 = vmatpush1.msra.mxu0 0.0
        %1302 = vmatprep.subr.mxu0 0.0
        %1303 = vmatpush1.msra.mxu0 0.0
        %1304 = vmatprep.subr.mxu0 0.0
        %1305 = vmatpush1.msra.mxu0 0.0
        %1306 = vmatprep.subr.mxu0 0.0
        %1307 = vmatpush1.msra.mxu0 0.0
        %1308 = vmatprep.subr.mxu0 0.0
        %1309 = vmatpush1.msra.mxu0 0.0
        %1310 = vmatprep.subr.mxu0 0.0
        %1311 = vmatpush1.msra.mxu0 0.0
        %1312 = vmatprep.subr.mxu0 0.0
        %1313 = vmatpush1.msra.mxu0 0.0
        %1314 = vmatprep.mubr.f32.mxu0 0.0
        %1315 = vmatmul.mubr.f32.gmra.mrb[0].mxu0 %v1248
        %v1316 = vpop.f32.mrb[0].mxu0
        %v1317 = vadd.f32 0.0, %v1316
        %v1318 = vpop.f32.mrb[0].mxu0
        %1319 = vdwg.mxu0
        %v1321 = vrot.slane %v1317, 2
        %v1323 = vadd.f32 %v604, %v1321
        %v1324 = vxor.u32 %v1323, 2147483648
        %v1325 = vmul.f32 %v1324, 1.442695
        %v1326 = vpow.pop %v1325
        %v1327 = vadd.f32 %v1326, 1.0
        %v1328 = vrcp.pop %v1327
        %v1329 = vmul.f32 1.0, %v1328
        %v1330 = vtanh.pop %v1323
        %v1332 = vrot.slane %v1237, 7
        %v1334 = vmul.f32 %v1329, %v1332
        %1336 = vrot.lane.b32.xlu0 %v1330, 64
        %v1337 = vpop.permute.xlu0 %1336
        %v1339 = vmul.f32 %v1329, %v1337
        %1341 = vrot.lane.b32.xlu0 %v1339, 32
        %v1342 = vpop.permute.xlu0 %1341
        %v1344 = vadd.f32 %v1334, %v1342
        %v1345 = vtanh.pop %v1344
        %1347 = vrot.lane.b32.xlu0 %v1345, 64
        %v1348 = vpop.permute.xlu0 %1347
        %v1350 = vmul.f32 %v1329, %v1348
        %v1352 = vrot.slane %v1350, 6
        %1353 = vrot.lane.b32.xlu0 %v1352, 32
        %v1354 = vpop.permute.xlu0 %1353
        %v1355 = vsel %vm611, %v1354, 0
        %1357 = vmatprep.subr.mxu0 0.0
        %1358 = vmatpush1.msra.mxu0 %v607
        %1359 = vmatprep.subr.mxu0 0.0
        %1360 = vmatpush1.msra.mxu0 %v608
        %1361 = vmatprep.subr.mxu0 0.0
        %1362 = vmatpush1.msra.mxu0 %v609
        %1363 = vmatprep.subr.mxu0 0.0
        %1364 = vmatpush1.msra.mxu0 %v610
        %1365 = vmatprep.subr.mxu0 0.0
        %1366 = vmatpush1.msra.mxu0 0.0
        %1367 = vmatprep.subr.mxu0 0.0
        %1368 = vmatpush1.msra.mxu0 0.0
        %1369 = vmatprep.subr.mxu0 0.0
        %1370 = vmatpush1.msra.mxu0 0.0
        %1371 = vmatprep.subr.mxu0 0.0
        %1372 = vmatpush1.msra.mxu0 0.0
        %1373 = vmatprep.subr.mxu0 0.0
        %1374 = vmatpush1.msra.mxu0 0.0
        %1375 = vmatprep.subr.mxu0 0.0
        %1376 = vmatpush1.msra.mxu0 0.0
        %1377 = vmatprep.subr.mxu0 0.0
        %1378 = vmatpush1.msra.mxu0 0.0
        %1379 = vmatprep.subr.mxu0 0.0
        %1380 = vmatpush1.msra.mxu0 0.0
        %1381 = vmatprep.subr.mxu0 0.0
        %1382 = vmatpush1.msra.mxu0 0.0
        %1383 = vmatprep.subr.mxu0 0.0
        %1384 = vmatpush1.msra.mxu0 0.0
        %1385 = vmatprep.subr.mxu0 0.0
        %1386 = vmatpush1.msra.mxu0 0.0
        %1387 = vmatprep.subr.mxu0 0.0
        %1388 = vmatpush1.msra.mxu0 0.0
        %1389 = vmatprep.subr.mxu0 0.0
        %1390 = vmatpush1.msra.mxu0 0.0
        %1391 = vmatprep.subr.mxu0 0.0
        %1392 = vmatpush1.msra.mxu0 0.0
        %1393 = vmatprep.subr.mxu0 0.0
        %1394 = vmatpush1.msra.mxu0 0.0
        %1395 = vmatprep.subr.mxu0 0.0
        %1396 = vmatpush1.msra.mxu0 0.0
        %1397 = vmatprep.subr.mxu0 0.0
        %1398 = vmatpush1.msra.mxu0 0.0
        %1399 = vmatprep.subr.mxu0 0.0
        %1400 = vmatpush1.msra.mxu0 0.0
        %1401 = vmatprep.subr.mxu0 0.0
        %1402 = vmatpush1.msra.mxu0 0.0
        %1403 = vmatprep.subr.mxu0 0.0
        %1404 = vmatpush1.msra.mxu0 0.0
        %1405 = vmatprep.subr.mxu0 0.0
        %1406 = vmatpush1.msra.mxu0 0.0
        %1407 = vmatprep.subr.mxu0 0.0
        %1408 = vmatpush1.msra.mxu0 0.0
        %1409 = vmatprep.subr.mxu0 0.0
        %1410 = vmatpush1.msra.mxu0 0.0
        %1411 = vmatprep.subr.mxu0 0.0
        %1412 = vmatpush1.msra.mxu0 0.0
        %1413 = vmatprep.subr.mxu0 0.0
        %1414 = vmatpush1.msra.mxu0 0.0
        %1415 = vmatprep.subr.mxu0 0.0
        %1416 = vmatpush1.msra.mxu0 0.0
        %1417 = vmatprep.subr.mxu0 0.0
        %1418 = vmatpush1.msra.mxu0 0.0
        %1419 = vmatprep.subr.mxu0 0.0
        %1420 = vmatpush1.msra.mxu0 0.0
        %1421 = vmatprep.mubr.f32.mxu0 0.0
        %1422 = vmatmul.mubr.f32.gmra.mrb[0].mxu0 %v1355
        %v1423 = vpop.f32.mrb[0].mxu0
        %v1424 = vadd.f32 0.0, %v1423
        %v1425 = vpop.f32.mrb[0].mxu0
        %1426 = vdwg.mxu0
        %v1428 = vrot.slane %v1424, 1
        %v1430 = vadd.f32 %v604, %v1428
        %v1431 = vxor.u32 %v1430, 2147483648
        %v1432 = vmul.f32 %v1431, 1.442695
        %v1433 = vpow.pop %v1432
        %v1434 = vadd.f32 %v1433, 1.0
        %v1435 = vrcp.pop %v1434
        %v1436 = vmul.f32 1.0, %v1435
        %v1437 = vtanh.pop %v1430
        %v1439 = vrot.slane %v1344, 7
        %v1441 = vmul.f32 %v1436, %v1439
        %1443 = vrot.lane.b32.xlu0 %v1437, 64
        %v1444 = vpop.permute.xlu0 %1443
        %v1446 = vmul.f32 %v1436, %v1444
        %1448 = vrot.lane.b32.xlu0 %v1446, 32
        %v1449 = vpop.permute.xlu0 %1448
        %v1451 = vadd.f32 %v1441, %v1449
        %v1452 = vtanh.pop %v1451
        %1454 = vrot.lane.b32.xlu0 %v1452, 64
        %v1455 = vpop.permute.xlu0 %1454
        %v1457 = vmul.f32 %v1436, %v1455
        %v1458 = vld [vmem:[#allocation11] sm:$0xff]
        %v1459 = vld [vmem:[#allocation11 + $0x8] sm:$0xff]
        %v1460 = vld [vmem:[%s7] sm:$0x1]
        %v1462 = vlaneseq
        %v1463 = vshrl.u32 %v1462, 7
        %v1464 = vsub.s32 0, %v1463
        %v1465 = vrot.slane %v1460, %v1464
        %1467 = vmatprep.subr.mxu0 0.0
        %1468 = vmatpush1.msra.mxu0 %v1458
        %1469 = vmatprep.subr.mxu0 0.0
        %1470 = vmatpush1.msra.mxu0 %v1459
        %1471 = vmatprep.subr.mxu0 0.0
        %1472 = vmatpush1.msra.mxu0 0.0
        %1473 = vmatprep.subr.mxu0 0.0
        %1474 = vmatpush1.msra.mxu0 0.0
        %1475 = vmatprep.subr.mxu0 0.0
        %1476 = vmatpush1.msra.mxu0 0.0
        %1477 = vmatprep.subr.mxu0 0.0
        %1478 = vmatpush1.msra.mxu0 0.0
        %1479 = vmatprep.subr.mxu0 0.0
        %1480 = vmatpush1.msra.mxu0 0.0
        %1481 = vmatprep.subr.mxu0 0.0
        %1482 = vmatpush1.msra.mxu0 0.0
        %1483 = vmatprep.subr.mxu0 0.0
        %1484 = vmatpush1.msra.mxu0 0.0
        %1485 = vmatprep.subr.mxu0 0.0
        %1486 = vmatpush1.msra.mxu0 0.0
        %1487 = vmatprep.subr.mxu0 0.0
        %1488 = vmatpush1.msra.mxu0 0.0
        %1489 = vmatprep.subr.mxu0 0.0
        %1490 = vmatpush1.msra.mxu0 0.0
        %1491 = vmatprep.subr.mxu0 0.0
        %1492 = vmatpush1.msra.mxu0 0.0
        %1493 = vmatprep.subr.mxu0 0.0
        %1494 = vmatpush1.msra.mxu0 0.0
        %1495 = vmatprep.subr.mxu0 0.0
        %1496 = vmatpush1.msra.mxu0 0.0
        %1497 = vmatprep.subr.mxu0 0.0
        %1498 = vmatpush1.msra.mxu0 0.0
        %1499 = vmatprep.subr.mxu0 0.0
        %1500 = vmatpush1.msra.mxu0 0.0
        %1501 = vmatprep.subr.mxu0 0.0
        %1502 = vmatpush1.msra.mxu0 0.0
        %1503 = vmatprep.subr.mxu0 0.0
        %1504 = vmatpush1.msra.mxu0 0.0
        %1505 = vmatprep.subr.mxu0 0.0
        %1506 = vmatpush1.msra.mxu0 0.0
        %1507 = vmatprep.subr.mxu0 0.0
        %1508 = vmatpush1.msra.mxu0 0.0
        %1509 = vmatprep.subr.mxu0 0.0
        %1510 = vmatpush1.msra.mxu0 0.0
        %1511 = vmatprep.subr.mxu0 0.0
        %1512 = vmatpush1.msra.mxu0 0.0
        %1513 = vmatprep.subr.mxu0 0.0
        %1514 = vmatpush1.msra.mxu0 0.0
        %1515 = vmatprep.subr.mxu0 0.0
        %1516 = vmatpush1.msra.mxu0 0.0
        %1517 = vmatprep.subr.mxu0 0.0
        %1518 = vmatpush1.msra.mxu0 0.0
        %1519 = vmatprep.subr.mxu0 0.0
        %1520 = vmatpush1.msra.mxu0 0.0
        %1521 = vmatprep.subr.mxu0 0.0
        %1522 = vmatpush1.msra.mxu0 0.0
        %1523 = vmatprep.subr.mxu0 0.0
        %1524 = vmatpush1.msra.mxu0 0.0
        %1525 = vmatprep.subr.mxu0 0.0
        %1526 = vmatpush1.msra.mxu0 0.0
        %1527 = vmatprep.subr.mxu0 0.0
        %1528 = vmatpush1.msra.mxu0 0.0
        %1529 = vmatprep.subr.mxu0 0.0
        %1530 = vmatpush1.msra.mxu0 0.0
        %1531 = vmatprep.mubr.f32.mxu0 0.0
        %1532 = vmatmul.mubr.f32.gmra.mrb[0].mxu0 %v535
        %v1533 = vpop.f32.mrb[0].mxu0
        %v1534 = vadd.f32 %v1465, %v1533
        %v1535 = vpop.f32.mrb[0].mxu0
        %1536 = vdwg.mxu0
        %v1537 = vld [vmem:[%s6] sm:$0xff]
        %v1538 = vld [vmem:[%s6 + $0x8] sm:$0xff]
        %v1539 = vld [vmem:[%s6 + $0x10] sm:$0xff]
        %v1540 = vld [vmem:[%s6 + $0x18] sm:$0xff]
        %v1542 = vrot.slane %v1457, 7
        %1543 = vrot.lane.b32.xlu0 %v1542, 32
        %v1544 = vpop.permute.xlu0 %1543
        %v1545 = vsel %vm611, %v1544, 0
        %1547 = vmatprep.subr.mxu0 0.0
        %1548 = vmatpush1.msra.mxu0 %v1537
        %1549 = vmatprep.subr.mxu0 0.0
        %1550 = vmatpush1.msra.mxu0 %v1538
        %1551 = vmatprep.subr.mxu0 0.0
        %1552 = vmatpush1.msra.mxu0 %v1539
        %1553 = vmatprep.subr.mxu0 0.0
        %1554 = vmatpush1.msra.mxu0 %v1540
        %1555 = vmatprep.subr.mxu0 0.0
        %1556 = vmatpush1.msra.mxu0 0.0
        %1557 = vmatprep.subr.mxu0 0.0
        %1558 = vmatpush1.msra.mxu0 0.0
        %1559 = vmatprep.subr.mxu0 0.0
        %1560 = vmatpush1.msra.mxu0 0.0
        %1561 = vmatprep.subr.mxu0 0.0
        %1562 = vmatpush1.msra.mxu0 0.0
        %1563 = vmatprep.subr.mxu0 0.0
        %1564 = vmatpush1.msra.mxu0 0.0
        %1565 = vmatprep.subr.mxu0 0.0
        %1566 = vmatpush1.msra.mxu0 0.0
        %1567 = vmatprep.subr.mxu0 0.0
        %1568 = vmatpush1.msra.mxu0 0.0
        %1569 = vmatprep.subr.mxu0 0.0
        %1570 = vmatpush1.msra.mxu0 0.0
        %1571 = vmatprep.subr.mxu0 0.0
        %1572 = vmatpush1.msra.mxu0 0.0
        %1573 = vmatprep.subr.mxu0 0.0
        %1574 = vmatpush1.msra.mxu0 0.0
        %1575 = vmatprep.subr.mxu0 0.0
        %1576 = vmatpush1.msra.mxu0 0.0
        %1577 = vmatprep.subr.mxu0 0.0
        %1578 = vmatpush1.msra.mxu0 0.0
        %1579 = vmatprep.subr.mxu0 0.0
        %1580 = vmatpush1.msra.mxu0 0.0
        %1581 = vmatprep.subr.mxu0 0.0
        %1582 = vmatpush1.msra.mxu0 0.0
        %1583 = vmatprep.subr.mxu0 0.0
        %1584 = vmatpush1.msra.mxu0 0.0
        %1585 = vmatprep.subr.mxu0 0.0
        %1586 = vmatpush1.msra.mxu0 0.0
        %1587 = vmatprep.subr.mxu0 0.0
        %1588 = vmatpush1.msra.mxu0 0.0
        %1589 = vmatprep.subr.mxu0 0.0
        %1590 = vmatpush1.msra.mxu0 0.0
        %1591 = vmatprep.subr.mxu0 0.0
        %1592 = vmatpush1.msra.mxu0 0.0
        %1593 = vmatprep.subr.mxu0 0.0
        %1594 = vmatpush1.msra.mxu0 0.0
        %1595 = vmatprep.subr.mxu0 0.0
        %1596 = vmatpush1.msra.mxu0 0.0
        %1597 = vmatprep.subr.mxu0 0.0
        %1598 = vmatpush1.msra.mxu0 0.0
        %1599 = vmatprep.subr.mxu0 0.0
        %1600 = vmatpush1.msra.mxu0 0.0
        %1601 = vmatprep.subr.mxu0 0.0
        %1602 = vmatpush1.msra.mxu0 0.0
        %1603 = vmatprep.subr.mxu0 0.0
        %1604 = vmatpush1.msra.mxu0 0.0
        %1605 = vmatprep.subr.mxu0 0.0
        %1606 = vmatpush1.msra.mxu0 0.0
        %1607 = vmatprep.subr.mxu0 0.0
        %1608 = vmatpush1.msra.mxu0 0.0
        %1609 = vmatprep.subr.mxu0 0.0
        %1610 = vmatpush1.msra.mxu0 0.0
        %1611 = vmatprep.mubr.f32.mxu0 0.0
        %1612 = vmatmul.mubr.f32.gmra.mrb[0].mxu0 %v1545
        %v1613 = vpop.f32.mrb[0].mxu0
        %v1614 = vadd.f32 0.0, %v1613
        %v1615 = vpop.f32.mrb[0].mxu0
        %1616 = vdwg.mxu0
        %v1617 = vadd.f32 %v1534, %v1614
        %v1618 = vxor.u32 %v1617, 2147483648
        %v1619 = vmul.f32 %v1618, 1.442695
        %v1620 = vpow.pop %v1619
        %v1621 = vadd.f32 %v1620, 1.0
        %v1622 = vrcp.pop %v1621
        %v1623 = vmul.f32 1.0, %v1622
        %v1624 = vtanh.pop %v1617
        %v1626 = vrot.slane %v1451, 7
        %v1628 = vmul.f32 %v1623, %v1626
        %1630 = vrot.lane.b32.xlu0 %v1624, 64
        %v1631 = vpop.permute.xlu0 %1630
        %v1633 = vmul.f32 %v1623, %v1631
        %1635 = vrot.lane.b32.xlu0 %v1633, 32
        %v1636 = vpop.permute.xlu0 %1635
        %v1638 = vadd.f32 %v1628, %v1636
        %v1639 = vtanh.pop %v1638
        %1641 = vrot.lane.b32.xlu0 %v1639, 64
        %v1642 = vpop.permute.xlu0 %1641
        %v1644 = vmul.f32 %v1623, %v1642
        %1646 = vrot.lane.b32.xlu0 %v1644, 32
        %v1647 = vpop.permute.xlu0 %1646
        %vm1649 = vcmask 253952
        %1650 = vst.msk [vmem:[#allocation3] sm:$0x1] %vm1649, %v1647
        %v1651 = vsel %vm611, %v1647, 0
        %1653 = vmatprep.subr.mxu0 0.0
        %1654 = vmatpush1.msra.mxu0 %v1537
        %1655 = vmatprep.subr.mxu0 0.0
        %1656 = vmatpush1.msra.mxu0 %v1538
        %1657 = vmatprep.subr.mxu0 0.0
        %1658 = vmatpush1.msra.mxu0 %v1539
        %1659 = vmatprep.subr.mxu0 0.0
        %1660 = vmatpush1.msra.mxu0 %v1540
        %1661 = vmatprep.subr.mxu0 0.0
        %1662 = vmatpush1.msra.mxu0 0.0
        %1663 = vmatprep.subr.mxu0 0.0
        %1664 = vmatpush1.msra.mxu0 0.0
        %1665 = vmatprep.subr.mxu0 0.0
        %1666 = vmatpush1.msra.mxu0 0.0
        %1667 = vmatprep.subr.mxu0 0.0
        %1668 = vmatpush1.msra.mxu0 0.0
        %1669 = vmatprep.subr.mxu0 0.0
        %1670 = vmatpush1.msra.mxu0 0.0
        %1671 = vmatprep.subr.mxu0 0.0
        %1672 = vmatpush1.msra.mxu0 0.0
        %1673 = vmatprep.subr.mxu0 0.0
        %1674 = vmatpush1.msra.mxu0 0.0
        %1675 = vmatprep.subr.mxu0 0.0
        %1676 = vmatpush1.msra.mxu0 0.0
        %1677 = vmatprep.subr.mxu0 0.0
        %1678 = vmatpush1.msra.mxu0 0.0
        %1679 = vmatprep.subr.mxu0 0.0
        %1680 = vmatpush1.msra.mxu0 0.0
        %1681 = vmatprep.subr.mxu0 0.0
        %1682 = vmatpush1.msra.mxu0 0.0
        %1683 = vmatprep.subr.mxu0 0.0
        %1684 = vmatpush1.msra.mxu0 0.0
        %1685 = vmatprep.subr.mxu0 0.0
        %1686 = vmatpush1.msra.mxu0 0.0
        %1687 = vmatprep.subr.mxu0 0.0
        %1688 = vmatpush1.msra.mxu0 0.0
        %1689 = vmatprep.subr.mxu0 0.0
        %1690 = vmatpush1.msra.mxu0 0.0
        %1691 = vmatprep.subr.mxu0 0.0
        %1692 = vmatpush1.msra.mxu0 0.0
        %1693 = vmatprep.subr.mxu0 0.0
        %1694 = vmatpush1.msra.mxu0 0.0
        %1695 = vmatprep.subr.mxu0 0.0
        %1696 = vmatpush1.msra.mxu0 0.0
        %1697 = vmatprep.subr.mxu0 0.0
        %1698 = vmatpush1.msra.mxu0 0.0
        %1699 = vmatprep.subr.mxu0 0.0
        %1700 = vmatpush1.msra.mxu0 0.0
        %1701 = vmatprep.subr.mxu0 0.0
        %1702 = vmatpush1.msra.mxu0 0.0
        %1703 = vmatprep.subr.mxu0 0.0
        %1704 = vmatpush1.msra.mxu0 0.0
        %1705 = vmatprep.subr.mxu0 0.0
        %1706 = vmatpush1.msra.mxu0 0.0
        %1707 = vmatprep.subr.mxu0 0.0
        %1708 = vmatpush1.msra.mxu0 0.0
        %1709 = vmatprep.subr.mxu0 0.0
        %1710 = vmatpush1.msra.mxu0 0.0
        %1711 = vmatprep.subr.mxu0 0.0
        %1712 = vmatpush1.msra.mxu0 0.0
        %1713 = vmatprep.subr.mxu0 0.0
        %1714 = vmatpush1.msra.mxu0 0.0
        %1715 = vmatprep.subr.mxu0 0.0
        %1716 = vmatpush1.msra.mxu0 0.0
        %1717 = vmatprep.mubr.f32.mxu0 0.0
        %1718 = vmatmul.mubr.f32.gmra.mrb[0].mxu0 %v1651
        %v1719 = vpop.f32.mrb[0].mxu0
        %v1720 = vadd.f32 0.0, %v1719
        %v1721 = vpop.f32.mrb[0].mxu0
        %1722 = vdwg.mxu0
        %v1724 = vrot.slane %v1720, 7
        %v1726 = vadd.f32 %v1534, %v1724
        %v1727 = vxor.u32 %v1726, 2147483648
        %v1728 = vmul.f32 %v1727, 1.442695
        %v1729 = vpow.pop %v1728
        %v1730 = vadd.f32 %v1729, 1.0
        %v1731 = vrcp.pop %v1730
        %v1732 = vmul.f32 1.0, %v1731
        %v1733 = vtanh.pop %v1726
        %v1735 = vrot.slane %v1638, 7
        %v1737 = vmul.f32 %v1732, %v1735
        %1739 = vrot.lane.b32.xlu0 %v1733, 64
        %v1740 = vpop.permute.xlu0 %1739
        %v1742 = vmul.f32 %v1732, %v1740
        %1744 = vrot.lane.b32.xlu0 %v1742, 32
        %v1745 = vpop.permute.xlu0 %1744
        %v1747 = vadd.f32 %v1737, %v1745
        %v1748 = vtanh.pop %v1747
        %1750 = vrot.lane.b32.xlu0 %v1748, 64
        %v1751 = vpop.permute.xlu0 %1750
        %v1753 = vmul.f32 %v1732, %v1751
        %1755 = vrot.lane.b32.xlu0 %v1753, 32
        %v1756 = vpop.permute.xlu0 %1755
        %vm1758 = vcmask 254977
        %1759 = vst.msk [vmem:[#allocation3] sm:$0x2] %vm1758, %v1756
        %v1760 = vrot.slane %v1753, 1
        %1761 = vrot.lane.b32.xlu0 %v1760, 32
        %v1762 = vpop.permute.xlu0 %1761
        %v1763 = vsel %vm611, %v1762, 0
        %1765 = vmatprep.subr.mxu0 0.0
        %1766 = vmatpush1.msra.mxu0 %v1537
        %1767 = vmatprep.subr.mxu0 0.0
        %1768 = vmatpush1.msra.mxu0 %v1538
        %1769 = vmatprep.subr.mxu0 0.0
        %1770 = vmatpush1.msra.mxu0 %v1539
        %1771 = vmatprep.subr.mxu0 0.0
        %1772 = vmatpush1.msra.mxu0 %v1540
        %1773 = vmatprep.subr.mxu0 0.0
        %1774 = vmatpush1.msra.mxu0 0.0
        %1775 = vmatprep.subr.mxu0 0.0
        %1776 = vmatpush1.msra.mxu0 0.0
        %1777 = vmatprep.subr.mxu0 0.0
        %1778 = vmatpush1.msra.mxu0 0.0
        %1779 = vmatprep.subr.mxu0 0.0
        %1780 = vmatpush1.msra.mxu0 0.0
        %1781 = vmatprep.subr.mxu0 0.0
        %1782 = vmatpush1.msra.mxu0 0.0
        %1783 = vmatprep.subr.mxu0 0.0
        %1784 = vmatpush1.msra.mxu0 0.0
        %1785 = vmatprep.subr.mxu0 0.0
        %1786 = vmatpush1.msra.mxu0 0.0
        %1787 = vmatprep.subr.mxu0 0.0
        %1788 = vmatpush1.msra.mxu0 0.0
        %1789 = vmatprep.subr.mxu0 0.0
        %1790 = vmatpush1.msra.mxu0 0.0
        %1791 = vmatprep.subr.mxu0 0.0
        %1792 = vmatpush1.msra.mxu0 0.0
        %1793 = vmatprep.subr.mxu0 0.0
        %1794 = vmatpush1.msra.mxu0 0.0
        %1795 = vmatprep.subr.mxu0 0.0
        %1796 = vmatpush1.msra.mxu0 0.0
        %1797 = vmatprep.subr.mxu0 0.0
        %1798 = vmatpush1.msra.mxu0 0.0
        %1799 = vmatprep.subr.mxu0 0.0
        %1800 = vmatpush1.msra.mxu0 0.0
        %1801 = vmatprep.subr.mxu0 0.0
        %1802 = vmatpush1.msra.mxu0 0.0
        %1803 = vmatprep.subr.mxu0 0.0
        %1804 = vmatpush1.msra.mxu0 0.0
        %1805 = vmatprep.subr.mxu0 0.0
        %1806 = vmatpush1.msra.mxu0 0.0
        %1807 = vmatprep.subr.mxu0 0.0
        %1808 = vmatpush1.msra.mxu0 0.0
        %1809 = vmatprep.subr.mxu0 0.0
        %1810 = vmatpush1.msra.mxu0 0.0
        %1811 = vmatprep.subr.mxu0 0.0
        %1812 = vmatpush1.msra.mxu0 0.0
        %1813 = vmatprep.subr.mxu0 0.0
        %1814 = vmatpush1.msra.mxu0 0.0
        %1815 = vmatprep.subr.mxu0 0.0
        %1816 = vmatpush1.msra.mxu0 0.0
        %1817 = vmatprep.subr.mxu0 0.0
        %1818 = vmatpush1.msra.mxu0 0.0
        %1819 = vmatprep.subr.mxu0 0.0
        %1820 = vmatpush1.msra.mxu0 0.0
        %1821 = vmatprep.subr.mxu0 0.0
        %1822 = vmatpush1.msra.mxu0 0.0
        %1823 = vmatprep.subr.mxu0 0.0
        %1824 = vmatpush1.msra.mxu0 0.0
        %1825 = vmatprep.subr.mxu0 0.0
        %1826 = vmatpush1.msra.mxu0 0.0
        %1827 = vmatprep.subr.mxu0 0.0
        %1828 = vmatpush1.msra.mxu0 0.0
        %1829 = vmatprep.mubr.f32.mxu0 0.0
        %1830 = vmatmul.mubr.f32.gmra.mrb[0].mxu0 %v1763
        %v1831 = vpop.f32.mrb[0].mxu0
        %v1832 = vadd.f32 0.0, %v1831
        %v1833 = vpop.f32.mrb[0].mxu0
        %1834 = vdwg.mxu0
        %v1836 = vrot.slane %v1832, 6
        %v1838 = vadd.f32 %v1534, %v1836
        %v1839 = vxor.u32 %v1838, 2147483648
        %v1840 = vmul.f32 %v1839, 1.442695
        %v1841 = vpow.pop %v1840
        %v1842 = vadd.f32 %v1841, 1.0
        %v1843 = vrcp.pop %v1842
        %v1844 = vmul.f32 1.0, %v1843
        %v1845 = vtanh.pop %v1838
        %v1847 = vrot.slane %v1747, 7
        %v1849 = vmul.f32 %v1844, %v1847
        %1851 = vrot.lane.b32.xlu0 %v1845, 64
        %v1852 = vpop.permute.xlu0 %1851
        %v1854 = vmul.f32 %v1844, %v1852
        %1856 = vrot.lane.b32.xlu0 %v1854, 32
        %v1857 = vpop.permute.xlu0 %1856
        %v1859 = vadd.f32 %v1849, %v1857
        %v1860 = vtanh.pop %v1859
        %1862 = vrot.lane.b32.xlu0 %v1860, 64
        %v1863 = vpop.permute.xlu0 %1862
        %v1865 = vmul.f32 %v1844, %v1863
        %1867 = vrot.lane.b32.xlu0 %v1865, 32
        %v1868 = vpop.permute.xlu0 %1867
        %vm1870 = vcmask 256002
        %1871 = vst.msk [vmem:[#allocation3] sm:$0x4] %vm1870, %v1868
        %v1872 = vrot.slane %v1865, 2
        %1873 = vrot.lane.b32.xlu0 %v1872, 32
        %v1874 = vpop.permute.xlu0 %1873
        %v1875 = vsel %vm611, %v1874, 0
        %1877 = vmatprep.subr.mxu0 0.0
        %1878 = vmatpush1.msra.mxu0 %v1537
        %1879 = vmatprep.subr.mxu0 0.0
        %1880 = vmatpush1.msra.mxu0 %v1538
        %1881 = vmatprep.subr.mxu0 0.0
        %1882 = vmatpush1.msra.mxu0 %v1539
        %1883 = vmatprep.subr.mxu0 0.0
        %1884 = vmatpush1.msra.mxu0 %v1540
        %1885 = vmatprep.subr.mxu0 0.0
        %1886 = vmatpush1.msra.mxu0 0.0
        %1887 = vmatprep.subr.mxu0 0.0
        %1888 = vmatpush1.msra.mxu0 0.0
        %1889 = vmatprep.subr.mxu0 0.0
        %1890 = vmatpush1.msra.mxu0 0.0
        %1891 = vmatprep.subr.mxu0 0.0
        %1892 = vmatpush1.msra.mxu0 0.0
        %1893 = vmatprep.subr.mxu0 0.0
        %1894 = vmatpush1.msra.mxu0 0.0
        %1895 = vmatprep.subr.mxu0 0.0
        %1896 = vmatpush1.msra.mxu0 0.0
        %1897 = vmatprep.subr.mxu0 0.0
        %1898 = vmatpush1.msra.mxu0 0.0
        %1899 = vmatprep.subr.mxu0 0.0
        %1900 = vmatpush1.msra.mxu0 0.0
        %1901 = vmatprep.subr.mxu0 0.0
        %1902 = vmatpush1.msra.mxu0 0.0
        %1903 = vmatprep.subr.mxu0 0.0
        %1904 = vmatpush1.msra.mxu0 0.0
        %1905 = vmatprep.subr.mxu0 0.0
        %1906 = vmatpush1.msra.mxu0 0.0
        %1907 = vmatprep.subr.mxu0 0.0
        %1908 = vmatpush1.msra.mxu0 0.0
        %1909 = vmatprep.subr.mxu0 0.0
        %1910 = vmatpush1.msra.mxu0 0.0
        %1911 = vmatprep.subr.mxu0 0.0
        %1912 = vmatpush1.msra.mxu0 0.0
        %1913 = vmatprep.subr.mxu0 0.0
        %1914 = vmatpush1.msra.mxu0 0.0
        %1915 = vmatprep.subr.mxu0 0.0
        %1916 = vmatpush1.msra.mxu0 0.0
        %1917 = vmatprep.subr.mxu0 0.0
        %1918 = vmatpush1.msra.mxu0 0.0
        %1919 = vmatprep.subr.mxu0 0.0
        %1920 = vmatpush1.msra.mxu0 0.0
        %1921 = vmatprep.subr.mxu0 0.0
        %1922 = vmatpush1.msra.mxu0 0.0
        %1923 = vmatprep.subr.mxu0 0.0
        %1924 = vmatpush1.msra.mxu0 0.0
        %1925 = vmatprep.subr.mxu0 0.0
        %1926 = vmatpush1.msra.mxu0 0.0
        %1927 = vmatprep.subr.mxu0 0.0
        %1928 = vmatpush1.msra.mxu0 0.0
        %1929 = vmatprep.subr.mxu0 0.0
        %1930 = vmatpush1.msra.mxu0 0.0
        %1931 = vmatprep.subr.mxu0 0.0
        %1932 = vmatpush1.msra.mxu0 0.0
        %1933 = vmatprep.subr.mxu0 0.0
        %1934 = vmatpush1.msra.mxu0 0.0
        %1935 = vmatprep.subr.mxu0 0.0
        %1936 = vmatpush1.msra.mxu0 0.0
        %1937 = vmatprep.subr.mxu0 0.0
        %1938 = vmatpush1.msra.mxu0 0.0
        %1939 = vmatprep.subr.mxu0 0.0
        %1940 = vmatpush1.msra.mxu0 0.0
        %1941 = vmatprep.mubr.f32.mxu0 0.0
        %1942 = vmatmul.mubr.f32.gmra.mrb[0].mxu0 %v1875
        %v1943 = vpop.f32.mrb[0].mxu0
        %v1944 = vadd.f32 0.0, %v1943
        %v1945 = vpop.f32.mrb[0].mxu0
        %1946 = vdwg.mxu0
        %v1948 = vrot.slane %v1944, 5
        %v1950 = vadd.f32 %v1534, %v1948
        %v1951 = vxor.u32 %v1950, 2147483648
        %v1952 = vmul.f32 %v1951, 1.442695
        %v1953 = vpow.pop %v1952
        %v1954 = vadd.f32 %v1953, 1.0
        %v1955 = vrcp.pop %v1954
        %v1956 = vmul.f32 1.0, %v1955
        %v1957 = vtanh.pop %v1950
        %v1959 = vrot.slane %v1859, 7
        %v1961 = vmul.f32 %v1956, %v1959
        %1963 = vrot.lane.b32.xlu0 %v1957, 64
        %v1964 = vpop.permute.xlu0 %1963
        %v1966 = vmul.f32 %v1956, %v1964
        %1968 = vrot.lane.b32.xlu0 %v1966, 32
        %v1969 = vpop.permute.xlu0 %1968
        %v1971 = vadd.f32 %v1961, %v1969
        %v1972 = vtanh.pop %v1971
        %1974 = vrot.lane.b32.xlu0 %v1972, 64
        %v1975 = vpop.permute.xlu0 %1974
        %v1977 = vmul.f32 %v1956, %v1975
        %1979 = vrot.lane.b32.xlu0 %v1977, 32
        %v1980 = vpop.permute.xlu0 %1979
        %vm1982 = vcmask 257027
        %1983 = vst.msk [vmem:[#allocation3] sm:$0x8] %vm1982, %v1980
        %v1984 = vrot.slane %v1977, 3
        %1985 = vrot.lane.b32.xlu0 %v1984, 32
        %v1986 = vpop.permute.xlu0 %1985
        %v1987 = vsel %vm611, %v1986, 0
        %1989 = vmatprep.subr.mxu0 0.0
        %1990 = vmatpush1.msra.mxu0 %v1537
        %1991 = vmatprep.subr.mxu0 0.0
        %1992 = vmatpush1.msra.mxu0 %v1538
        %1993 = vmatprep.subr.mxu0 0.0
        %1994 = vmatpush1.msra.mxu0 %v1539
        %1995 = vmatprep.subr.mxu0 0.0
        %1996 = vmatpush1.msra.mxu0 %v1540
        %1997 = vmatprep.subr.mxu0 0.0
        %1998 = vmatpush1.msra.mxu0 0.0
        %1999 = vmatprep.subr.mxu0 0.0
        %2000 = vmatpush1.msra.mxu0 0.0
        %2001 = vmatprep.subr.mxu0 0.0
        %2002 = vmatpush1.msra.mxu0 0.0
        %2003 = vmatprep.subr.mxu0 0.0
        %2004 = vmatpush1.msra.mxu0 0.0
        %2005 = vmatprep.subr.mxu0 0.0
        %2006 = vmatpush1.msra.mxu0 0.0
        %2007 = vmatprep.subr.mxu0 0.0
        %2008 = vmatpush1.msra.mxu0 0.0
        %2009 = vmatprep.subr.mxu0 0.0
        %2010 = vmatpush1.msra.mxu0 0.0
        %2011 = vmatprep.subr.mxu0 0.0
        %2012 = vmatpush1.msra.mxu0 0.0
        %2013 = vmatprep.subr.mxu0 0.0
        %2014 = vmatpush1.msra.mxu0 0.0
        %2015 = vmatprep.subr.mxu0 0.0
        %2016 = vmatpush1.msra.mxu0 0.0
        %2017 = vmatprep.subr.mxu0 0.0
        %2018 = vmatpush1.msra.mxu0 0.0
        %2019 = vmatprep.subr.mxu0 0.0
        %2020 = vmatpush1.msra.mxu0 0.0
        %2021 = vmatprep.subr.mxu0 0.0
        %2022 = vmatpush1.msra.mxu0 0.0
        %2023 = vmatprep.subr.mxu0 0.0
        %2024 = vmatpush1.msra.mxu0 0.0
        %2025 = vmatprep.subr.mxu0 0.0
        %2026 = vmatpush1.msra.mxu0 0.0
        %2027 = vmatprep.subr.mxu0 0.0
        %2028 = vmatpush1.msra.mxu0 0.0
        %2029 = vmatprep.subr.mxu0 0.0
        %2030 = vmatpush1.msra.mxu0 0.0
        %2031 = vmatprep.subr.mxu0 0.0
        %2032 = vmatpush1.msra.mxu0 0.0
        %2033 = vmatprep.subr.mxu0 0.0
        %2034 = vmatpush1.msra.mxu0 0.0
        %2035 = vmatprep.subr.mxu0 0.0
        %2036 = vmatpush1.msra.mxu0 0.0
        %2037 = vmatprep.subr.mxu0 0.0
        %2038 = vmatpush1.msra.mxu0 0.0
        %2039 = vmatprep.subr.mxu0 0.0
        %2040 = vmatpush1.msra.mxu0 0.0
        %2041 = vmatprep.subr.mxu0 0.0
        %2042 = vmatpush1.msra.mxu0 0.0
        %2043 = vmatprep.subr.mxu0 0.0
        %2044 = vmatpush1.msra.mxu0 0.0
        %2045 = vmatprep.subr.mxu0 0.0
        %2046 = vmatpush1.msra.mxu0 0.0
        %2047 = vmatprep.subr.mxu0 0.0
        %2048 = vmatpush1.msra.mxu0 0.0
        %2049 = vmatprep.subr.mxu0 0.0
        %2050 = vmatpush1.msra.mxu0 0.0
        %2051 = vmatprep.subr.mxu0 0.0
        %2052 = vmatpush1.msra.mxu0 0.0
        %2053 = vmatprep.mubr.f32.mxu0 0.0
        %2054 = vmatmul.mubr.f32.gmra.mrb[0].mxu0 %v1987
        %v2055 = vpop.f32.mrb[0].mxu0
        %v2056 = vadd.f32 0.0, %v2055
        %v2057 = vpop.f32.mrb[0].mxu0
        %2058 = vdwg.mxu0
        %v2060 = vrot.slane %v2056, 4
        %v2062 = vadd.f32 %v1534, %v2060
        %v2063 = vxor.u32 %v2062, 2147483648
        %v2064 = vmul.f32 %v2063, 1.442695
        %v2065 = vpow.pop %v2064
        %v2066 = vadd.f32 %v2065, 1.0
        %v2067 = vrcp.pop %v2066
        %v2068 = vmul.f32 1.0, %v2067
        %v2069 = vtanh.pop %v2062
        %v2071 = vrot.slane %v1971, 7
        %v2073 = vmul.f32 %v2068, %v2071
        %2075 = vrot.lane.b32.xlu0 %v2069, 64
        %v2076 = vpop.permute.xlu0 %2075
        %v2078 = vmul.f32 %v2068, %v2076
        %2080 = vrot.lane.b32.xlu0 %v2078, 32
        %v2081 = vpop.permute.xlu0 %2080
        %v2083 = vadd.f32 %v2073, %v2081
        %v2084 = vtanh.pop %v2083
        %2086 = vrot.lane.b32.xlu0 %v2084, 64
        %v2087 = vpop.permute.xlu0 %2086
        %v2089 = vmul.f32 %v2068, %v2087
        %2091 = vrot.lane.b32.xlu0 %v2089, 32
        %v2092 = vpop.permute.xlu0 %2091
        %vm2094 = vcmask 258052
        %2095 = vst.msk [vmem:[#allocation3] sm:$0x10] %vm2094, %v2092
        %v2096 = vrot.slane %v2089, 4
        %2097 = vrot.lane.b32.xlu0 %v2096, 32
        %v2098 = vpop.permute.xlu0 %2097
        %v2099 = vsel %vm611, %v2098, 0
        %2101 = vmatprep.subr.mxu0 0.0
        %2102 = vmatpush1.msra.mxu0 %v1537
        %2103 = vmatprep.subr.mxu0 0.0
        %2104 = vmatpush1.msra.mxu0 %v1538
        %2105 = vmatprep.subr.mxu0 0.0
        %2106 = vmatpush1.msra.mxu0 %v1539
        %2107 = vmatprep.subr.mxu0 0.0
        %2108 = vmatpush1.msra.mxu0 %v1540
        %2109 = vmatprep.subr.mxu0 0.0
        %2110 = vmatpush1.msra.mxu0 0.0
        %2111 = vmatprep.subr.mxu0 0.0
        %2112 = vmatpush1.msra.mxu0 0.0
        %2113 = vmatprep.subr.mxu0 0.0
        %2114 = vmatpush1.msra.mxu0 0.0
        %2115 = vmatprep.subr.mxu0 0.0
        %2116 = vmatpush1.msra.mxu0 0.0
        %2117 = vmatprep.subr.mxu0 0.0
        %2118 = vmatpush1.msra.mxu0 0.0
        %2119 = vmatprep.subr.mxu0 0.0
        %2120 = vmatpush1.msra.mxu0 0.0
        %2121 = vmatprep.subr.mxu0 0.0
        %2122 = vmatpush1.msra.mxu0 0.0
        %2123 = vmatprep.subr.mxu0 0.0
        %2124 = vmatpush1.msra.mxu0 0.0
        %2125 = vmatprep.subr.mxu0 0.0
        %2126 = vmatpush1.msra.mxu0 0.0
        %2127 = vmatprep.subr.mxu0 0.0
        %2128 = vmatpush1.msra.mxu0 0.0
        %2129 = vmatprep.subr.mxu0 0.0
        %2130 = vmatpush1.msra.mxu0 0.0
        %2131 = vmatprep.subr.mxu0 0.0
        %2132 = vmatpush1.msra.mxu0 0.0
        %2133 = vmatprep.subr.mxu0 0.0
        %2134 = vmatpush1.msra.mxu0 0.0
        %2135 = vmatprep.subr.mxu0 0.0
        %2136 = vmatpush1.msra.mxu0 0.0
        %2137 = vmatprep.subr.mxu0 0.0
        %2138 = vmatpush1.msra.mxu0 0.0
        %2139 = vmatprep.subr.mxu0 0.0
        %2140 = vmatpush1.msra.mxu0 0.0
        %2141 = vmatprep.subr.mxu0 0.0
        %2142 = vmatpush1.msra.mxu0 0.0
        %2143 = vmatprep.subr.mxu0 0.0
        %2144 = vmatpush1.msra.mxu0 0.0
        %2145 = vmatprep.subr.mxu0 0.0
        %2146 = vmatpush1.msra.mxu0 0.0
        %2147 = vmatprep.subr.mxu0 0.0
        %2148 = vmatpush1.msra.mxu0 0.0
        %2149 = vmatprep.subr.mxu0 0.0
        %2150 = vmatpush1.msra.mxu0 0.0
        %2151 = vmatprep.subr.mxu0 0.0
        %2152 = vmatpush1.msra.mxu0 0.0
        %2153 = vmatprep.subr.mxu0 0.0
        %2154 = vmatpush1.msra.mxu0 0.0
        %2155 = vmatprep.subr.mxu0 0.0
        %2156 = vmatpush1.msra.mxu0 0.0
        %2157 = vmatprep.subr.mxu0 0.0
        %2158 = vmatpush1.msra.mxu0 0.0
        %2159 = vmatprep.subr.mxu0 0.0
        %2160 = vmatpush1.msra.mxu0 0.0
        %2161 = vmatprep.subr.mxu0 0.0
        %2162 = vmatpush1.msra.mxu0 0.0
        %2163 = vmatprep.subr.mxu0 0.0
        %2164 = vmatpush1.msra.mxu0 0.0
        %2165 = vmatprep.mubr.f32.mxu0 0.0
        %2166 = vmatmul.mubr.f32.gmra.mrb[0].mxu0 %v2099
        %v2167 = vpop.f32.mrb[0].mxu0
        %v2168 = vadd.f32 0.0, %v2167
        %v2169 = vpop.f32.mrb[0].mxu0
        %2170 = vdwg.mxu0
        %v2172 = vrot.slane %v2168, 3
        %v2174 = vadd.f32 %v1534, %v2172
        %v2175 = vxor.u32 %v2174, 2147483648
        %v2176 = vmul.f32 %v2175, 1.442695
        %v2177 = vpow.pop %v2176
        %v2178 = vadd.f32 %v2177, 1.0
        %v2179 = vrcp.pop %v2178
        %v2180 = vmul.f32 1.0, %v2179
        %v2181 = vtanh.pop %v2174
        %v2183 = vrot.slane %v2083, 7
        %v2185 = vmul.f32 %v2180, %v2183
        %2187 = vrot.lane.b32.xlu0 %v2181, 64
        %v2188 = vpop.permute.xlu0 %2187
        %v2190 = vmul.f32 %v2180, %v2188
        %2192 = vrot.lane.b32.xlu0 %v2190, 32
        %v2193 = vpop.permute.xlu0 %2192
        %v2195 = vadd.f32 %v2185, %v2193
        %v2196 = vtanh.pop %v2195
        %2198 = vrot.lane.b32.xlu0 %v2196, 64
        %v2199 = vpop.permute.xlu0 %2198
        %v2201 = vmul.f32 %v2180, %v2199
        %2203 = vrot.lane.b32.xlu0 %v2201, 32
        %v2204 = vpop.permute.xlu0 %2203
        %vm2206 = vcmask 259077
        %2207 = vst.msk [vmem:[#allocation3] sm:$0x20] %vm2206, %v2204
        %v2208 = vrot.slane %v2201, 5
        %2209 = vrot.lane.b32.xlu0 %v2208, 32
        %v2210 = vpop.permute.xlu0 %2209
        %v2211 = vsel %vm611, %v2210, 0
        %2213 = vmatprep.subr.mxu0 0.0
        %2214 = vmatpush1.msra.mxu0 %v1537
        %2215 = vmatprep.subr.mxu0 0.0
        %2216 = vmatpush1.msra.mxu0 %v1538
        %2217 = vmatprep.subr.mxu0 0.0
        %2218 = vmatpush1.msra.mxu0 %v1539
        %2219 = vmatprep.subr.mxu0 0.0
        %2220 = vmatpush1.msra.mxu0 %v1540
        %2221 = vmatprep.subr.mxu0 0.0
        %2222 = vmatpush1.msra.mxu0 0.0
        %2223 = vmatprep.subr.mxu0 0.0
        %2224 = vmatpush1.msra.mxu0 0.0
        %2225 = vmatprep.subr.mxu0 0.0
        %2226 = vmatpush1.msra.mxu0 0.0
        %2227 = vmatprep.subr.mxu0 0.0
        %2228 = vmatpush1.msra.mxu0 0.0
        %2229 = vmatprep.subr.mxu0 0.0
        %2230 = vmatpush1.msra.mxu0 0.0
        %2231 = vmatprep.subr.mxu0 0.0
        %2232 = vmatpush1.msra.mxu0 0.0
        %2233 = vmatprep.subr.mxu0 0.0
        %2234 = vmatpush1.msra.mxu0 0.0
        %2235 = vmatprep.subr.mxu0 0.0
        %2236 = vmatpush1.msra.mxu0 0.0
        %2237 = vmatprep.subr.mxu0 0.0
        %2238 = vmatpush1.msra.mxu0 0.0
        %2239 = vmatprep.subr.mxu0 0.0
        %2240 = vmatpush1.msra.mxu0 0.0
        %2241 = vmatprep.subr.mxu0 0.0
        %2242 = vmatpush1.msra.mxu0 0.0
        %2243 = vmatprep.subr.mxu0 0.0
        %2244 = vmatpush1.msra.mxu0 0.0
        %2245 = vmatprep.subr.mxu0 0.0
        %2246 = vmatpush1.msra.mxu0 0.0
        %2247 = vmatprep.subr.mxu0 0.0
        %2248 = vmatpush1.msra.mxu0 0.0
        %2249 = vmatprep.subr.mxu0 0.0
        %2250 = vmatpush1.msra.mxu0 0.0
        %2251 = vmatprep.subr.mxu0 0.0
        %2252 = vmatpush1.msra.mxu0 0.0
        %2253 = vmatprep.subr.mxu0 0.0
        %2254 = vmatpush1.msra.mxu0 0.0
        %2255 = vmatprep.subr.mxu0 0.0
        %2256 = vmatpush1.msra.mxu0 0.0
        %2257 = vmatprep.subr.mxu0 0.0
        %2258 = vmatpush1.msra.mxu0 0.0
        %2259 = vmatprep.subr.mxu0 0.0
        %2260 = vmatpush1.msra.mxu0 0.0
        %2261 = vmatprep.subr.mxu0 0.0
        %2262 = vmatpush1.msra.mxu0 0.0
        %2263 = vmatprep.subr.mxu0 0.0
        %2264 = vmatpush1.msra.mxu0 0.0
        %2265 = vmatprep.subr.mxu0 0.0
        %2266 = vmatpush1.msra.mxu0 0.0
        %2267 = vmatprep.subr.mxu0 0.0
        %2268 = vmatpush1.msra.mxu0 0.0
        %2269 = vmatprep.subr.mxu0 0.0
        %2270 = vmatpush1.msra.mxu0 0.0
        %2271 = vmatprep.subr.mxu0 0.0
        %2272 = vmatpush1.msra.mxu0 0.0
        %2273 = vmatprep.subr.mxu0 0.0
        %2274 = vmatpush1.msra.mxu0 0.0
        %2275 = vmatprep.subr.mxu0 0.0
        %2276 = vmatpush1.msra.mxu0 0.0
        %2277 = vmatprep.mubr.f32.mxu0 0.0
        %2278 = vmatmul.mubr.f32.gmra.mrb[0].mxu0 %v2211
        %v2279 = vpop.f32.mrb[0].mxu0
        %v2280 = vadd.f32 0.0, %v2279
        %v2281 = vpop.f32.mrb[0].mxu0
        %2282 = vdwg.mxu0
        %v2284 = vrot.slane %v2280, 2
        %v2286 = vadd.f32 %v1534, %v2284
        %v2287 = vxor.u32 %v2286, 2147483648
        %v2288 = vmul.f32 %v2287, 1.442695
        %v2289 = vpow.pop %v2288
        %v2290 = vadd.f32 %v2289, 1.0
        %v2291 = vrcp.pop %v2290
        %v2292 = vmul.f32 1.0, %v2291
        %v2293 = vtanh.pop %v2286
        %v2295 = vrot.slane %v2195, 7
        %v2297 = vmul.f32 %v2292, %v2295
        %2299 = vrot.lane.b32.xlu0 %v2293, 64
        %v2300 = vpop.permute.xlu0 %2299
        %v2302 = vmul.f32 %v2292, %v2300
        %2304 = vrot.lane.b32.xlu0 %v2302, 32
        %v2305 = vpop.permute.xlu0 %2304
        %v2307 = vadd.f32 %v2297, %v2305
        %v2308 = vtanh.pop %v2307
        %2310 = vrot.lane.b32.xlu0 %v2308, 64
        %v2311 = vpop.permute.xlu0 %2310
        %v2313 = vmul.f32 %v2292, %v2311
        %2315 = vrot.lane.b32.xlu0 %v2313, 32
        %v2316 = vpop.permute.xlu0 %2315
        %vm2318 = vcmask 260102
        %2319 = vst.msk [vmem:[#allocation3] sm:$0x40] %vm2318, %v2316
        %v2320 = vrot.slane %v2313, 6
        %2321 = vrot.lane.b32.xlu0 %v2320, 32
        %v2322 = vpop.permute.xlu0 %2321
        %v2323 = vsel %vm611, %v2322, 0
        %2325 = vmatprep.subr.mxu0 0.0
        %2326 = vmatpush1.msra.mxu0 %v1537
        %2327 = vmatprep.subr.mxu0 0.0
        %2328 = vmatpush1.msra.mxu0 %v1538
        %2329 = vmatprep.subr.mxu0 0.0
        %2330 = vmatpush1.msra.mxu0 %v1539
        %2331 = vmatprep.subr.mxu0 0.0
        %2332 = vmatpush1.msra.mxu0 %v1540
        %2333 = vmatprep.subr.mxu0 0.0
        %2334 = vmatpush1.msra.mxu0 0.0
        %2335 = vmatprep.subr.mxu0 0.0
        %2336 = vmatpush1.msra.mxu0 0.0
        %2337 = vmatprep.subr.mxu0 0.0
        %2338 = vmatpush1.msra.mxu0 0.0
        %2339 = vmatprep.subr.mxu0 0.0
        %2340 = vmatpush1.msra.mxu0 0.0
        %2341 = vmatprep.subr.mxu0 0.0
        %2342 = vmatpush1.msra.mxu0 0.0
        %2343 = vmatprep.subr.mxu0 0.0
        %2344 = vmatpush1.msra.mxu0 0.0
        %2345 = vmatprep.subr.mxu0 0.0
        %2346 = vmatpush1.msra.mxu0 0.0
        %2347 = vmatprep.subr.mxu0 0.0
        %2348 = vmatpush1.msra.mxu0 0.0
        %2349 = vmatprep.subr.mxu0 0.0
        %2350 = vmatpush1.msra.mxu0 0.0
        %2351 = vmatprep.subr.mxu0 0.0
        %2352 = vmatpush1.msra.mxu0 0.0
        %2353 = vmatprep.subr.mxu0 0.0
        %2354 = vmatpush1.msra.mxu0 0.0
        %2355 = vmatprep.subr.mxu0 0.0
        %2356 = vmatpush1.msra.mxu0 0.0
        %2357 = vmatprep.subr.mxu0 0.0
        %2358 = vmatpush1.msra.mxu0 0.0
        %2359 = vmatprep.subr.mxu0 0.0
        %2360 = vmatpush1.msra.mxu0 0.0
        %2361 = vmatprep.subr.mxu0 0.0
        %2362 = vmatpush1.msra.mxu0 0.0
        %2363 = vmatprep.subr.mxu0 0.0
        %2364 = vmatpush1.msra.mxu0 0.0
        %2365 = vmatprep.subr.mxu0 0.0
        %2366 = vmatpush1.msra.mxu0 0.0
        %2367 = vmatprep.subr.mxu0 0.0
        %2368 = vmatpush1.msra.mxu0 0.0
        %2369 = vmatprep.subr.mxu0 0.0
        %2370 = vmatpush1.msra.mxu0 0.0
        %2371 = vmatprep.subr.mxu0 0.0
        %2372 = vmatpush1.msra.mxu0 0.0
        %2373 = vmatprep.subr.mxu0 0.0
        %2374 = vmatpush1.msra.mxu0 0.0
        %2375 = vmatprep.subr.mxu0 0.0
        %2376 = vmatpush1.msra.mxu0 0.0
        %2377 = vmatprep.subr.mxu0 0.0
        %2378 = vmatpush1.msra.mxu0 0.0
        %2379 = vmatprep.subr.mxu0 0.0
        %2380 = vmatpush1.msra.mxu0 0.0
        %2381 = vmatprep.subr.mxu0 0.0
        %2382 = vmatpush1.msra.mxu0 0.0
        %2383 = vmatprep.subr.mxu0 0.0
        %2384 = vmatpush1.msra.mxu0 0.0
        %2385 = vmatprep.subr.mxu0 0.0
        %2386 = vmatpush1.msra.mxu0 0.0
        %2387 = vmatprep.subr.mxu0 0.0
        %2388 = vmatpush1.msra.mxu0 0.0
        %2389 = vmatprep.mubr.f32.mxu0 0.0
        %2390 = vmatmul.mubr.f32.gmra.mrb[0].mxu0 %v2323
        %v2391 = vpop.f32.mrb[0].mxu0
        %v2392 = vadd.f32 0.0, %v2391
        %v2393 = vpop.f32.mrb[0].mxu0
        %2394 = vdwg.mxu0
        %v2396 = vrot.slane %v2392, 1
        %v2398 = vadd.f32 %v1534, %v2396
        %v2399 = vxor.u32 %v2398, 2147483648
        %v2400 = vmul.f32 %v2399, 1.442695
        %v2401 = vpow.pop %v2400
        %v2402 = vadd.f32 %v2401, 1.0
        %v2403 = vrcp.pop %v2402
        %v2404 = vmul.f32 1.0, %v2403
        %v2405 = vtanh.pop %v2398
        %v2407 = vrot.slane %v2307, 7
        %v2409 = vmul.f32 %v2404, %v2407
        %2411 = vrot.lane.b32.xlu0 %v2405, 64
        %v2412 = vpop.permute.xlu0 %2411
        %v2414 = vmul.f32 %v2404, %v2412
        %2416 = vrot.lane.b32.xlu0 %v2414, 32
        %v2417 = vpop.permute.xlu0 %2416
        %v2419 = vadd.f32 %v2409, %v2417
        %v2420 = vtanh.pop %v2419
        %2422 = vrot.lane.b32.xlu0 %v2420, 64
        %v2423 = vpop.permute.xlu0 %2422
        %v2425 = vmul.f32 %v2404, %v2423
        %2427 = vrot.lane.b32.xlu0 %v2425, 32
        %v2428 = vpop.permute.xlu0 %2427
        %vm2430 = vcmask 261127
        %2431 = vst.msk [vmem:[#allocation3] sm:$0x80] %vm2430, %v2428
        %v2432 = vld [vmem:[#allocation3] sm:$0xff]
        %v2433 = vld [vmem:[%s8] sm:$0xff]
        %v2434 = vld [vmem:[%s8 + $0x8] sm:$0xff]
        %v2435 = vld [vmem:[%s8 + $0x10] sm:$0xff]
        %v2436 = vld [vmem:[%s8 + $0x18] sm:$0xff]
        %v2437 = vld [vmem:[%s9] sm:$0x1]
        %v2439 = vlaneseq
        %v2440 = vshrl.u32 %v2439, 7
        %v2441 = vsub.s32 0, %v2440
        %v2442 = vrot.slane %v2437, %v2441
        %v2445 = vsel %vm611, %v2432, 0
        %2447 = vmatprep.subr.mxu0 0.0
        %2448 = vmatpush1.msra.mxu0 %v2433
        %2449 = vmatprep.subr.mxu0 0.0
        %2450 = vmatpush1.msra.mxu0 %v2434
        %2451 = vmatprep.subr.mxu0 0.0
        %2452 = vmatpush1.msra.mxu0 %v2435
        %2453 = vmatprep.subr.mxu0 0.0
        %2454 = vmatpush1.msra.mxu0 %v2436
        %2455 = vmatprep.subr.mxu0 0.0
        %2456 = vmatpush1.msra.mxu0 0.0
        %2457 = vmatprep.subr.mxu0 0.0
        %2458 = vmatpush1.msra.mxu0 0.0
        %2459 = vmatprep.subr.mxu0 0.0
        %2460 = vmatpush1.msra.mxu0 0.0
        %2461 = vmatprep.subr.mxu0 0.0
        %2462 = vmatpush1.msra.mxu0 0.0
        %2463 = vmatprep.subr.mxu0 0.0
        %2464 = vmatpush1.msra.mxu0 0.0
        %2465 = vmatprep.subr.mxu0 0.0
        %2466 = vmatpush1.msra.mxu0 0.0
        %2467 = vmatprep.subr.mxu0 0.0
        %2468 = vmatpush1.msra.mxu0 0.0
        %2469 = vmatprep.subr.mxu0 0.0
        %2470 = vmatpush1.msra.mxu0 0.0
        %2471 = vmatprep.subr.mxu0 0.0
        %2472 = vmatpush1.msra.mxu0 0.0
        %2473 = vmatprep.subr.mxu0 0.0
        %2474 = vmatpush1.msra.mxu0 0.0
        %2475 = vmatprep.subr.mxu0 0.0
        %2476 = vmatpush1.msra.mxu0 0.0
        %2477 = vmatprep.subr.mxu0 0.0
        %2478 = vmatpush1.msra.mxu0 0.0
        %2479 = vmatprep.subr.mxu0 0.0
        %2480 = vmatpush1.msra.mxu0 0.0
        %2481 = vmatprep.subr.mxu0 0.0
        %2482 = vmatpush1.msra.mxu0 0.0
        %2483 = vmatprep.subr.mxu0 0.0
        %2484 = vmatpush1.msra.mxu0 0.0
        %2485 = vmatprep.subr.mxu0 0.0
        %2486 = vmatpush1.msra.mxu0 0.0
        %2487 = vmatprep.subr.mxu0 0.0
        %2488 = vmatpush1.msra.mxu0 0.0
        %2489 = vmatprep.subr.mxu0 0.0
        %2490 = vmatpush1.msra.mxu0 0.0
        %2491 = vmatprep.subr.mxu0 0.0
        %2492 = vmatpush1.msra.mxu0 0.0
        %2493 = vmatprep.subr.mxu0 0.0
        %2494 = vmatpush1.msra.mxu0 0.0
        %2495 = vmatprep.subr.mxu0 0.0
        %2496 = vmatpush1.msra.mxu0 0.0
        %2497 = vmatprep.subr.mxu0 0.0
        %2498 = vmatpush1.msra.mxu0 0.0
        %2499 = vmatprep.subr.mxu0 0.0
        %2500 = vmatpush1.msra.mxu0 0.0
        %2501 = vmatprep.subr.mxu0 0.0
        %2502 = vmatpush1.msra.mxu0 0.0
        %2503 = vmatprep.subr.mxu0 0.0
        %2504 = vmatpush1.msra.mxu0 0.0
        %2505 = vmatprep.subr.mxu0 0.0
        %2506 = vmatpush1.msra.mxu0 0.0
        %2507 = vmatprep.subr.mxu0 0.0
        %2508 = vmatpush1.msra.mxu0 0.0
        %2509 = vmatprep.subr.mxu0 0.0
        %2510 = vmatpush1.msra.mxu0 0.0
        %2511 = vmatprep.mubr.f32.mxu0 0.0
        %2512 = vmatmul.mubr.f32.gmra.mrb[0].mxu0 %v2445
        %v2513 = vpop.f32.mrb[0].mxu0
        %v2514 = vadd.f32 %v2442, %v2513
        %v2515 = vpop.f32.mrb[0].mxu0
        %2516 = vdwg.mxu0
        %v2517 = vld [vmem:[#allocation12] sm:$0xff]
        %v2518 = vld [vmem:[#allocation12 + $0x8] sm:$0xff]
        %v2519 = vld [vmem:[#allocation12 + $0x10] sm:$0xff]
        %v2520 = vld [vmem:[#allocation12 + $0x18] sm:$0xff]
        %2522 = vrot.lane.b32.xlu0 %v2514, 96
        %v2523 = vpop.permute.xlu0 %2522
        %vm2524 = vcmask 64512
        %v2525 = vsel %vm2524, %v2514, 0
        %v2527 = vsel %vm2524, %v2523, 0
        %2529 = vmatprep.subr.mxu0 0.0
        %2530 = vmatpush1.xpose.msra.mxu0 %v2527
        %2531 = vmatprep.subr.mxu0 0.0
        %2532 = vmatpush1.xpose.msra.mxu0 0.0
        %2533 = vmatprep.subr.mxu0 0.0
        %2534 = vmatpush1.xpose.msra.mxu0 0.0
        %2535 = vmatprep.subr.mxu0 0.0
        %2536 = vmatpush1.xpose.msra.mxu0 0.0
        %2537 = vmatprep.subr.mxu0 0.0
        %2538 = vmatpush1.xpose.msra.mxu0 0.0
        %2539 = vmatprep.subr.mxu0 0.0
        %2540 = vmatpush1.xpose.msra.mxu0 0.0
        %2541 = vmatprep.subr.mxu0 0.0
        %2542 = vmatpush1.xpose.msra.mxu0 0.0
        %2543 = vmatprep.subr.mxu0 0.0
        %2544 = vmatpush1.xpose.msra.mxu0 0.0
        %2545 = vmatprep.subr.mxu0 0.0
        %2546 = vmatpush1.xpose.msra.mxu0 0.0
        %2547 = vmatprep.subr.mxu0 0.0
        %2548 = vmatpush1.xpose.msra.mxu0 0.0
        %2549 = vmatprep.subr.mxu0 0.0
        %2550 = vmatpush1.xpose.msra.mxu0 0.0
        %2551 = vmatprep.subr.mxu0 0.0
        %2552 = vmatpush1.xpose.msra.mxu0 0.0
        %2553 = vmatprep.subr.mxu0 0.0
        %2554 = vmatpush1.xpose.msra.mxu0 0.0
        %2555 = vmatprep.subr.mxu0 0.0
        %2556 = vmatpush1.xpose.msra.mxu0 0.0
        %2557 = vmatprep.subr.mxu0 0.0
        %2558 = vmatpush1.xpose.msra.mxu0 0.0
        %2559 = vmatprep.subr.mxu0 0.0
        %2560 = vmatpush1.xpose.msra.mxu0 0.0
        %2561 = vmatprep.subr.mxu0 0.0
        %2562 = vmatpush1.xpose.msra.mxu0 0.0
        %2563 = vmatprep.subr.mxu0 0.0
        %2564 = vmatpush1.xpose.msra.mxu0 0.0
        %2565 = vmatprep.subr.mxu0 0.0
        %2566 = vmatpush1.xpose.msra.mxu0 0.0
        %2567 = vmatprep.subr.mxu0 0.0
        %2568 = vmatpush1.xpose.msra.mxu0 0.0
        %2569 = vmatprep.subr.mxu0 0.0
        %2570 = vmatpush1.xpose.msra.mxu0 0.0
        %2571 = vmatprep.subr.mxu0 0.0
        %2572 = vmatpush1.xpose.msra.mxu0 0.0
        %2573 = vmatprep.subr.mxu0 0.0
        %2574 = vmatpush1.xpose.msra.mxu0 0.0
        %2575 = vmatprep.subr.mxu0 0.0
        %2576 = vmatpush1.xpose.msra.mxu0 0.0
        %2577 = vmatprep.subr.mxu0 0.0
        %2578 = vmatpush1.xpose.msra.mxu0 0.0
        %2579 = vmatprep.subr.mxu0 0.0
        %2580 = vmatpush1.xpose.msra.mxu0 0.0
        %2581 = vmatprep.subr.mxu0 0.0
        %2582 = vmatpush1.xpose.msra.mxu0 0.0
        %2583 = vmatprep.subr.mxu0 0.0
        %2584 = vmatpush1.xpose.msra.mxu0 0.0
        %2585 = vmatprep.subr.mxu0 0.0
        %2586 = vmatpush1.xpose.msra.mxu0 0.0
        %2587 = vmatprep.subr.mxu0 0.0
        %2588 = vmatpush1.xpose.msra.mxu0 0.0
        %2589 = vmatprep.subr.mxu0 0.0
        %2590 = vmatpush1.xpose.msra.mxu0 0.0
        %2591 = vmatprep.subr.mxu0 0.0
        %2592 = vmatpush1.xpose.msra.mxu0 0.0
        %2593 = vmatprep.mubr.f32.mxu0 0.0
        %2594 = vmatmul.mubr.f32.gmra.mrb[0].mxu0 %v2525
        %v2595 = vpop.f32.mrb[0].mxu0
        %v2596 = vadd.f32 0.0, %v2595
        %v2597 = vpop.f32.mrb[0].mxu0
        %2598 = vdwg.mxu0
        %v2599 = vmul.f32 %v2596, 0.35355338
        %v2600 = vsel %vm2524, %v2599, -inf
        %2601 = vmax.xlane.f32.xlu0 %v2600
        %v2602 = vpop.xlane.xlu0 %2601
        %v2603 = vsub.f32 %v2599, %v2602
        %v2604 = vmul.f32 %v2603, 1.442695
        %v2605 = vpow.pop %v2604
        %v2606 = vsel %vm2524, %v2605, 0.0
        %2607 = vadd.xlane.f32.xlu0 %v2606
        %v2608 = vpop.xlane.xlu0 %2607
        %v2609 = vrcp.pop %v2608
        %v2610 = vmul.f32 %v2605, %v2609
        %2611 = vrot.lane.b32.xlu0 %v2514, 64
        %v2612 = vpop.permute.xlu0 %2611
        %v2615 = vsel %vm2524, %v2610, 0
        %2617 = vmatprep.subr.mxu0 0.0
        %2618 = vmatpush1.msra.mxu0 %v2612
        %2619 = vmatprep.subr.mxu0 0.0
        %2620 = vmatpush1.msra.mxu0 0.0
        %2621 = vmatprep.subr.mxu0 0.0
        %2622 = vmatpush1.msra.mxu0 0.0
        %2623 = vmatprep.subr.mxu0 0.0
        %2624 = vmatpush1.msra.mxu0 0.0
        %2625 = vmatprep.subr.mxu0 0.0
        %2626 = vmatpush1.msra.mxu0 0.0
        %2627 = vmatprep.subr.mxu0 0.0
        %2628 = vmatpush1.msra.mxu0 0.0
        %2629 = vmatprep.subr.mxu0 0.0
        %2630 = vmatpush1.msra.mxu0 0.0
        %2631 = vmatprep.subr.mxu0 0.0
        %2632 = vmatpush1.msra.mxu0 0.0
        %2633 = vmatprep.subr.mxu0 0.0
        %2634 = vmatpush1.msra.mxu0 0.0
        %2635 = vmatprep.subr.mxu0 0.0
        %2636 = vmatpush1.msra.mxu0 0.0
        %2637 = vmatprep.subr.mxu0 0.0
        %2638 = vmatpush1.msra.mxu0 0.0
        %2639 = vmatprep.subr.mxu0 0.0
        %2640 = vmatpush1.msra.mxu0 0.0
        %2641 = vmatprep.subr.mxu0 0.0
        %2642 = vmatpush1.msra.mxu0 0.0
        %2643 = vmatprep.subr.mxu0 0.0
        %2644 = vmatpush1.msra.mxu0 0.0
        %2645 = vmatprep.subr.mxu0 0.0
        %2646 = vmatpush1.msra.mxu0 0.0
        %2647 = vmatprep.subr.mxu0 0.0
        %2648 = vmatpush1.msra.mxu0 0.0
        %2649 = vmatprep.subr.mxu0 0.0
        %2650 = vmatpush1.msra.mxu0 0.0
        %2651 = vmatprep.subr.mxu0 0.0
        %2652 = vmatpush1.msra.mxu0 0.0
        %2653 = vmatprep.subr.mxu0 0.0
        %2654 = vmatpush1.msra.mxu0 0.0
        %2655 = vmatprep.subr.mxu0 0.0
        %2656 = vmatpush1.msra.mxu0 0.0
        %2657 = vmatprep.subr.mxu0 0.0
        %2658 = vmatpush1.msra.mxu0 0.0
        %2659 = vmatprep.subr.mxu0 0.0
        %2660 = vmatpush1.msra.mxu0 0.0
        %2661 = vmatprep.subr.mxu0 0.0
        %2662 = vmatpush1.msra.mxu0 0.0
        %2663 = vmatprep.subr.mxu0 0.0
        %2664 = vmatpush1.msra.mxu0 0.0
        %2665 = vmatprep.subr.mxu0 0.0
        %2666 = vmatpush1.msra.mxu0 0.0
        %2667 = vmatprep.subr.mxu0 0.0
        %2668 = vmatpush1.msra.mxu0 0.0
        %2669 = vmatprep.subr.mxu0 0.0
        %2670 = vmatpush1.msra.mxu0 0.0
        %2671 = vmatprep.subr.mxu0 0.0
        %2672 = vmatpush1.msra.mxu0 0.0
        %2673 = vmatprep.subr.mxu0 0.0
        %2674 = vmatpush1.msra.mxu0 0.0
        %2675 = vmatprep.subr.mxu0 0.0
        %2676 = vmatpush1.msra.mxu0 0.0
        %2677 = vmatprep.subr.mxu0 0.0
        %2678 = vmatpush1.msra.mxu0 0.0
        %2679 = vmatprep.subr.mxu0 0.0
        %2680 = vmatpush1.msra.mxu0 0.0
        %2681 = vmatprep.mubr.f32.mxu0 0.0
        %2682 = vmatmul.mubr.f32.gmra.mrb[0].mxu0 %v2615
        %v2683 = vpop.f32.mrb[0].mxu0
        %v2684 = vadd.f32 0.0, %v2683
        %v2685 = vpop.f32.mrb[0].mxu0
        %2686 = vdwg.mxu0
        %2687 = vrot.lane.b32.xlu0 %v2514, 120
        %v2688 = vpop.permute.xlu0 %2687
        %2689 = vrot.lane.b32.xlu0 %v2514, 88
        %v2690 = vpop.permute.xlu0 %2689
        %v2691 = vsel %vm2524, %v2688, 0
        %v2693 = vsel %vm2524, %v2690, 0
        %2695 = vmatprep.subr.mxu0 0.0
        %2696 = vmatpush1.xpose.msra.mxu0 %v2693
        %2697 = vmatprep.subr.mxu0 0.0
        %2698 = vmatpush1.xpose.msra.mxu0 0.0
        %2699 = vmatprep.subr.mxu0 0.0
        %2700 = vmatpush1.xpose.msra.mxu0 0.0
        %2701 = vmatprep.subr.mxu0 0.0
        %2702 = vmatpush1.xpose.msra.mxu0 0.0
        %2703 = vmatprep.subr.mxu0 0.0
        %2704 = vmatpush1.xpose.msra.mxu0 0.0
        %2705 = vmatprep.subr.mxu0 0.0
        %2706 = vmatpush1.xpose.msra.mxu0 0.0
        %2707 = vmatprep.subr.mxu0 0.0
        %2708 = vmatpush1.xpose.msra.mxu0 0.0
        %2709 = vmatprep.subr.mxu0 0.0
        %2710 = vmatpush1.xpose.msra.mxu0 0.0
        %2711 = vmatprep.subr.mxu0 0.0
        %2712 = vmatpush1.xpose.msra.mxu0 0.0
        %2713 = vmatprep.subr.mxu0 0.0
        %2714 = vmatpush1.xpose.msra.mxu0 0.0
        %2715 = vmatprep.subr.mxu0 0.0
        %2716 = vmatpush1.xpose.msra.mxu0 0.0
        %2717 = vmatprep.subr.mxu0 0.0
        %2718 = vmatpush1.xpose.msra.mxu0 0.0
        %2719 = vmatprep.subr.mxu0 0.0
        %2720 = vmatpush1.xpose.msra.mxu0 0.0
        %2721 = vmatprep.subr.mxu0 0.0
        %2722 = vmatpush1.xpose.msra.mxu0 0.0
        %2723 = vmatprep.subr.mxu0 0.0
        %2724 = vmatpush1.xpose.msra.mxu0 0.0
        %2725 = vmatprep.subr.mxu0 0.0
        %2726 = vmatpush1.xpose.msra.mxu0 0.0
        %2727 = vmatprep.subr.mxu0 0.0
        %2728 = vmatpush1.xpose.msra.mxu0 0.0
        %2729 = vmatprep.subr.mxu0 0.0
        %2730 = vmatpush1.xpose.msra.mxu0 0.0
        %2731 = vmatprep.subr.mxu0 0.0
        %2732 = vmatpush1.xpose.msra.mxu0 0.0
        %2733 = vmatprep.subr.mxu0 0.0
        %2734 = vmatpush1.xpose.msra.mxu0 0.0
        %2735 = vmatprep.subr.mxu0 0.0
        %2736 = vmatpush1.xpose.msra.mxu0 0.0
        %2737 = vmatprep.subr.mxu0 0.0
        %2738 = vmatpush1.xpose.msra.mxu0 0.0
        %2739 = vmatprep.subr.mxu0 0.0
        %2740 = vmatpush1.xpose.msra.mxu0 0.0
        %2741 = vmatprep.subr.mxu0 0.0
        %2742 = vmatpush1.xpose.msra.mxu0 0.0
        %2743 = vmatprep.subr.mxu0 0.0
        %2744 = vmatpush1.xpose.msra.mxu0 0.0
        %2745 = vmatprep.subr.mxu0 0.0
        %2746 = vmatpush1.xpose.msra.mxu0 0.0
        %2747 = vmatprep.subr.mxu0 0.0
        %2748 = vmatpush1.xpose.msra.mxu0 0.0
        %2749 = vmatprep.subr.mxu0 0.0
        %2750 = vmatpush1.xpose.msra.mxu0 0.0
        %2751 = vmatprep.subr.mxu0 0.0
        %2752 = vmatpush1.xpose.msra.mxu0 0.0
        %2753 = vmatprep.subr.mxu0 0.0
        %2754 = vmatpush1.xpose.msra.mxu0 0.0
        %2755 = vmatprep.subr.mxu0 0.0
        %2756 = vmatpush1.xpose.msra.mxu0 0.0
        %2757 = vmatprep.subr.mxu0 0.0
        %2758 = vmatpush1.xpose.msra.mxu0 0.0
        %2759 = vmatprep.mubr.f32.mxu0 0.0
        %2760 = vmatmul.mubr.f32.gmra.mrb[0].mxu0 %v2691
        %v2761 = vpop.f32.mrb[0].mxu0
        %v2762 = vadd.f32 0.0, %v2761
        %v2763 = vpop.f32.mrb[0].mxu0
        %2764 = vdwg.mxu0
        %v2765 = vmul.f32 %v2762, 0.35355338
        %v2766 = vsel %vm2524, %v2765, -inf
        %2767 = vmax.xlane.f32.xlu0 %v2766
        %v2768 = vpop.xlane.xlu0 %2767
        %v2769 = vsub.f32 %v2765, %v2768
        %v2770 = vmul.f32 %v2769, 1.442695
        %v2771 = vpow.pop %v2770
        %v2772 = vsel %vm2524, %v2771, 0.0
        %2773 = vadd.xlane.f32.xlu0 %v2772
        %v2774 = vpop.xlane.xlu0 %2773
        %v2775 = vrcp.pop %v2774
        %v2776 = vmul.f32 %v2771, %v2775
        %2777 = vrot.lane.b32.xlu0 %v2514, 56
        %v2778 = vpop.permute.xlu0 %2777
        %v2781 = vsel %vm2524, %v2776, 0
        %2783 = vmatprep.subr.mxu0 0.0
        %2784 = vmatpush1.msra.mxu0 %v2778
        %2785 = vmatprep.subr.mxu0 0.0
        %2786 = vmatpush1.msra.mxu0 0.0
        %2787 = vmatprep.subr.mxu0 0.0
        %2788 = vmatpush1.msra.mxu0 0.0
        %2789 = vmatprep.subr.mxu0 0.0
        %2790 = vmatpush1.msra.mxu0 0.0
        %2791 = vmatprep.subr.mxu0 0.0
        %2792 = vmatpush1.msra.mxu0 0.0
        %2793 = vmatprep.subr.mxu0 0.0
        %2794 = vmatpush1.msra.mxu0 0.0
        %2795 = vmatprep.subr.mxu0 0.0
        %2796 = vmatpush1.msra.mxu0 0.0
        %2797 = vmatprep.subr.mxu0 0.0
        %2798 = vmatpush1.msra.mxu0 0.0
        %2799 = vmatprep.subr.mxu0 0.0
        %2800 = vmatpush1.msra.mxu0 0.0
        %2801 = vmatprep.subr.mxu0 0.0
        %2802 = vmatpush1.msra.mxu0 0.0
        %2803 = vmatprep.subr.mxu0 0.0
        %2804 = vmatpush1.msra.mxu0 0.0
        %2805 = vmatprep.subr.mxu0 0.0
        %2806 = vmatpush1.msra.mxu0 0.0
        %2807 = vmatprep.subr.mxu0 0.0
        %2808 = vmatpush1.msra.mxu0 0.0
        %2809 = vmatprep.subr.mxu0 0.0
        %2810 = vmatpush1.msra.mxu0 0.0
        %2811 = vmatprep.subr.mxu0 0.0
        %2812 = vmatpush1.msra.mxu0 0.0
        %2813 = vmatprep.subr.mxu0 0.0
        %2814 = vmatpush1.msra.mxu0 0.0
        %2815 = vmatprep.subr.mxu0 0.0
        %2816 = vmatpush1.msra.mxu0 0.0
        %2817 = vmatprep.subr.mxu0 0.0
        %2818 = vmatpush1.msra.mxu0 0.0
        %2819 = vmatprep.subr.mxu0 0.0
        %2820 = vmatpush1.msra.mxu0 0.0
        %2821 = vmatprep.subr.mxu0 0.0
        %2822 = vmatpush1.msra.mxu0 0.0
        %2823 = vmatprep.subr.mxu0 0.0
        %2824 = vmatpush1.msra.mxu0 0.0
        %2825 = vmatprep.subr.mxu0 0.0
        %2826 = vmatpush1.msra.mxu0 0.0
        %2827 = vmatprep.subr.mxu0 0.0
        %2828 = vmatpush1.msra.mxu0 0.0
        %2829 = vmatprep.subr.mxu0 0.0
        %2830 = vmatpush1.msra.mxu0 0.0
        %2831 = vmatprep.subr.mxu0 0.0
        %2832 = vmatpush1.msra.mxu0 0.0
        %2833 = vmatprep.subr.mxu0 0.0
        %2834 = vmatpush1.msra.mxu0 0.0
        %2835 = vmatprep.subr.mxu0 0.0
        %2836 = vmatpush1.msra.mxu0 0.0
        %2837 = vmatprep.subr.mxu0 0.0
        %2838 = vmatpush1.msra.mxu0 0.0
        %2839 = vmatprep.subr.mxu0 0.0
        %2840 = vmatpush1.msra.mxu0 0.0
        %2841 = vmatprep.subr.mxu0 0.0
        %2842 = vmatpush1.msra.mxu0 0.0
        %2843 = vmatprep.subr.mxu0 0.0
        %2844 = vmatpush1.msra.mxu0 0.0
        %2845 = vmatprep.subr.mxu0 0.0
        %2846 = vmatpush1.msra.mxu0 0.0
        %2847 = vmatprep.mubr.f32.mxu0 0.0
        %2848 = vmatmul.mubr.f32.gmra.mrb[0].mxu0 %v2781
        %v2849 = vpop.f32.mrb[0].mxu0
        %v2850 = vadd.f32 0.0, %v2849
        %v2851 = vpop.f32.mrb[0].mxu0
        %2852 = vdwg.mxu0
        %v2854 = vsel %vm2524, %v2850, 0
        %2856 = vmatprep.subr.mxu0 0.0
        %2857 = vmatpush1.msra.mxu0 %v2518
        %2858 = vmatprep.subr.mxu0 0.0
        %2859 = vmatpush1.msra.mxu0 0.0
        %2860 = vmatprep.subr.mxu0 0.0
        %2861 = vmatpush1.msra.mxu0 0.0
        %2862 = vmatprep.subr.mxu0 0.0
        %2863 = vmatpush1.msra.mxu0 0.0
        %2864 = vmatprep.subr.mxu0 0.0
        %2865 = vmatpush1.msra.mxu0 0.0
        %2866 = vmatprep.subr.mxu0 0.0
        %2867 = vmatpush1.msra.mxu0 0.0
        %2868 = vmatprep.subr.mxu0 0.0
        %2869 = vmatpush1.msra.mxu0 0.0
        %2870 = vmatprep.subr.mxu0 0.0
        %2871 = vmatpush1.msra.mxu0 0.0
        %2872 = vmatprep.subr.mxu0 0.0
        %2873 = vmatpush1.msra.mxu0 0.0
        %2874 = vmatprep.subr.mxu0 0.0
        %2875 = vmatpush1.msra.mxu0 0.0
        %2876 = vmatprep.subr.mxu0 0.0
        %2877 = vmatpush1.msra.mxu0 0.0
        %2878 = vmatprep.subr.mxu0 0.0
        %2879 = vmatpush1.msra.mxu0 0.0
        %2880 = vmatprep.subr.mxu0 0.0
        %2881 = vmatpush1.msra.mxu0 0.0
        %2882 = vmatprep.subr.mxu0 0.0
        %2883 = vmatpush1.msra.mxu0 0.0
        %2884 = vmatprep.subr.mxu0 0.0
        %2885 = vmatpush1.msra.mxu0 0.0
        %2886 = vmatprep.subr.mxu0 0.0
        %2887 = vmatpush1.msra.mxu0 0.0
        %2888 = vmatprep.subr.mxu0 0.0
        %2889 = vmatpush1.msra.mxu0 0.0
        %2890 = vmatprep.subr.mxu0 0.0
        %2891 = vmatpush1.msra.mxu0 0.0
        %2892 = vmatprep.subr.mxu0 0.0
        %2893 = vmatpush1.msra.mxu0 0.0
        %2894 = vmatprep.subr.mxu0 0.0
        %2895 = vmatpush1.msra.mxu0 0.0
        %2896 = vmatprep.subr.mxu0 0.0
        %2897 = vmatpush1.msra.mxu0 0.0
        %2898 = vmatprep.subr.mxu0 0.0
        %2899 = vmatpush1.msra.mxu0 0.0
        %2900 = vmatprep.subr.mxu0 0.0
        %2901 = vmatpush1.msra.mxu0 0.0
        %2902 = vmatprep.subr.mxu0 0.0
        %2903 = vmatpush1.msra.mxu0 0.0
        %2904 = vmatprep.subr.mxu0 0.0
        %2905 = vmatpush1.msra.mxu0 0.0
        %2906 = vmatprep.subr.mxu0 0.0
        %2907 = vmatpush1.msra.mxu0 0.0
        %2908 = vmatprep.subr.mxu0 0.0
        %2909 = vmatpush1.msra.mxu0 0.0
        %2910 = vmatprep.subr.mxu0 0.0
        %2911 = vmatpush1.msra.mxu0 0.0
        %2912 = vmatprep.subr.mxu0 0.0
        %2913 = vmatpush1.msra.mxu0 0.0
        %2914 = vmatprep.subr.mxu0 0.0
        %2915 = vmatpush1.msra.mxu0 0.0
        %2916 = vmatprep.subr.mxu0 0.0
        %2917 = vmatpush1.msra.mxu0 0.0
        %2918 = vmatprep.subr.mxu0 0.0
        %2919 = vmatpush1.msra.mxu0 0.0
        %2920 = vmatprep.mubr.f32.mxu0 0.0
        %2921 = vmatmul.mubr.f32.gmra.mrb[0].mxu0 %v2854
        %v2922 = vpop.f32.mrb[0].mxu0
        %v2923 = vadd.f32 0.0, %v2922
        %v2924 = vpop.f32.mrb[0].mxu0
        %2925 = vdwg.mxu0
        %v2927 = vsel %vm2524, %v2684, 0
        %2929 = vmatprep.subr.mxu0 0.0
        %2930 = vmatpush1.msra.mxu0 %v2517
        %2931 = vmatprep.subr.mxu0 0.0
        %2932 = vmatpush1.msra.mxu0 0.0
        %2933 = vmatprep.subr.mxu0 0.0
        %2934 = vmatpush1.msra.mxu0 0.0
        %2935 = vmatprep.subr.mxu0 0.0
        %2936 = vmatpush1.msra.mxu0 0.0
        %2937 = vmatprep.subr.mxu0 0.0
        %2938 = vmatpush1.msra.mxu0 0.0
        %2939 = vmatprep.subr.mxu0 0.0
        %2940 = vmatpush1.msra.mxu0 0.0
        %2941 = vmatprep.subr.mxu0 0.0
        %2942 = vmatpush1.msra.mxu0 0.0
        %2943 = vmatprep.subr.mxu0 0.0
        %2944 = vmatpush1.msra.mxu0 0.0
        %2945 = vmatprep.subr.mxu0 0.0
        %2946 = vmatpush1.msra.mxu0 0.0
        %2947 = vmatprep.subr.mxu0 0.0
        %2948 = vmatpush1.msra.mxu0 0.0
        %2949 = vmatprep.subr.mxu0 0.0
        %2950 = vmatpush1.msra.mxu0 0.0
        %2951 = vmatprep.subr.mxu0 0.0
        %2952 = vmatpush1.msra.mxu0 0.0
        %2953 = vmatprep.subr.mxu0 0.0
        %2954 = vmatpush1.msra.mxu0 0.0
        %2955 = vmatprep.subr.mxu0 0.0
        %2956 = vmatpush1.msra.mxu0 0.0
        %2957 = vmatprep.subr.mxu0 0.0
        %2958 = vmatpush1.msra.mxu0 0.0
        %2959 = vmatprep.subr.mxu0 0.0
        %2960 = vmatpush1.msra.mxu0 0.0
        %2961 = vmatprep.subr.mxu0 0.0
        %2962 = vmatpush1.msra.mxu0 0.0
        %2963 = vmatprep.subr.mxu0 0.0
        %2964 = vmatpush1.msra.mxu0 0.0
        %2965 = vmatprep.subr.mxu0 0.0
        %2966 = vmatpush1.msra.mxu0 0.0
        %2967 = vmatprep.subr.mxu0 0.0
        %2968 = vmatpush1.msra.mxu0 0.0
        %2969 = vmatprep.subr.mxu0 0.0
        %2970 = vmatpush1.msra.mxu0 0.0
        %2971 = vmatprep.subr.mxu0 0.0
        %2972 = vmatpush1.msra.mxu0 0.0
        %2973 = vmatprep.subr.mxu0 0.0
        %2974 = vmatpush1.msra.mxu0 0.0
        %2975 = vmatprep.subr.mxu0 0.0
        %2976 = vmatpush1.msra.mxu0 0.0
        %2977 = vmatprep.subr.mxu0 0.0
        %2978 = vmatpush1.msra.mxu0 0.0
        %2979 = vmatprep.subr.mxu0 0.0
        %2980 = vmatpush1.msra.mxu0 0.0
        %2981 = vmatprep.subr.mxu0 0.0
        %2982 = vmatpush1.msra.mxu0 0.0
        %2983 = vmatprep.subr.mxu0 0.0
        %2984 = vmatpush1.msra.mxu0 0.0
        %2985 = vmatprep.subr.mxu0 0.0
        %2986 = vmatpush1.msra.mxu0 0.0
        %2987 = vmatprep.subr.mxu0 0.0
        %2988 = vmatpush1.msra.mxu0 0.0
        %2989 = vmatprep.subr.mxu0 0.0
        %2990 = vmatpush1.msra.mxu0 0.0
        %2991 = vmatprep.subr.mxu0 0.0
        %2992 = vmatpush1.msra.mxu0 0.0
        %2993 = vmatprep.mubr.f32.mxu0 0.0
        %2994 = vmatmul.mubr.f32.gmra.mrb[0].mxu0 %v2927
        %v2995 = vpop.f32.mrb[0].mxu0
        %v2996 = vadd.f32 %v2923, %v2995
        %v2997 = vpop.f32.mrb[0].mxu0
        %2998 = vdwg.mxu0
        %2999 = vrot.lane.b32.xlu0 %v2514, 112
        %v3000 = vpop.permute.xlu0 %2999
        %3001 = vrot.lane.b32.xlu0 %v2514, 80
        %v3002 = vpop.permute.xlu0 %3001
        %v3003 = vsel %vm2524, %v3000, 0
        %v3005 = vsel %vm2524, %v3002, 0
        %3007 = vmatprep.subr.mxu0 0.0
        %3008 = vmatpush1.xpose.msra.mxu0 %v3005
        %3009 = vmatprep.subr.mxu0 0.0
        %3010 = vmatpush1.xpose.msra.mxu0 0.0
        %3011 = vmatprep.subr.mxu0 0.0
        %3012 = vmatpush1.xpose.msra.mxu0 0.0
        %3013 = vmatprep.subr.mxu0 0.0
        %3014 = vmatpush1.xpose.msra.mxu0 0.0
        %3015 = vmatprep.subr.mxu0 0.0
        %3016 = vmatpush1.xpose.msra.mxu0 0.0
        %3017 = vmatprep.subr.mxu0 0.0
        %3018 = vmatpush1.xpose.msra.mxu0 0.0
        %3019 = vmatprep.subr.mxu0 0.0
        %3020 = vmatpush1.xpose.msra.mxu0 0.0
        %3021 = vmatprep.subr.mxu0 0.0
        %3022 = vmatpush1.xpose.msra.mxu0 0.0
        %3023 = vmatprep.subr.mxu0 0.0
        %3024 = vmatpush1.xpose.msra.mxu0 0.0
        %3025 = vmatprep.subr.mxu0 0.0
        %3026 = vmatpush1.xpose.msra.mxu0 0.0
        %3027 = vmatprep.subr.mxu0 0.0
        %3028 = vmatpush1.xpose.msra.mxu0 0.0
        %3029 = vmatprep.subr.mxu0 0.0
        %3030 = vmatpush1.xpose.msra.mxu0 0.0
        %3031 = vmatprep.subr.mxu0 0.0
        %3032 = vmatpush1.xpose.msra.mxu0 0.0
        %3033 = vmatprep.subr.mxu0 0.0
        %3034 = vmatpush1.xpose.msra.mxu0 0.0
        %3035 = vmatprep.subr.mxu0 0.0
        %3036 = vmatpush1.xpose.msra.mxu0 0.0
        %3037 = vmatprep.subr.mxu0 0.0
        %3038 = vmatpush1.xpose.msra.mxu0 0.0
        %3039 = vmatprep.subr.mxu0 0.0
        %3040 = vmatpush1.xpose.msra.mxu0 0.0
        %3041 = vmatprep.subr.mxu0 0.0
        %3042 = vmatpush1.xpose.msra.mxu0 0.0
        %3043 = vmatprep.subr.mxu0 0.0
        %3044 = vmatpush1.xpose.msra.mxu0 0.0
        %3045 = vmatprep.subr.mxu0 0.0
        %3046 = vmatpush1.xpose.msra.mxu0 0.0
        %3047 = vmatprep.subr.mxu0 0.0
        %3048 = vmatpush1.xpose.msra.mxu0 0.0
        %3049 = vmatprep.subr.mxu0 0.0
        %3050 = vmatpush1.xpose.msra.mxu0 0.0
        %3051 = vmatprep.subr.mxu0 0.0
        %3052 = vmatpush1.xpose.msra.mxu0 0.0
        %3053 = vmatprep.subr.mxu0 0.0
        %3054 = vmatpush1.xpose.msra.mxu0 0.0
        %3055 = vmatprep.subr.mxu0 0.0
        %3056 = vmatpush1.xpose.msra.mxu0 0.0
        %3057 = vmatprep.subr.mxu0 0.0
        %3058 = vmatpush1.xpose.msra.mxu0 0.0
        %3059 = vmatprep.subr.mxu0 0.0
        %3060 = vmatpush1.xpose.msra.mxu0 0.0
        %3061 = vmatprep.subr.mxu0 0.0
        %3062 = vmatpush1.xpose.msra.mxu0 0.0
        %3063 = vmatprep.subr.mxu0 0.0
        %3064 = vmatpush1.xpose.msra.mxu0 0.0
        %3065 = vmatprep.subr.mxu0 0.0
        %3066 = vmatpush1.xpose.msra.mxu0 0.0
        %3067 = vmatprep.subr.mxu0 0.0
        %3068 = vmatpush1.xpose.msra.mxu0 0.0
        %3069 = vmatprep.subr.mxu0 0.0
        %3070 = vmatpush1.xpose.msra.mxu0 0.0
        %3071 = vmatprep.mubr.f32.mxu0 0.0
        %3072 = vmatmul.mubr.f32.gmra.mrb[0].mxu0 %v3003
        %v3073 = vpop.f32.mrb[0].mxu0
        %v3074 = vadd.f32 0.0, %v3073
        %v3075 = vpop.f32.mrb[0].mxu0
        %3076 = vdwg.mxu0
        %v3077 = vmul.f32 %v3074, 0.35355338
        %v3078 = vsel %vm2524, %v3077, -inf
        %3079 = vmax.xlane.f32.xlu0 %v3078
        %v3080 = vpop.xlane.xlu0 %3079
        %v3081 = vsub.f32 %v3077, %v3080
        %v3082 = vmul.f32 %v3081, 1.442695
        %v3083 = vpow.pop %v3082
        %v3084 = vsel %vm2524, %v3083, 0.0
        %3085 = vadd.xlane.f32.xlu0 %v3084
        %v3086 = vpop.xlane.xlu0 %3085
        %v3087 = vrcp.pop %v3086
        %v3088 = vmul.f32 %v3083, %v3087
        %3089 = vrot.lane.b32.xlu0 %v2514, 48
        %v3090 = vpop.permute.xlu0 %3089
        %v3093 = vsel %vm2524, %v3088, 0
        %3095 = vmatprep.subr.mxu0 0.0
        %3096 = vmatpush1.msra.mxu0 %v3090
        %3097 = vmatprep.subr.mxu0 0.0
        %3098 = vmatpush1.msra.mxu0 0.0
        %3099 = vmatprep.subr.mxu0 0.0
        %3100 = vmatpush1.msra.mxu0 0.0
        %3101 = vmatprep.subr.mxu0 0.0
        %3102 = vmatpush1.msra.mxu0 0.0
        %3103 = vmatprep.subr.mxu0 0.0
        %3104 = vmatpush1.msra.mxu0 0.0
        %3105 = vmatprep.subr.mxu0 0.0
        %3106 = vmatpush1.msra.mxu0 0.0
        %3107 = vmatprep.subr.mxu0 0.0
        %3108 = vmatpush1.msra.mxu0 0.0
        %3109 = vmatprep.subr.mxu0 0.0
        %3110 = vmatpush1.msra.mxu0 0.0
        %3111 = vmatprep.subr.mxu0 0.0
        %3112 = vmatpush1.msra.mxu0 0.0
        %3113 = vmatprep.subr.mxu0 0.0
        %3114 = vmatpush1.msra.mxu0 0.0
        %3115 = vmatprep.subr.mxu0 0.0
        %3116 = vmatpush1.msra.mxu0 0.0
        %3117 = vmatprep.subr.mxu0 0.0
        %3118 = vmatpush1.msra.mxu0 0.0
        %3119 = vmatprep.subr.mxu0 0.0
        %3120 = vmatpush1.msra.mxu0 0.0
        %3121 = vmatprep.subr.mxu0 0.0
        %3122 = vmatpush1.msra.mxu0 0.0
        %3123 = vmatprep.subr.mxu0 0.0
        %3124 = vmatpush1.msra.mxu0 0.0
        %3125 = vmatprep.subr.mxu0 0.0
        %3126 = vmatpush1.msra.mxu0 0.0
        %3127 = vmatprep.subr.mxu0 0.0
        %3128 = vmatpush1.msra.mxu0 0.0
        %3129 = vmatprep.subr.mxu0 0.0
        %3130 = vmatpush1.msra.mxu0 0.0
        %3131 = vmatprep.subr.mxu0 0.0
        %3132 = vmatpush1.msra.mxu0 0.0
        %3133 = vmatprep.subr.mxu0 0.0
        %3134 = vmatpush1.msra.mxu0 0.0
        %3135 = vmatprep.subr.mxu0 0.0
        %3136 = vmatpush1.msra.mxu0 0.0
        %3137 = vmatprep.subr.mxu0 0.0
        %3138 = vmatpush1.msra.mxu0 0.0
        %3139 = vmatprep.subr.mxu0 0.0
        %3140 = vmatpush1.msra.mxu0 0.0
        %3141 = vmatprep.subr.mxu0 0.0
        %3142 = vmatpush1.msra.mxu0 0.0
        %3143 = vmatprep.subr.mxu0 0.0
        %3144 = vmatpush1.msra.mxu0 0.0
        %3145 = vmatprep.subr.mxu0 0.0
        %3146 = vmatpush1.msra.mxu0 0.0
        %3147 = vmatprep.subr.mxu0 0.0
        %3148 = vmatpush1.msra.mxu0 0.0
        %3149 = vmatprep.subr.mxu0 0.0
        %3150 = vmatpush1.msra.mxu0 0.0
        %3151 = vmatprep.subr.mxu0 0.0
        %3152 = vmatpush1.msra.mxu0 0.0
        %3153 = vmatprep.subr.mxu0 0.0
        %3154 = vmatpush1.msra.mxu0 0.0
        %3155 = vmatprep.subr.mxu0 0.0
        %3156 = vmatpush1.msra.mxu0 0.0
        %3157 = vmatprep.subr.mxu0 0.0
        %3158 = vmatpush1.msra.mxu0 0.0
        %3159 = vmatprep.mubr.f32.mxu0 0.0
        %3160 = vmatmul.mubr.f32.gmra.mrb[0].mxu0 %v3093
        %v3161 = vpop.f32.mrb[0].mxu0
        %v3162 = vadd.f32 0.0, %v3161
        %v3163 = vpop.f32.mrb[0].mxu0
        %3164 = vdwg.mxu0
        %v3166 = vsel %vm2524, %v3162, 0
        %3168 = vmatprep.subr.mxu0 0.0
        %3169 = vmatpush1.msra.mxu0 %v2519
        %3170 = vmatprep.subr.mxu0 0.0
        %3171 = vmatpush1.msra.mxu0 0.0
        %3172 = vmatprep.subr.mxu0 0.0
        %3173 = vmatpush1.msra.mxu0 0.0
        %3174 = vmatprep.subr.mxu0 0.0
        %3175 = vmatpush1.msra.mxu0 0.0
        %3176 = vmatprep.subr.mxu0 0.0
        %3177 = vmatpush1.msra.mxu0 0.0
        %3178 = vmatprep.subr.mxu0 0.0
        %3179 = vmatpush1.msra.mxu0 0.0
        %3180 = vmatprep.subr.mxu0 0.0
        %3181 = vmatpush1.msra.mxu0 0.0
        %3182 = vmatprep.subr.mxu0 0.0
        %3183 = vmatpush1.msra.mxu0 0.0
        %3184 = vmatprep.subr.mxu0 0.0
        %3185 = vmatpush1.msra.mxu0 0.0
        %3186 = vmatprep.subr.mxu0 0.0
        %3187 = vmatpush1.msra.mxu0 0.0
        %3188 = vmatprep.subr.mxu0 0.0
        %3189 = vmatpush1.msra.mxu0 0.0
        %3190 = vmatprep.subr.mxu0 0.0
        %3191 = vmatpush1.msra.mxu0 0.0
        %3192 = vmatprep.subr.mxu0 0.0
        %3193 = vmatpush1.msra.mxu0 0.0
        %3194 = vmatprep.subr.mxu0 0.0
        %3195 = vmatpush1.msra.mxu0 0.0
        %3196 = vmatprep.subr.mxu0 0.0
        %3197 = vmatpush1.msra.mxu0 0.0
        %3198 = vmatprep.subr.mxu0 0.0
        %3199 = vmatpush1.msra.mxu0 0.0
        %3200 = vmatprep.subr.mxu0 0.0
        %3201 = vmatpush1.msra.mxu0 0.0
        %3202 = vmatprep.subr.mxu0 0.0
        %3203 = vmatpush1.msra.mxu0 0.0
        %3204 = vmatprep.subr.mxu0 0.0
        %3205 = vmatpush1.msra.mxu0 0.0
        %3206 = vmatprep.subr.mxu0 0.0
        %3207 = vmatpush1.msra.mxu0 0.0
        %3208 = vmatprep.subr.mxu0 0.0
        %3209 = vmatpush1.msra.mxu0 0.0
        %3210 = vmatprep.subr.mxu0 0.0
        %3211 = vmatpush1.msra.mxu0 0.0
        %3212 = vmatprep.subr.mxu0 0.0
        %3213 = vmatpush1.msra.mxu0 0.0
        %3214 = vmatprep.subr.mxu0 0.0
        %3215 = vmatpush1.msra.mxu0 0.0
        %3216 = vmatprep.subr.mxu0 0.0
        %3217 = vmatpush1.msra.mxu0 0.0
        %3218 = vmatprep.subr.mxu0 0.0
        %3219 = vmatpush1.msra.mxu0 0.0
        %3220 = vmatprep.subr.mxu0 0.0
        %3221 = vmatpush1.msra.mxu0 0.0
        %3222 = vmatprep.subr.mxu0 0.0
        %3223 = vmatpush1.msra.mxu0 0.0
        %3224 = vmatprep.subr.mxu0 0.0
        %3225 = vmatpush1.msra.mxu0 0.0
        %3226 = vmatprep.subr.mxu0 0.0
        %3227 = vmatpush1.msra.mxu0 0.0
        %3228 = vmatprep.subr.mxu0 0.0
        %3229 = vmatpush1.msra.mxu0 0.0
        %3230 = vmatprep.subr.mxu0 0.0
        %3231 = vmatpush1.msra.mxu0 0.0
        %3232 = vmatprep.mubr.f32.mxu0 0.0
        %3233 = vmatmul.mubr.f32.gmra.mrb[0].mxu0 %v3166
        %v3234 = vpop.f32.mrb[0].mxu0
        %v3235 = vadd.f32 0.0, %v3234
        %v3236 = vpop.f32.mrb[0].mxu0
        %3237 = vdwg.mxu0
        %v3238 = vadd.f32 %v2996, %v3235
        %3239 = vrot.lane.b32.xlu0 %v2514, 104
        %v3240 = vpop.permute.xlu0 %3239
        %3241 = vrot.lane.b32.xlu0 %v2514, 72
        %v3242 = vpop.permute.xlu0 %3241
        %v3243 = vsel %vm2524, %v3240, 0
        %v3245 = vsel %vm2524, %v3242, 0
        %3247 = vmatprep.subr.mxu0 0.0
        %3248 = vmatpush1.xpose.msra.mxu0 %v3245
        %3249 = vmatprep.subr.mxu0 0.0
        %3250 = vmatpush1.xpose.msra.mxu0 0.0
        %3251 = vmatprep.subr.mxu0 0.0
        %3252 = vmatpush1.xpose.msra.mxu0 0.0
        %3253 = vmatprep.subr.mxu0 0.0
        %3254 = vmatpush1.xpose.msra.mxu0 0.0
        %3255 = vmatprep.subr.mxu0 0.0
        %3256 = vmatpush1.xpose.msra.mxu0 0.0
        %3257 = vmatprep.subr.mxu0 0.0
        %3258 = vmatpush1.xpose.msra.mxu0 0.0
        %3259 = vmatprep.subr.mxu0 0.0
        %3260 = vmatpush1.xpose.msra.mxu0 0.0
        %3261 = vmatprep.subr.mxu0 0.0
        %3262 = vmatpush1.xpose.msra.mxu0 0.0
        %3263 = vmatprep.subr.mxu0 0.0
        %3264 = vmatpush1.xpose.msra.mxu0 0.0
        %3265 = vmatprep.subr.mxu0 0.0
        %3266 = vmatpush1.xpose.msra.mxu0 0.0
        %3267 = vmatprep.subr.mxu0 0.0
        %3268 = vmatpush1.xpose.msra.mxu0 0.0
        %3269 = vmatprep.subr.mxu0 0.0
        %3270 = vmatpush1.xpose.msra.mxu0 0.0
        %3271 = vmatprep.subr.mxu0 0.0
        %3272 = vmatpush1.xpose.msra.mxu0 0.0
        %3273 = vmatprep.subr.mxu0 0.0
        %3274 = vmatpush1.xpose.msra.mxu0 0.0
        %3275 = vmatprep.subr.mxu0 0.0
        %3276 = vmatpush1.xpose.msra.mxu0 0.0
        %3277 = vmatprep.subr.mxu0 0.0
        %3278 = vmatpush1.xpose.msra.mxu0 0.0
        %3279 = vmatprep.subr.mxu0 0.0
        %3280 = vmatpush1.xpose.msra.mxu0 0.0
        %3281 = vmatprep.subr.mxu0 0.0
        %3282 = vmatpush1.xpose.msra.mxu0 0.0
        %3283 = vmatprep.subr.mxu0 0.0
        %3284 = vmatpush1.xpose.msra.mxu0 0.0
        %3285 = vmatprep.subr.mxu0 0.0
        %3286 = vmatpush1.xpose.msra.mxu0 0.0
        %3287 = vmatprep.subr.mxu0 0.0
        %3288 = vmatpush1.xpose.msra.mxu0 0.0
        %3289 = vmatprep.subr.mxu0 0.0
        %3290 = vmatpush1.xpose.msra.mxu0 0.0
        %3291 = vmatprep.subr.mxu0 0.0
        %3292 = vmatpush1.xpose.msra.mxu0 0.0
        %3293 = vmatprep.subr.mxu0 0.0
        %3294 = vmatpush1.xpose.msra.mxu0 0.0
        %3295 = vmatprep.subr.mxu0 0.0
        %3296 = vmatpush1.xpose.msra.mxu0 0.0
        %3297 = vmatprep.subr.mxu0 0.0
        %3298 = vmatpush1.xpose.msra.mxu0 0.0
        %3299 = vmatprep.subr.mxu0 0.0
        %3300 = vmatpush1.xpose.msra.mxu0 0.0
        %3301 = vmatprep.subr.mxu0 0.0
        %3302 = vmatpush1.xpose.msra.mxu0 0.0
        %3303 = vmatprep.subr.mxu0 0.0
        %3304 = vmatpush1.xpose.msra.mxu0 0.0
        %3305 = vmatprep.subr.mxu0 0.0
        %3306 = vmatpush1.xpose.msra.mxu0 0.0
        %3307 = vmatprep.subr.mxu0 0.0
        %3308 = vmatpush1.xpose.msra.mxu0 0.0
        %3309 = vmatprep.subr.mxu0 0.0
        %3310 = vmatpush1.xpose.msra.mxu0 0.0
        %3311 = vmatprep.mubr.f32.mxu0 0.0
        %3312 = vmatmul.mubr.f32.gmra.mrb[0].mxu0 %v3243
        %v3313 = vpop.f32.mrb[0].mxu0
        %v3314 = vadd.f32 0.0, %v3313
        %v3315 = vpop.f32.mrb[0].mxu0
        %3316 = vdwg.mxu0
        %v3317 = vmul.f32 %v3314, 0.35355338
        %v3318 = vsel %vm2524, %v3317, -inf
        %3319 = vmax.xlane.f32.xlu0 %v3318
        %v3320 = vpop.xlane.xlu0 %3319
        %v3321 = vsub.f32 %v3317, %v3320
        %v3322 = vmul.f32 %v3321, 1.442695
        %v3323 = vpow.pop %v3322
        %v3324 = vsel %vm2524, %v3323, 0.0
        %3325 = vadd.xlane.f32.xlu0 %v3324
        %v3326 = vpop.xlane.xlu0 %3325
        %v3327 = vrcp.pop %v3326
        %v3328 = vmul.f32 %v3323, %v3327
        %3329 = vrot.lane.b32.xlu0 %v2514, 40
        %v3330 = vpop.permute.xlu0 %3329
        %v3333 = vsel %vm2524, %v3328, 0
        %3335 = vmatprep.subr.mxu0 0.0
        %3336 = vmatpush1.msra.mxu0 %v3330
        %3337 = vmatprep.subr.mxu0 0.0
        %3338 = vmatpush1.msra.mxu0 0.0
        %3339 = vmatprep.subr.mxu0 0.0
        %3340 = vmatpush1.msra.mxu0 0.0
        %3341 = vmatprep.subr.mxu0 0.0
        %3342 = vmatpush1.msra.mxu0 0.0
        %3343 = vmatprep.subr.mxu0 0.0
        %3344 = vmatpush1.msra.mxu0 0.0
        %3345 = vmatprep.subr.mxu0 0.0
        %3346 = vmatpush1.msra.mxu0 0.0
        %3347 = vmatprep.subr.mxu0 0.0
        %3348 = vmatpush1.msra.mxu0 0.0
        %3349 = vmatprep.subr.mxu0 0.0
        %3350 = vmatpush1.msra.mxu0 0.0
        %3351 = vmatprep.subr.mxu0 0.0
        %3352 = vmatpush1.msra.mxu0 0.0
        %3353 = vmatprep.subr.mxu0 0.0
        %3354 = vmatpush1.msra.mxu0 0.0
        %3355 = vmatprep.subr.mxu0 0.0
        %3356 = vmatpush1.msra.mxu0 0.0
        %3357 = vmatprep.subr.mxu0 0.0
        %3358 = vmatpush1.msra.mxu0 0.0
        %3359 = vmatprep.subr.mxu0 0.0
        %3360 = vmatpush1.msra.mxu0 0.0
        %3361 = vmatprep.subr.mxu0 0.0
        %3362 = vmatpush1.msra.mxu0 0.0
        %3363 = vmatprep.subr.mxu0 0.0
        %3364 = vmatpush1.msra.mxu0 0.0
        %3365 = vmatprep.subr.mxu0 0.0
        %3366 = vmatpush1.msra.mxu0 0.0
        %3367 = vmatprep.subr.mxu0 0.0
        %3368 = vmatpush1.msra.mxu0 0.0
        %3369 = vmatprep.subr.mxu0 0.0
        %3370 = vmatpush1.msra.mxu0 0.0
        %3371 = vmatprep.subr.mxu0 0.0
        %3372 = vmatpush1.msra.mxu0 0.0
        %3373 = vmatprep.subr.mxu0 0.0
        %3374 = vmatpush1.msra.mxu0 0.0
        %3375 = vmatprep.subr.mxu0 0.0
        %3376 = vmatpush1.msra.mxu0 0.0
        %3377 = vmatprep.subr.mxu0 0.0
        %3378 = vmatpush1.msra.mxu0 0.0
        %3379 = vmatprep.subr.mxu0 0.0
        %3380 = vmatpush1.msra.mxu0 0.0
        %3381 = vmatprep.subr.mxu0 0.0
        %3382 = vmatpush1.msra.mxu0 0.0
        %3383 = vmatprep.subr.mxu0 0.0
        %3384 = vmatpush1.msra.mxu0 0.0
        %3385 = vmatprep.subr.mxu0 0.0
        %3386 = vmatpush1.msra.mxu0 0.0
        %3387 = vmatprep.subr.mxu0 0.0
        %3388 = vmatpush1.msra.mxu0 0.0
        %3389 = vmatprep.subr.mxu0 0.0
        %3390 = vmatpush1.msra.mxu0 0.0
        %3391 = vmatprep.subr.mxu0 0.0
        %3392 = vmatpush1.msra.mxu0 0.0
        %3393 = vmatprep.subr.mxu0 0.0
        %3394 = vmatpush1.msra.mxu0 0.0
        %3395 = vmatprep.subr.mxu0 0.0
        %3396 = vmatpush1.msra.mxu0 0.0
        %3397 = vmatprep.subr.mxu0 0.0
        %3398 = vmatpush1.msra.mxu0 0.0
        %3399 = vmatprep.mubr.f32.mxu0 0.0
        %3400 = vmatmul.mubr.f32.gmra.mrb[0].mxu0 %v3333
        %v3401 = vpop.f32.mrb[0].mxu0
        %v3402 = vadd.f32 0.0, %v3401
        %v3403 = vpop.f32.mrb[0].mxu0
        %3404 = vdwg.mxu0
        %v3406 = vsel %vm2524, %v3402, 0
        %3408 = vmatprep.subr.mxu0 0.0
        %3409 = vmatpush1.msra.mxu0 %v2520
        %3410 = vmatprep.subr.mxu0 0.0
        %3411 = vmatpush1.msra.mxu0 0.0
        %3412 = vmatprep.subr.mxu0 0.0
        %3413 = vmatpush1.msra.mxu0 0.0
        %3414 = vmatprep.subr.mxu0 0.0
        %3415 = vmatpush1.msra.mxu0 0.0
        %3416 = vmatprep.subr.mxu0 0.0
        %3417 = vmatpush1.msra.mxu0 0.0
        %3418 = vmatprep.subr.mxu0 0.0
        %3419 = vmatpush1.msra.mxu0 0.0
        %3420 = vmatprep.subr.mxu0 0.0
        %3421 = vmatpush1.msra.mxu0 0.0
        %3422 = vmatprep.subr.mxu0 0.0
        %3423 = vmatpush1.msra.mxu0 0.0
        %3424 = vmatprep.subr.mxu0 0.0
        %3425 = vmatpush1.msra.mxu0 0.0
        %3426 = vmatprep.subr.mxu0 0.0
        %3427 = vmatpush1.msra.mxu0 0.0
        %3428 = vmatprep.subr.mxu0 0.0
        %3429 = vmatpush1.msra.mxu0 0.0
        %3430 = vmatprep.subr.mxu0 0.0
        %3431 = vmatpush1.msra.mxu0 0.0
        %3432 = vmatprep.subr.mxu0 0.0
        %3433 = vmatpush1.msra.mxu0 0.0
        %3434 = vmatprep.subr.mxu0 0.0
        %3435 = vmatpush1.msra.mxu0 0.0
        %3436 = vmatprep.subr.mxu0 0.0
        %3437 = vmatpush1.msra.mxu0 0.0
        %3438 = vmatprep.subr.mxu0 0.0
        %3439 = vmatpush1.msra.mxu0 0.0
        %3440 = vmatprep.subr.mxu0 0.0
        %3441 = vmatpush1.msra.mxu0 0.0
        %3442 = vmatprep.subr.mxu0 0.0
        %3443 = vmatpush1.msra.mxu0 0.0
        %3444 = vmatprep.subr.mxu0 0.0
        %3445 = vmatpush1.msra.mxu0 0.0
        %3446 = vmatprep.subr.mxu0 0.0
        %3447 = vmatpush1.msra.mxu0 0.0
        %3448 = vmatprep.subr.mxu0 0.0
        %3449 = vmatpush1.msra.mxu0 0.0
        %3450 = vmatprep.subr.mxu0 0.0
        %3451 = vmatpush1.msra.mxu0 0.0
        %3452 = vmatprep.subr.mxu0 0.0
        %3453 = vmatpush1.msra.mxu0 0.0
        %3454 = vmatprep.subr.mxu0 0.0
        %3455 = vmatpush1.msra.mxu0 0.0
        %3456 = vmatprep.subr.mxu0 0.0
        %3457 = vmatpush1.msra.mxu0 0.0
        %3458 = vmatprep.subr.mxu0 0.0
        %3459 = vmatpush1.msra.mxu0 0.0
        %3460 = vmatprep.subr.mxu0 0.0
        %3461 = vmatpush1.msra.mxu0 0.0
        %3462 = vmatprep.subr.mxu0 0.0
        %3463 = vmatpush1.msra.mxu0 0.0
        %3464 = vmatprep.subr.mxu0 0.0
        %3465 = vmatpush1.msra.mxu0 0.0
        %3466 = vmatprep.subr.mxu0 0.0
        %3467 = vmatpush1.msra.mxu0 0.0
        %3468 = vmatprep.subr.mxu0 0.0
        %3469 = vmatpush1.msra.mxu0 0.0
        %3470 = vmatprep.subr.mxu0 0.0
        %3471 = vmatpush1.msra.mxu0 0.0
        %3472 = vmatprep.mubr.f32.mxu0 0.0
        %3473 = vmatmul.mubr.f32.gmra.mrb[0].mxu0 %v3406
        %v3474 = vpop.f32.mrb[0].mxu0
        %v3475 = vadd.f32 0.0, %v3474
        %v3476 = vpop.f32.mrb[0].mxu0
        %3477 = vdwg.mxu0
        %v3478 = vadd.f32 %v3238, %v3475
        %v3479 = vld [vmem:[%s11] sm:$0x1]
        %v3481 = vlaneseq
        %v3482 = vshrl.u32 %v3481, 7
        %v3483 = vsub.s32 0, %v3482
        %v3484 = vrot.slane %v3479, %v3483
        %v3486 = vadd.f32 %v3478, %v3484
        %v3487 = vsel %vm611, %v3486, 0.0
        %v3488 = vrot.slane %v3487, 4
        %v3489 = vadd.f32 %v3487, %v3488
        %v3490 = vrot.slane %v3489, 2
        %v3491 = vadd.f32 %v3489, %v3490
        %v3492 = vrot.slane %v3491, 1
        %v3493 = vadd.f32 %v3491, %v3492
        %v3494 = vld [vmem:[%s12] sm:$0xff]
        %v3495 = vld [vmem:[%s12 + $0x8] sm:$0xff]
        %v3496 = vld [vmem:[%s12 + $0x10] sm:$0xff]
        %v3497 = vld [vmem:[%s12 + $0x18] sm:$0xff]
        %v3498 = vld [vmem:[%s13] sm:$0x1]
        %v3500 = vsel %vm611, %v3493, 0
        %3502 = vmatprep.subr.mxu0 0.0
        %3503 = vmatpush1.msra.mxu0 %v3494
        %3504 = vmatprep.subr.mxu0 0.0
        %3505 = vmatpush1.msra.mxu0 %v3495
        %3506 = vmatprep.subr.mxu0 0.0
        %3507 = vmatpush1.msra.mxu0 %v3496
        %3508 = vmatprep.subr.mxu0 0.0
        %3509 = vmatpush1.msra.mxu0 %v3497
        %3510 = vmatprep.subr.mxu0 0.0
        %3511 = vmatpush1.msra.mxu0 0.0
        %3512 = vmatprep.subr.mxu0 0.0
        %3513 = vmatpush1.msra.mxu0 0.0
        %3514 = vmatprep.subr.mxu0 0.0
        %3515 = vmatpush1.msra.mxu0 0.0
        %3516 = vmatprep.subr.mxu0 0.0
        %3517 = vmatpush1.msra.mxu0 0.0
        %3518 = vmatprep.subr.mxu0 0.0
        %3519 = vmatpush1.msra.mxu0 0.0
        %3520 = vmatprep.subr.mxu0 0.0
        %3521 = vmatpush1.msra.mxu0 0.0
        %3522 = vmatprep.subr.mxu0 0.0
        %3523 = vmatpush1.msra.mxu0 0.0
        %3524 = vmatprep.subr.mxu0 0.0
        %3525 = vmatpush1.msra.mxu0 0.0
        %3526 = vmatprep.subr.mxu0 0.0
        %3527 = vmatpush1.msra.mxu0 0.0
        %3528 = vmatprep.subr.mxu0 0.0
        %3529 = vmatpush1.msra.mxu0 0.0
        %3530 = vmatprep.subr.mxu0 0.0
        %3531 = vmatpush1.msra.mxu0 0.0
        %3532 = vmatprep.subr.mxu0 0.0
        %3533 = vmatpush1.msra.mxu0 0.0
        %3534 = vmatprep.subr.mxu0 0.0
        %3535 = vmatpush1.msra.mxu0 0.0
        %3536 = vmatprep.subr.mxu0 0.0
        %3537 = vmatpush1.msra.mxu0 0.0
        %3538 = vmatprep.subr.mxu0 0.0
        %3539 = vmatpush1.msra.mxu0 0.0
        %3540 = vmatprep.subr.mxu0 0.0
        %3541 = vmatpush1.msra.mxu0 0.0
        %3542 = vmatprep.subr.mxu0 0.0
        %3543 = vmatpush1.msra.mxu0 0.0
        %3544 = vmatprep.subr.mxu0 0.0
        %3545 = vmatpush1.msra.mxu0 0.0
        %3546 = vmatprep.subr.mxu0 0.0
        %3547 = vmatpush1.msra.mxu0 0.0
        %3548 = vmatprep.subr.mxu0 0.0
        %3549 = vmatpush1.msra.mxu0 0.0
        %3550 = vmatprep.subr.mxu0 0.0
        %3551 = vmatpush1.msra.mxu0 0.0
        %3552 = vmatprep.subr.mxu0 0.0
        %3553 = vmatpush1.msra.mxu0 0.0
        %3554 = vmatprep.subr.mxu0 0.0
        %3555 = vmatpush1.msra.mxu0 0.0
        %3556 = vmatprep.subr.mxu0 0.0
        %3557 = vmatpush1.msra.mxu0 0.0
        %3558 = vmatprep.subr.mxu0 0.0
        %3559 = vmatpush1.msra.mxu0 0.0
        %3560 = vmatprep.subr.mxu0 0.0
        %3561 = vmatpush1.msra.mxu0 0.0
        %3562 = vmatprep.subr.mxu0 0.0
        %3563 = vmatpush1.msra.mxu0 0.0
        %3564 = vmatprep.subr.mxu0 0.0
        %3565 = vmatpush1.msra.mxu0 0.0
        %3566 = vmatprep.mubr.f32.mxu0 0.0
        %3567 = vmatmul.mubr.f32.gmra.mrb[0].mxu0 %v3500
        %v3568 = vpop.f32.mrb[0].mxu0
        %v3569 = vadd.f32 %v3498, %v3568
        %v3570 = vpop.f32.mrb[0].mxu0
        %3571 = vdwg.mxu0
        %vm3572 = vcmask 57344
        %3573 = vst.msk [vmem:[%s481] sm:$0x1] %vm3572, %v3569
        %s3574 = sand.u32 %s318, 1
        %s3575 = scalar_lea.sflag [#allocation8], %s3574
        %s3576 = sand.u32 %s318, 1
        %s3577 = scalar_lea.vmem [#allocation14], %s3576
        // Predicated region
        $region89: #{tpu_custom_call.1} parent=71 // pred_check
          %p3578 = pneg %p328
        $region90: #{tpu_custom_call.1} parent=71 // pred_check_branch
          %3580 = sbr.rel (%p3578) target = $region92
        $region91: #{tpu_custom_call.1} parent=71 // pred_region
          %s3582 = ssub.s32 16, 16
          %3583 = vsyncadd %s3575, %s3582
          %s3584 = smul.addr %s37, 16
          %s3585 = scalar_lea.hbm %s14, %s3584
          %s3587 = sshll.u32 %s3577, 4
          %s3588 = int_to_ptr.vmem [resolvable:$true] %s3587
          %3590 = dma.vmem_to_hbm [thread:$0]  %s3588, 16, %s3585, %s3575
        $region92: #{tpu_custom_call.1} parent=71 // pred_fallthru
          _
      $region72: #{tpu_custom_call.1} parent=5 // pred_fallthru
        _
      %p3591 = scmp.le.s32.totalorder 2, %s32
      // Predicated region
      $region93: #{tpu_custom_call.1} parent=5 // pred_check
        %p3592 = pneg %p3591
      $region94: #{tpu_custom_call.1} parent=5 // pred_check_branch
        %3594 = sbr.rel (%p3592) target = $region96
      $region95: #{tpu_custom_call.1} parent=5 // pred_region
        %s3595 = ssub.s32 %s32, 2
        // Predicated region
        $region97: #{tpu_custom_call.1} parent=95 // pred_check
          %p3596 = pneg %p334
        $region98: #{tpu_custom_call.1} parent=95 // pred_check_branch
          %3598 = sbr.rel (%p3596) target = $region100
        $region99: #{tpu_custom_call.1} parent=95 // pred_region
          %s3599 = sand.u32 %s319, 1
          %s3600 = scalar_lea.sflag [#allocation8], %s3599
          %s3601 = sand.u32 %s319, 1
          %s3602 = scalar_lea.vmem [#allocation14], %s3601
          %3603 = dma.done %s3600, 16
        $region100: #{tpu_custom_call.1} parent=95 // pred_fallthru
          _
      $region96: #{tpu_custom_call.1} parent=5 // pred_fallthru
        _
    $region6: #{tpu_custom_call.1} parent=1 // loop_footer
      %s36 = sadd.s32 1, %s32
    $region7: #{tpu_custom_call.1} parent=1 // loop_footer_branch
      %31 = sbr.rel target = $region3
    $region8: #{tpu_custom_call.1} parent=1 // loop_exit
      _
    %3604 = vsyncpa [#allocation7], 1
    %s3605 = scalar_lea.sflag [#allocation7], 1
    %3606 = vsyncpa %s3605, 1
    %3607 = vsyncpa [#allocation10], 1
    %3608 = vsyncpa [#allocation13], 1
    %3609 = vsyncpa [#allocation8], 1
    %s3610 = scalar_lea.sflag [#allocation8], 1
    %3611 = vsyncpa %s3610, 1

</llo_original>
